<compile_context>
chip_gen: v5e
topology: v5e:2x2
jax: 0.10.0
libtpu: 0.0.40
codegen_flags: <defaults>
</compile_context>

<pallas_src>
import functools

import jax
import jax.numpy as jnp
from jax import lax
from jax.experimental import pallas as pl
from jax.experimental.pallas import tpu as pltpu


# ----------------------------------------------------------------------------
# helpers
# ----------------------------------------------------------------------------
def _pick_block_b(B, hw, target_rows=512):
    """Images per grid step: aim for ~target_rows matmul rows, keep >=2 grid
    steps when possible so both v7x TensorCores get work."""
    if B < 2:
        return 1
    bt = min(B // 2, max(1, target_rows // hw))
    while bt > 1 and (B % bt):
        bt -= 1
    return max(bt, 1)


def _gather_images(x_ref, Bt):
    """(Bt, HW, K) block -> (Bt*HW, K) value; free squeeze when Bt == 1."""
    if Bt == 1:
        return x_ref[0]
    return jnp.concatenate([x_ref[bi] for bi in range(Bt)], axis=0)


def _im2col(x_pad, H, W):
    # x_pad: (B, H+2, W+2, Cin)  ->  (B, H*W, 9*Cin), tap order (dy, dx, cin)
    B, _, _, Cin = x_pad.shape
    cols = []
    for dy in range(3):
        for dx in range(3):
            cols.append(x_pad[:, dy:dy + H, dx:dx + W, :].reshape(B, H * W, Cin))
    return jnp.concatenate(cols, axis=-1)


# ----------------------------------------------------------------------------
# Conv block kernel: conv(3x3, pad=1) -> bias -> ReLU -> maxpool(2) (floor)
# ----------------------------------------------------------------------------
def _conv_block_kernel(x_ref, w_ref, b_ref, o_ref, acc_ref, vmax_ref, *, Bt, H, W):
    # x_ref   : (Bt, H*W, 9*Cin) bf16   im2col patches of Bt zero-padded images
    # w_ref   : (9*Cin, Cout)    bf16   conv weights, (dy, dx, cin)-major rows
    # b_ref   : (1, Cout)        f32
    # o_ref   : (Bt, H2*W2, Cout) f32   pooled output, row-major over (H2, W2)
    # acc_ref : VMEM (Bt*H*W, Cout) f32    conv + bias + ReLU, pre-pool
    # vmax_ref: VMEM (Bt*H2*W, Cout) f32   vertical 2:1 max
    H2, W2 = H // 2, W // 2
    HW = H * W

    x = _gather_images(x_ref, Bt)                     # (Bt*H*W, 9*Cin) bf16
    acc = jnp.dot(x, w_ref[...], preferred_element_type=jnp.float32)
    acc_ref[...] = jnp.maximum(acc + b_ref[...], 0.0)  # bias + ReLU

    # vertical 2:1 max -- contiguous W-row slabs (floor: last row dropped if H odd)
    for bi in range(Bt):
        a0 = bi * HW
        v0 = bi * H2 * W
        for i in range(H2):
            top = acc_ref[a0 + (2 * i) * W: a0 + (2 * i) * W + W, :]
            bot = acc_ref[a0 + (2 * i + 1) * W: a0 + (2 * i + 1) * W + W, :]
            vmax_ref[v0 + i * W: v0 + (i + 1) * W, :] = jnp.maximum(top, bot)

    # horizontal 2:1 max
    n_out = Bt * H2 * W2
    if W % 2 == 0:
        # W even => x-parity == global row parity: one whole-buffer stride-2 max
        hmax = jnp.maximum(vmax_ref[pl.ds(0, n_out, stride=2), :],
                           vmax_ref[pl.ds(1, n_out, stride=2), :])
    else:
        # W odd (7x7 / 3x3 layers are tiny): per-(image,row) stride-2 max
        rows = []
        for r in range(Bt * H2):
            rows.append(jnp.maximum(vmax_ref[pl.ds(r * W, W2, stride=2), :],
                                    vmax_ref[pl.ds(r * W + 1, W2, stride=2), :]))
        hmax = jnp.concatenate(rows, axis=0) if len(rows) > 1 else rows[0]

    # single full-tile store per image
    for bi in range(Bt):
        o_ref[bi] = hmax[bi * H2 * W2:(bi + 1) * H2 * W2, :]


def conv_relu_pool(x, w, b):
    # x: (B, H, W, Cin) NHWC f32 ; w: (3, 3, Cin, Cout) HWIO f32 ; b: (Cout,) f32
    B, H, W, Cin = x.shape
    Cout = w.shape[-1]
    H2, W2 = H // 2, W // 2
    Bt = _pick_block_b(B, H * W)

    x_pad = jnp.pad(x.astype(jnp.bfloat16), ((0, 0), (1, 1), (1, 1), (0, 0)))
    patches = _im2col(x_pad, H, W)                     # (B, H*W, 9*Cin) bf16
    w_mat = w.reshape(9 * Cin, Cout).astype(jnp.bfloat16)
    b_row = b.reshape(1, Cout).astype(jnp.float32)

    kernel = functools.partial(_conv_block_kernel, Bt=Bt, H=H, W=W)
    out = pl.pallas_call(
        kernel,
        out_shape=jax.ShapeDtypeStruct((B, H2 * W2, Cout), jnp.float32),
        grid_spec=pltpu.PrefetchScalarGridSpec(
            num_scalar_prefetch=0,
            grid=(B // Bt,),
            in_specs=[
                pl.BlockSpec((Bt, H * W, 9 * Cin), lambda i: (i, 0, 0)),
                pl.BlockSpec((9 * Cin, Cout), lambda i: (0, 0)),
                pl.BlockSpec((1, Cout), lambda i: (0, 0)),
            ],
            out_specs=pl.BlockSpec((Bt, H2 * W2, Cout), lambda i: (i, 0, 0)),
            scratch_shapes=[
                pltpu.VMEM((Bt * H * W, Cout), jnp.float32),
                pltpu.VMEM((Bt * H2 * W, Cout), jnp.float32),
            ],
        ),
        compiler_params=pltpu.CompilerParams(
            dimension_semantics=("parallel",),
            vmem_limit_bytes=32 * 1024 * 1024,
        ),
    )(patches, w_mat, b_row)
    return out.reshape(B, H2, W2, Cout)


# ----------------------------------------------------------------------------
# Fused last block: conv -> bias -> ReLU -> pool(2) -> Linear -> log_softmax
# (valid when the pooled spatial size is 1x1, i.e. the MNIST head)
# ----------------------------------------------------------------------------
def _conv4_fc_kernel(x_ref, w_ref, b_ref, fcw_ref, fcb_ref, o_ref, acc_ref, *, Bt, H, W):
    # x_ref : (Bt, H*W, 9*Cin) bf16 ; w_ref: (9*Cin, Cout) bf16 ; b_ref: (1, Cout) f32
    # fcw_ref: (Cout, N) bf16 ; fcb_ref: (1, N) f32 ; o_ref: (Bt, 1, N) f32
    # acc_ref: VMEM (Bt*H*W, Cout) f32
    HW = H * W

    x = _gather_images(x_ref, Bt)
    acc = jnp.dot(x, w_ref[...], preferred_element_type=jnp.float32)
    acc_ref[...] = jnp.maximum(acc + b_ref[...], 0.0)

    # single 2x2 floor-pool window per image -> (Bt, Cout)
    taps = (0, 1, W, W + 1)
    if Bt == 1:
        parts = [acc_ref[t:t + 1, :] for t in taps]
    else:
        parts = [acc_ref[pl.ds(t, Bt, stride=HW), :] for t in taps]
    pooled = jnp.maximum(jnp.maximum(parts[0], parts[1]),
                         jnp.maximum(parts[2], parts[3]))

    logits = jnp.dot(pooled.astype(jnp.bfloat16), fcw_ref[...],
                     preferred_element_type=jnp.float32) + fcb_ref[...]
    m = jnp.max(logits, axis=-1, keepdims=True)
    s = logits - m
    lse = jnp.log(jnp.sum(jnp.exp(s), axis=-1, keepdims=True))
    out_val = s - lse                                   # (Bt, N) f32
    for bi in range(Bt):
        o_ref[bi] = out_val[bi:bi + 1, :]


def conv_relu_pool_fc_logsoftmax(x, w, b, fc_w, fc_b):
    B, H, W, Cin = x.shape
    Cout = w.shape[-1]
    H2, W2 = H // 2, W // 2
    # TODO(synk): CIFAR10 head (pooled 2x2) needs an NCHW-order flatten before the FC;
    #             this fused kernel covers the MNIST head (pooled spatial 1x1).
    assert H2 == 1 and W2 == 1, "fused head expects 1x1 pooled spatial (MNIST)"
    N = fc_w.shape[-1]
    Bt = _pick_block_b(B, H * W)

    x_pad = jnp.pad(x.astype(jnp.bfloat16), ((0, 0), (1, 1), (1, 1), (0, 0)))
    patches = _im2col(x_pad, H, W)                     # (B, 9, 9*Cin) bf16
    w_mat = w.reshape(9 * Cin, Cout).astype(jnp.bfloat16)
    b_row = b.reshape(1, Cout).astype(jnp.float32)
    fcw = fc_w.astype(jnp.bfloat16)
    fcb = fc_b.reshape(1, N).astype(jnp.float32)

    kernel = functools.partial(_conv4_fc_kernel, Bt=Bt, H=H, W=W)
    out = pl.pallas_call(
        kernel,
        out_shape=jax.ShapeDtypeStruct((B, 1, N), jnp.float32),
        grid_spec=pltpu.PrefetchScalarGridSpec(
            num_scalar_prefetch=0,
            grid=(B // Bt,),
            in_specs=[
                pl.BlockSpec((Bt, H * W, 9 * Cin), lambda i: (i, 0, 0)),
                pl.BlockSpec((9 * Cin, Cout), lambda i: (0, 0)),
                pl.BlockSpec((1, Cout), lambda i: (0, 0)),
                pl.BlockSpec((Cout, N), lambda i: (0, 0)),
                pl.BlockSpec((1, N), lambda i: (0, 0)),
            ],
            out_specs=pl.BlockSpec((Bt, 1, N), lambda i: (i, 0, 0)),
            scratch_shapes=[pltpu.VMEM((Bt * H * W, Cout), jnp.float32)],
        ),
        compiler_params=pltpu.CompilerParams(
            dimension_semantics=("parallel",),
            vmem_limit_bytes=32 * 1024 * 1024,
        ),
    )(patches, w_mat, b_row, fcw, fcb)
    return out.reshape(B, N)


# ----------------------------------------------------------------------------
# Full model
# ----------------------------------------------------------------------------
@jax.jit
def cnn_classifier_forward(x_nchw, params):
    x = jnp.transpose(x_nchw, (0, 2, 3, 1))            # NCHW -> NHWC
    convs = params["conv"]
    for (w, b) in convs[:-1]:
        x = conv_relu_pool(x, w, b)                    # 28 -> 14 -> 7 -> 3
    w4, b4 = convs[-1]
    return conv_relu_pool_fc_logsoftmax(x, w4, b4, params["fc_w"], params["fc_b"])


def init_params(key, input_channels=1, num_classes=10):
    chans = [input_channels, 32, 64, 128, 256]
    conv = []
    for i in range(4):
        key, kw, kb = jax.random.split(key, 3)
        cin, cout = chans[i], chans[i + 1]
        fan_in = 3 * 3 * cin
        w = jax.random.normal(kw, (3, 3, cin, cout), jnp.float32) / jnp.sqrt(fan_in)
        b = 0.01 * jax.random.normal(kb, (cout,), jnp.float32)
        conv.append((w, b))
    key, kw, kb = jax.random.split(key, 3)
    fc_w = jax.random.normal(kw, (256, num_classes), jnp.float32) / jnp.sqrt(256.0)
    fc_b = 0.01 * jax.random.normal(kb, (num_classes,), jnp.float32)
    return {"conv": conv, "fc_w": fc_w, "fc_b": fc_b}


# Pure-JAX reference with matching precision (bf16 matmul inputs, f32 accumulate).
def reference_forward(x_nchw, params):
    x = jnp.transpose(x_nchw, (0, 2, 3, 1))
    for (w, b) in params["conv"]:
        y = lax.conv_general_dilated(
            x.astype(jnp.bfloat16), w.astype(jnp.bfloat16),
            window_strides=(1, 1), padding=((1, 1), (1, 1)),
            dimension_numbers=("NHWC", "HWIO", "NHWC"),
            preferred_element_type=jnp.float32)
        y = jnp.maximum(y + b, 0.0)
        x = lax.reduce_window(y, -jnp.inf, lax.max,
                              (1, 2, 2, 1), (1, 2, 2, 1), "VALID")
    B = x.shape[0]
    x = x.reshape(B, -1)
    logits = jnp.dot(x.astype(jnp.bfloat16), params["fc_w"].astype(jnp.bfloat16),
                     preferred_element_type=jnp.float32) + params["fc_b"]
    return jax.nn.log_softmax(logits, axis=1)


if __name__ == "__main__":
    key = jax.random.PRNGKey(0)
    pkey, xkey = jax.random.split(key)
    params = init_params(pkey, input_channels=1, num_classes=10)  # dataset='MNIST'
    x = jax.random.normal(xkey, (2, 1, 28, 28), jnp.float32)      # NCHW, batch=2

    out = cnn_classifier_forward(x, params)
    out = jax.block_until_ready(out)

    ref = reference_forward(x, params)
    assert out.shape == (2, 10), out.shape
    # Both paths use bf16 x bf16 -> f32 matmuls; residual diffs come from
    # accumulation order and rare bf16 rounding-boundary flips.
    assert jnp.allclose(out, ref, atol=2e-2, rtol=2e-2), float(jnp.max(jnp.abs(out - ref)))
    print("KERNEL_OK")
</pallas_src>

<mosaic_0001>
module attributes {stable_mosaic.version = 11 : i64} {
  func.func @_conv_block_kernel(%arg0: i32, %arg1: memref<1x784x9xbf16, #tpu.memory_space<vmem>>, %arg2: memref<9x32xbf16, #tpu.memory_space<vmem>>, %arg3: memref<1x32xf32, #tpu.memory_space<vmem>>, %arg4: memref<1x196x32xf32, #tpu.memory_space<vmem>>, %arg5: memref<784x32xf32, #tpu.memory_space<vmem>>, %arg6: memref<392x32xf32, #tpu.memory_space<vmem>>) attributes {dimension_semantics = [#tpu.dimension_semantics<parallel>], iteration_bounds = array<i64: 2>, scalar_prefetch = 0 : i64, scratch_operands = 2 : i64, tpu.core_type = #tpu.core_type<tc>, window_params = [{transform_indices = @transform_0, window_bounds = array<i64: 1, 784, 9>}, {pipeline_mode = #tpu.pipeline_mode<synchronous>, transform_indices = @transform_1, window_bounds = array<i64: 9, 32>}, {pipeline_mode = #tpu.pipeline_mode<synchronous>, transform_indices = @transform_2, window_bounds = array<i64: 1, 32>}, {transform_indices = @transform_3, window_bounds = array<i64: 1, 196, 32>}]} {
    %c0 = arith.constant 0 : index
    %c0_0 = arith.constant 0 : index
    %c0_1 = arith.constant 0 : index
    %0 = vector.load %arg1[%c0, %c0_0, %c0_1] : memref<1x784x9xbf16, #tpu.memory_space<vmem>>, vector<1x784x9xbf16>
    %1 = vector.shape_cast %0 : vector<1x784x9xbf16> to vector<784x9xbf16>
    %c0_2 = arith.constant 0 : index
    %c0_3 = arith.constant 0 : index
    %2 = vector.load %arg2[%c0_2, %c0_3] : memref<9x32xbf16, #tpu.memory_space<vmem>>, vector<9x32xbf16>
    %cst = arith.constant dense<0.000000e+00> : vector<784x32xf32>
    %3 = tpu.matmul %1, %2, %cst {dimension_numbers = #tpu.dot_dimension_numbers<[1], [0], [0], [1], [0, 0, 1, 1], [], []>} : vector<784x9xbf16>, vector<9x32xbf16>, vector<784x32xf32> -> vector<784x32xf32>
    %c0_4 = arith.constant 0 : index
    %c0_5 = arith.constant 0 : index
    %4 = vector.load %arg3[%c0_4, %c0_5] : memref<1x32xf32, #tpu.memory_space<vmem>>, vector<1x32xf32>
    %5 = vector.broadcast %4 : vector<1x32xf32> to vector<784x32xf32>
    %6 = arith.addf %3, %5 : vector<784x32xf32>
    %cst_6 = arith.constant 0.000000e+00 : f32
    %7 = vector.broadcast %cst_6 : f32 to vector<784x32xf32>
    %8 = arith.maximumf %6, %7 : vector<784x32xf32>
    %c0_7 = arith.constant 0 : index
    %c0_8 = arith.constant 0 : index
    %9 = vector.load %arg5[%c0_7, %c0_8] : memref<784x32xf32, #tpu.memory_space<vmem>>, vector<784x32xf32>
    tpu.vector_store %arg5[%c0_7, %c0_8], %8 {strides = array<i32>} : memref<784x32xf32, #tpu.memory_space<vmem>>, vector<784x32xf32>,
    %c0_9 = arith.constant 0 : index
    %c0_10 = arith.constant 0 : index
    %10 = vector.load %arg5[%c0_9, %c0_10] : memref<784x32xf32, #tpu.memory_space<vmem>>, vector<28x32xf32>
    %c28 = arith.constant 28 : index
    %c0_11 = arith.constant 0 : index
    %11 = vector.load %arg5[%c28, %c0_11] : memref<784x32xf32, #tpu.memory_space<vmem>>, vector<28x32xf32>
    %12 = arith.maximumf %10, %11 : vector<28x32xf32>
    %c0_12 = arith.constant 0 : index
    %c0_13 = arith.constant 0 : index
    %13 = vector.load %arg6[%c0_12, %c0_13] : memref<392x32xf32, #tpu.memory_space<vmem>>, vector<28x32xf32>
    tpu.vector_store %arg6[%c0_12, %c0_13], %12 {strides = array<i32>} : memref<392x32xf32, #tpu.memory_space<vmem>>, vector<28x32xf32>,
    %c56 = arith.constant 56 : index
    %c0_14 = arith.constant 0 : index
    %14 = vector.load %arg5[%c56, %c0_14] : memref<784x32xf32, #tpu.memory_space<vmem>>, vector<28x32xf32>
    %c84 = arith.constant 84 : index
    %c0_15 = arith.constant 0 : index
    %15 = vector.load %arg5[%c84, %c0_15] : memref<784x32xf32, #tpu.memory_space<vmem>>, vector<28x32xf32>
    %16 = arith.maximumf %14, %15 : vector<28x32xf32>
    %c28_16 = arith.constant 28 : index
    %c0_17 = arith.constant 0 : index
    %17 = vector.load %arg6[%c28_16, %c0_17] : memref<392x32xf32, #tpu.memory_space<vmem>>, vector<28x32xf32>
    tpu.vector_store %arg6[%c28_16, %c0_17], %16 {strides = array<i32>} : memref<392x32xf32, #tpu.memory_space<vmem>>, vector<28x32xf32>,
    %c112 = arith.constant 112 : index
    %c0_18 = arith.constant 0 : index
    %18 = vector.load %arg5[%c112, %c0_18] : memref<784x32xf32, #tpu.memory_space<vmem>>, vector<28x32xf32>
    %c140 = arith.constant 140 : index
    %c0_19 = arith.constant 0 : index
    %19 = vector.load %arg5[%c140, %c0_19] : memref<784x32xf32, #tpu.memory_space<vmem>>, vector<28x32xf32>
    %20 = arith.maximumf %18, %19 : vector<28x32xf32>
    %c56_20 = arith.constant 56 : index
    %c0_21 = arith.constant 0 : index
    %21 = vector.load %arg6[%c56_20, %c0_21] : memref<392x32xf32, #tpu.memory_space<vmem>>, vector<28x32xf32>
    tpu.vector_store %arg6[%c56_20, %c0_21], %20 {strides = array<i32>} : memref<392x32xf32, #tpu.memory_space<vmem>>, vector<28x32xf32>,
    %c168 = arith.constant 168 : index
    %c0_22 = arith.constant 0 : index
    %22 = vector.load %arg5[%c168, %c0_22] : memref<784x32xf32, #tpu.memory_space<vmem>>, vector<28x32xf32>
    %c196 = arith.constant 196 : index
    %c0_23 = arith.constant 0 : index
    %23 = vector.load %arg5[%c196, %c0_23] : memref<784x32xf32, #tpu.memory_space<vmem>>, vector<28x32xf32>
    %24 = arith.maximumf %22, %23 : vector<28x32xf32>
    %c84_24 = arith.constant 84 : index
    %c0_25 = arith.constant 0 : index
    %25 = vector.load %arg6[%c84_24, %c0_25] : memref<392x32xf32, #tpu.memory_space<vmem>>, vector<28x32xf32>
    tpu.vector_store %arg6[%c84_24, %c0_25], %24 {strides = array<i32>} : memref<392x32xf32, #tpu.memory_space<vmem>>, vector<28x32xf32>,
    %c224 = arith.constant 224 : index
    %c0_26 = arith.constant 0 : index
    %26 = vector.load %arg5[%c224, %c0_26] : memref<784x32xf32, #tpu.memory_space<vmem>>, vector<28x32xf32>
    %c252 = arith.constant 252 : index
    %c0_27 = arith.constant 0 : index
    %27 = vector.load %arg5[%c252, %c0_27] : memref<784x32xf32, #tpu.memory_space<vmem>>, vector<28x32xf32>
    %28 = arith.maximumf %26, %27 : vector<28x32xf32>
    %c112_28 = arith.constant 112 : index
    %c0_29 = arith.constant 0 : index
    %29 = vector.load %arg6[%c112_28, %c0_29] : memref<392x32xf32, #tpu.memory_space<vmem>>, vector<28x32xf32>
    tpu.vector_store %arg6[%c112_28, %c0_29], %28 {strides = array<i32>} : memref<392x32xf32, #tpu.memory_space<vmem>>, vector<28x32xf32>,
    %c280 = arith.constant 280 : index
    %c0_30 = arith.constant 0 : index
    %30 = vector.load %arg5[%c280, %c0_30] : memref<784x32xf32, #tpu.memory_space<vmem>>, vector<28x32xf32>
    %c308 = arith.constant 308 : index
    %c0_31 = arith.constant 0 : index
    %31 = vector.load %arg5[%c308, %c0_31] : memref<784x32xf32, #tpu.memory_space<vmem>>, vector<28x32xf32>
    %32 = arith.maximumf %30, %31 : vector<28x32xf32>
    %c140_32 = arith.constant 140 : index
    %c0_33 = arith.constant 0 : index
    %33 = vector.load %arg6[%c140_32, %c0_33] : memref<392x32xf32, #tpu.memory_space<vmem>>, vector<28x32xf32>
    tpu.vector_store %arg6[%c140_32, %c0_33], %32 {strides = array<i32>} : memref<392x32xf32, #tpu.memory_space<vmem>>, vector<28x32xf32>,
    %c336 = arith.constant 336 : index
    %c0_34 = arith.constant 0 : index
    %34 = vector.load %arg5[%c336, %c0_34] : memref<784x32xf32, #tpu.memory_space<vmem>>, vector<28x32xf32>
    %c364 = arith.constant 364 : index
    %c0_35 = arith.constant 0 : index
    %35 = vector.load %arg5[%c364, %c0_35] : memref<784x32xf32, #tpu.memory_space<vmem>>, vector<28x32xf32>
    %36 = arith.maximumf %34, %35 : vector<28x32xf32>
    %c168_36 = arith.constant 168 : index
    %c0_37 = arith.constant 0 : index
    %37 = vector.load %arg6[%c168_36, %c0_37] : memref<392x32xf32, #tpu.memory_space<vmem>>, vector<28x32xf32>
    tpu.vector_store %arg6[%c168_36, %c0_37], %36 {strides = array<i32>} : memref<392x32xf32, #tpu.memory_space<vmem>>, vector<28x32xf32>,
    %c392 = arith.constant 392 : index
    %c0_38 = arith.constant 0 : index
    %38 = vector.load %arg5[%c392, %c0_38] : memref<784x32xf32, #tpu.memory_space<vmem>>, vector<28x32xf32>
    %c420 = arith.constant 420 : index
    %c0_39 = arith.constant 0 : index
    %39 = vector.load %arg5[%c420, %c0_39] : memref<784x32xf32, #tpu.memory_space<vmem>>, vector<28x32xf32>
    %40 = arith.maximumf %38, %39 : vector<28x32xf32>
    %c196_40 = arith.constant 196 : index
    %c0_41 = arith.constant 0 : index
    %41 = vector.load %arg6[%c196_40, %c0_41] : memref<392x32xf32, #tpu.memory_space<vmem>>, vector<28x32xf32>
    tpu.vector_store %arg6[%c196_40, %c0_41], %40 {strides = array<i32>} : memref<392x32xf32, #tpu.memory_space<vmem>>, vector<28x32xf32>,
    %c448 = arith.constant 448 : index
    %c0_42 = arith.constant 0 : index
    %42 = vector.load %arg5[%c448, %c0_42] : memref<784x32xf32, #tpu.memory_space<vmem>>, vector<28x32xf32>
    %c476 = arith.constant 476 : index
    %c0_43 = arith.constant 0 : index
    %43 = vector.load %arg5[%c476, %c0_43] : memref<784x32xf32, #tpu.memory_space<vmem>>, vector<28x32xf32>
    %44 = arith.maximumf %42, %43 : vector<28x32xf32>
    %c224_44 = arith.constant 224 : index
    %c0_45 = arith.constant 0 : index
    %45 = vector.load %arg6[%c224_44, %c0_45] : memref<392x32xf32, #tpu.memory_space<vmem>>, vector<28x32xf32>
    tpu.vector_store %arg6[%c224_44, %c0_45], %44 {strides = array<i32>} : memref<392x32xf32, #tpu.memory_space<vmem>>, vector<28x32xf32>,
    %c504 = arith.constant 504 : index
    %c0_46 = arith.constant 0 : index
    %46 = vector.load %arg5[%c504, %c0_46] : memref<784x32xf32, #tpu.memory_space<vmem>>, vector<28x32xf32>
    %c532 = arith.constant 532 : index
    %c0_47 = arith.constant 0 : index
    %47 = vector.load %arg5[%c532, %c0_47] : memref<784x32xf32, #tpu.memory_space<vmem>>, vector<28x32xf32>
    %48 = arith.maximumf %46, %47 : vector<28x32xf32>
    %c252_48 = arith.constant 252 : index
    %c0_49 = arith.constant 0 : index
    %49 = vector.load %arg6[%c252_48, %c0_49] : memref<392x32xf32, #tpu.memory_space<vmem>>, vector<28x32xf32>
    tpu.vector_store %arg6[%c252_48, %c0_49], %48 {strides = array<i32>} : memref<392x32xf32, #tpu.memory_space<vmem>>, vector<28x32xf32>,
    %c560 = arith.constant 560 : index
    %c0_50 = arith.constant 0 : index
    %50 = vector.load %arg5[%c560, %c0_50] : memref<784x32xf32, #tpu.memory_space<vmem>>, vector<28x32xf32>
    %c588 = arith.constant 588 : index
    %c0_51 = arith.constant 0 : index
    %51 = vector.load %arg5[%c588, %c0_51] : memref<784x32xf32, #tpu.memory_space<vmem>>, vector<28x32xf32>
    %52 = arith.maximumf %50, %51 : vector<28x32xf32>
    %c280_52 = arith.constant 280 : index
    %c0_53 = arith.constant 0 : index
    %53 = vector.load %arg6[%c280_52, %c0_53] : memref<392x32xf32, #tpu.memory_space<vmem>>, vector<28x32xf32>
    tpu.vector_store %arg6[%c280_52, %c0_53], %52 {strides = array<i32>} : memref<392x32xf32, #tpu.memory_space<vmem>>, vector<28x32xf32>,
    %c616 = arith.constant 616 : index
    %c0_54 = arith.constant 0 : index
    %54 = vector.load %arg5[%c616, %c0_54] : memref<784x32xf32, #tpu.memory_space<vmem>>, vector<28x32xf32>
    %c644 = arith.constant 644 : index
    %c0_55 = arith.constant 0 : index
    %55 = vector.load %arg5[%c644, %c0_55] : memref<784x32xf32, #tpu.memory_space<vmem>>, vector<28x32xf32>
    %56 = arith.maximumf %54, %55 : vector<28x32xf32>
    %c308_56 = arith.constant 308 : index
    %c0_57 = arith.constant 0 : index
    %57 = vector.load %arg6[%c308_56, %c0_57] : memref<392x32xf32, #tpu.memory_space<vmem>>, vector<28x32xf32>
    tpu.vector_store %arg6[%c308_56, %c0_57], %56 {strides = array<i32>} : memref<392x32xf32, #tpu.memory_space<vmem>>, vector<28x32xf32>,
    %c672 = arith.constant 672 : index
    %c0_58 = arith.constant 0 : index
    %58 = vector.load %arg5[%c672, %c0_58] : memref<784x32xf32, #tpu.memory_space<vmem>>, vector<28x32xf32>
    %c700 = arith.constant 700 : index
    %c0_59 = arith.constant 0 : index
    %59 = vector.load %arg5[%c700, %c0_59] : memref<784x32xf32, #tpu.memory_space<vmem>>, vector<28x32xf32>
    %60 = arith.maximumf %58, %59 : vector<28x32xf32>
    %c336_60 = arith.constant 336 : index
    %c0_61 = arith.constant 0 : index
    %61 = vector.load %arg6[%c336_60, %c0_61] : memref<392x32xf32, #tpu.memory_space<vmem>>, vector<28x32xf32>
    tpu.vector_store %arg6[%c336_60, %c0_61], %60 {strides = array<i32>} : memref<392x32xf32, #tpu.memory_space<vmem>>, vector<28x32xf32>,
    %c728 = arith.constant 728 : index
    %c0_62 = arith.constant 0 : index
    %62 = vector.load %arg5[%c728, %c0_62] : memref<784x32xf32, #tpu.memory_space<vmem>>, vector<28x32xf32>
    %c756 = arith.constant 756 : index
    %c0_63 = arith.constant 0 : index
    %63 = vector.load %arg5[%c756, %c0_63] : memref<784x32xf32, #tpu.memory_space<vmem>>, vector<28x32xf32>
    %64 = arith.maximumf %62, %63 : vector<28x32xf32>
    %c364_64 = arith.constant 364 : index
    %c0_65 = arith.constant 0 : index
    %65 = vector.load %arg6[%c364_64, %c0_65] : memref<392x32xf32, #tpu.memory_space<vmem>>, vector<28x32xf32>
    tpu.vector_store %arg6[%c364_64, %c0_65], %64 {strides = array<i32>} : memref<392x32xf32, #tpu.memory_space<vmem>>, vector<28x32xf32>,
    %c0_66 = arith.constant 0 : index
    %c0_67 = arith.constant 0 : index
    %66 = tpu.strided_load %arg6[%c0_66, %c0_67] {strides = array<i32: 2, 1>} : memref<392x32xf32, #tpu.memory_space<vmem>>, vector<196x32xf32>
    %c1 = arith.constant 1 : index
    %c0_68 = arith.constant 0 : index
    %67 = tpu.strided_load %arg6[%c1, %c0_68] {strides = array<i32: 2, 1>} : memref<392x32xf32, #tpu.memory_space<vmem>>, vector<196x32xf32>
    %68 = arith.maximumf %66, %67 : vector<196x32xf32>
    %c0_69 = arith.constant 0 : index
    %c0_70 = arith.constant 0 : index
    %c0_71 = arith.constant 0 : index
    %69 = vector.load %arg4[%c0_69, %c0_70, %c0_71] : memref<1x196x32xf32, #tpu.memory_space<vmem>>, vector<1x196x32xf32>
    %70 = vector.shape_cast %69 : vector<1x196x32xf32> to vector<196x32xf32>
    %71 = vector.shape_cast %68 : vector<196x32xf32> to vector<1x196x32xf32>
    tpu.vector_store %arg4[%c0_69, %c0_70, %c0_71], %71 {strides = array<i32>} : memref<1x196x32xf32, #tpu.memory_space<vmem>>, vector<1x196x32xf32>,
    return
  }
  func.func @transform_0(%arg0: i32) -> (i32, i32, i32) {
    %c0_i32 = arith.constant 0 : i32
    %c0_i32_0 = arith.constant 0 : i32
    %c0_i32_1 = arith.constant 0 : i32
    return %arg0, %c0_i32, %c0_i32_0 : i32, i32, i32
  }
  func.func @transform_1(%arg0: i32) -> (i32, i32) {
    %c0_i32 = arith.constant 0 : i32
    %c0_i32_0 = arith.constant 0 : i32
    %c0_i32_1 = arith.constant 0 : i32
    return %c0_i32, %c0_i32_0 : i32, i32
  }
  func.func @transform_2(%arg0: i32) -> (i32, i32) {
    %c0_i32 = arith.constant 0 : i32
    %c0_i32_0 = arith.constant 0 : i32
    %c0_i32_1 = arith.constant 0 : i32
    return %c0_i32, %c0_i32_0 : i32, i32
  }
  func.func @transform_3(%arg0: i32) -> (i32, i32, i32) {
    %c0_i32 = arith.constant 0 : i32
    %c0_i32_0 = arith.constant 0 : i32
    %c0_i32_1 = arith.constant 0 : i32
    return %arg0, %c0_i32, %c0_i32_0 : i32, i32, i32
  }
}

module attributes {stable_mosaic.version = 11 : i64} {
  func.func @_conv_block_kernel(%arg0: i32, %arg1: memref<1x196x288xbf16, #tpu.memory_space<vmem>>, %arg2: memref<288x64xbf16, #tpu.memory_space<vmem>>, %arg3: memref<1x64xf32, #tpu.memory_space<vmem>>, %arg4: memref<1x49x64xf32, #tpu.memory_space<vmem>>, %arg5: memref<196x64xf32, #tpu.memory_space<vmem>>, %arg6: memref<98x64xf32, #tpu.memory_space<vmem>>) attributes {dimension_semantics = [#tpu.dimension_semantics<parallel>], iteration_bounds = array<i64: 2>, scalar_prefetch = 0 : i64, scratch_operands = 2 : i64, tpu.core_type = #tpu.core_type<tc>, window_params = [{transform_indices = @transform_0, window_bounds = array<i64: 1, 196, 288>}, {pipeline_mode = #tpu.pipeline_mode<synchronous>, transform_indices = @transform_1, window_bounds = array<i64: 288, 64>}, {pipeline_mode = #tpu.pipeline_mode<synchronous>, transform_indices = @transform_2, window_bounds = array<i64: 1, 64>}, {transform_indices = @transform_3, window_bounds = array<i64: 1, 49, 64>}]} {
    %c0 = arith.constant 0 : index
    %c0_0 = arith.constant 0 : index
    %c0_1 = arith.constant 0 : index
    %0 = vector.load %arg1[%c0, %c0_0, %c0_1] : memref<1x196x288xbf16, #tpu.memory_space<vmem>>, vector<1x196x288xbf16>
    %1 = vector.shape_cast %0 : vector<1x196x288xbf16> to vector<196x288xbf16>
    %c0_2 = arith.constant 0 : index
    %c0_3 = arith.constant 0 : index
    %2 = vector.load %arg2[%c0_2, %c0_3] : memref<288x64xbf16, #tpu.memory_space<vmem>>, vector<288x64xbf16>
    %cst = arith.constant dense<0.000000e+00> : vector<196x64xf32>
    %3 = tpu.matmul %1, %2, %cst {dimension_numbers = #tpu.dot_dimension_numbers<[1], [0], [0], [1], [0, 0, 1, 1], [], []>} : vector<196x288xbf16>, vector<288x64xbf16>, vector<196x64xf32> -> vector<196x64xf32>
    %c0_4 = arith.constant 0 : index
    %c0_5 = arith.constant 0 : index
    %4 = vector.load %arg3[%c0_4, %c0_5] : memref<1x64xf32, #tpu.memory_space<vmem>>, vector<1x64xf32>
    %5 = vector.broadcast %4 : vector<1x64xf32> to vector<196x64xf32>
    %6 = arith.addf %3, %5 : vector<196x64xf32>
    %cst_6 = arith.constant 0.000000e+00 : f32
    %7 = vector.broadcast %cst_6 : f32 to vector<196x64xf32>
    %8 = arith.maximumf %6, %7 : vector<196x64xf32>
    %c0_7 = arith.constant 0 : index
    %c0_8 = arith.constant 0 : index
    %9 = vector.load %arg5[%c0_7, %c0_8] : memref<196x64xf32, #tpu.memory_space<vmem>>, vector<196x64xf32>
    tpu.vector_store %arg5[%c0_7, %c0_8], %8 {strides = array<i32>} : memref<196x64xf32, #tpu.memory_space<vmem>>, vector<196x64xf32>,
    %c0_9 = arith.constant 0 : index
    %c0_10 = arith.constant 0 : index
    %10 = vector.load %arg5[%c0_9, %c0_10] : memref<196x64xf32, #tpu.memory_space<vmem>>, vector<14x64xf32>
    %c14 = arith.constant 14 : index
    %c0_11 = arith.constant 0 : index
    %11 = vector.load %arg5[%c14, %c0_11] : memref<196x64xf32, #tpu.memory_space<vmem>>, vector<14x64xf32>
    %12 = arith.maximumf %10, %11 : vector<14x64xf32>
    %c0_12 = arith.constant 0 : index
    %c0_13 = arith.constant 0 : index
    %13 = vector.load %arg6[%c0_12, %c0_13] : memref<98x64xf32, #tpu.memory_space<vmem>>, vector<14x64xf32>
    tpu.vector_store %arg6[%c0_12, %c0_13], %12 {strides = array<i32>} : memref<98x64xf32, #tpu.memory_space<vmem>>, vector<14x64xf32>,
    %c28 = arith.constant 28 : index
    %c0_14 = arith.constant 0 : index
    %14 = vector.load %arg5[%c28, %c0_14] : memref<196x64xf32, #tpu.memory_space<vmem>>, vector<14x64xf32>
    %c42 = arith.constant 42 : index
    %c0_15 = arith.constant 0 : index
    %15 = vector.load %arg5[%c42, %c0_15] : memref<196x64xf32, #tpu.memory_space<vmem>>, vector<14x64xf32>
    %16 = arith.maximumf %14, %15 : vector<14x64xf32>
    %c14_16 = arith.constant 14 : index
    %c0_17 = arith.constant 0 : index
    %17 = vector.load %arg6[%c14_16, %c0_17] : memref<98x64xf32, #tpu.memory_space<vmem>>, vector<14x64xf32>
    tpu.vector_store %arg6[%c14_16, %c0_17], %16 {strides = array<i32>} : memref<98x64xf32, #tpu.memory_space<vmem>>, vector<14x64xf32>,
    %c56 = arith.constant 56 : index
    %c0_18 = arith.constant 0 : index
    %18 = vector.load %arg5[%c56, %c0_18] : memref<196x64xf32, #tpu.memory_space<vmem>>, vector<14x64xf32>
    %c70 = arith.constant 70 : index
    %c0_19 = arith.constant 0 : index
    %19 = vector.load %arg5[%c70, %c0_19] : memref<196x64xf32, #tpu.memory_space<vmem>>, vector<14x64xf32>
    %20 = arith.maximumf %18, %19 : vector<14x64xf32>
    %c28_20 = arith.constant 28 : index
    %c0_21 = arith.constant 0 : index
    %21 = vector.load %arg6[%c28_20, %c0_21] : memref<98x64xf32, #tpu.memory_space<vmem>>, vector<14x64xf32>
    tpu.vector_store %arg6[%c28_20, %c0_21], %20 {strides = array<i32>} : memref<98x64xf32, #tpu.memory_space<vmem>>, vector<14x64xf32>,
    %c84 = arith.constant 84 : index
    %c0_22 = arith.constant 0 : index
    %22 = vector.load %arg5[%c84, %c0_22] : memref<196x64xf32, #tpu.memory_space<vmem>>, vector<14x64xf32>
    %c98 = arith.constant 98 : index
    %c0_23 = arith.constant 0 : index
    %23 = vector.load %arg5[%c98, %c0_23] : memref<196x64xf32, #tpu.memory_space<vmem>>, vector<14x64xf32>
    %24 = arith.maximumf %22, %23 : vector<14x64xf32>
    %c42_24 = arith.constant 42 : index
    %c0_25 = arith.constant 0 : index
    %25 = vector.load %arg6[%c42_24, %c0_25] : memref<98x64xf32, #tpu.memory_space<vmem>>, vector<14x64xf32>
    tpu.vector_store %arg6[%c42_24, %c0_25], %24 {strides = array<i32>} : memref<98x64xf32, #tpu.memory_space<vmem>>, vector<14x64xf32>,
    %c112 = arith.constant 112 : index
    %c0_26 = arith.constant 0 : index
    %26 = vector.load %arg5[%c112, %c0_26] : memref<196x64xf32, #tpu.memory_space<vmem>>, vector<14x64xf32>
    %c126 = arith.constant 126 : index
    %c0_27 = arith.constant 0 : index
    %27 = vector.load %arg5[%c126, %c0_27] : memref<196x64xf32, #tpu.memory_space<vmem>>, vector<14x64xf32>
    %28 = arith.maximumf %26, %27 : vector<14x64xf32>
    %c56_28 = arith.constant 56 : index
    %c0_29 = arith.constant 0 : index
    %29 = vector.load %arg6[%c56_28, %c0_29] : memref<98x64xf32, #tpu.memory_space<vmem>>, vector<14x64xf32>
    tpu.vector_store %arg6[%c56_28, %c0_29], %28 {strides = array<i32>} : memref<98x64xf32, #tpu.memory_space<vmem>>, vector<14x64xf32>,
    %c140 = arith.constant 140 : index
    %c0_30 = arith.constant 0 : index
    %30 = vector.load %arg5[%c140, %c0_30] : memref<196x64xf32, #tpu.memory_space<vmem>>, vector<14x64xf32>
    %c154 = arith.constant 154 : index
    %c0_31 = arith.constant 0 : index
    %31 = vector.load %arg5[%c154, %c0_31] : memref<196x64xf32, #tpu.memory_space<vmem>>, vector<14x64xf32>
    %32 = arith.maximumf %30, %31 : vector<14x64xf32>
    %c70_32 = arith.constant 70 : index
    %c0_33 = arith.constant 0 : index
    %33 = vector.load %arg6[%c70_32, %c0_33] : memref<98x64xf32, #tpu.memory_space<vmem>>, vector<14x64xf32>
    tpu.vector_store %arg6[%c70_32, %c0_33], %32 {strides = array<i32>} : memref<98x64xf32, #tpu.memory_space<vmem>>, vector<14x64xf32>,
    %c168 = arith.constant 168 : index
    %c0_34 = arith.constant 0 : index
    %34 = vector.load %arg5[%c168, %c0_34] : memref<196x64xf32, #tpu.memory_space<vmem>>, vector<14x64xf32>
    %c182 = arith.constant 182 : index
    %c0_35 = arith.constant 0 : index
    %35 = vector.load %arg5[%c182, %c0_35] : memref<196x64xf32, #tpu.memory_space<vmem>>, vector<14x64xf32>
    %36 = arith.maximumf %34, %35 : vector<14x64xf32>
    %c84_36 = arith.constant 84 : index
    %c0_37 = arith.constant 0 : index
    %37 = vector.load %arg6[%c84_36, %c0_37] : memref<98x64xf32, #tpu.memory_space<vmem>>, vector<14x64xf32>
    tpu.vector_store %arg6[%c84_36, %c0_37], %36 {strides = array<i32>} : memref<98x64xf32, #tpu.memory_space<vmem>>, vector<14x64xf32>,
    %c0_38 = arith.constant 0 : index
    %c0_39 = arith.constant 0 : index
    %38 = tpu.strided_load %arg6[%c0_38, %c0_39] {strides = array<i32: 2, 1>} : memref<98x64xf32, #tpu.memory_space<vmem>>, vector<49x64xf32>
    %c1 = arith.constant 1 : index
    %c0_40 = arith.constant 0 : index
    %39 = tpu.strided_load %arg6[%c1, %c0_40] {strides = array<i32: 2, 1>} : memref<98x64xf32, #tpu.memory_space<vmem>>, vector<49x64xf32>
    %40 = arith.maximumf %38, %39 : vector<49x64xf32>
    %c0_41 = arith.constant 0 : index
    %c0_42 = arith.constant 0 : index
    %c0_43 = arith.constant 0 : index
    %41 = vector.load %arg4[%c0_41, %c0_42, %c0_43] : memref<1x49x64xf32, #tpu.memory_space<vmem>>, vector<1x49x64xf32>
    %42 = vector.shape_cast %41 : vector<1x49x64xf32> to vector<49x64xf32>
    %43 = vector.shape_cast %40 : vector<49x64xf32> to vector<1x49x64xf32>
    tpu.vector_store %arg4[%c0_41, %c0_42, %c0_43], %43 {strides = array<i32>} : memref<1x49x64xf32, #tpu.memory_space<vmem>>, vector<1x49x64xf32>,
    return
  }
  func.func @transform_0(%arg0: i32) -> (i32, i32, i32) {
    %c0_i32 = arith.constant 0 : i32
    %c0_i32_0 = arith.constant 0 : i32
    %c0_i32_1 = arith.constant 0 : i32
    return %arg0, %c0_i32, %c0_i32_0 : i32, i32, i32
  }
  func.func @transform_1(%arg0: i32) -> (i32, i32) {
    %c0_i32 = arith.constant 0 : i32
    %c0_i32_0 = arith.constant 0 : i32
    %c0_i32_1 = arith.constant 0 : i32
    return %c0_i32, %c0_i32_0 : i32, i32
  }
  func.func @transform_2(%arg0: i32) -> (i32, i32) {
    %c0_i32 = arith.constant 0 : i32
    %c0_i32_0 = arith.constant 0 : i32
    %c0_i32_1 = arith.constant 0 : i32
    return %c0_i32, %c0_i32_0 : i32, i32
  }
  func.func @transform_3(%arg0: i32) -> (i32, i32, i32) {
    %c0_i32 = arith.constant 0 : i32
    %c0_i32_0 = arith.constant 0 : i32
    %c0_i32_1 = arith.constant 0 : i32
    return %arg0, %c0_i32, %c0_i32_0 : i32, i32, i32
  }
}

module attributes {stable_mosaic.version = 11 : i64} {
  func.func @_conv_block_kernel(%arg0: i32, %arg1: memref<1x49x576xbf16, #tpu.memory_space<vmem>>, %arg2: memref<576x128xbf16, #tpu.memory_space<vmem>>, %arg3: memref<1x128xf32, #tpu.memory_space<vmem>>, %arg4: memref<1x9x128xf32, #tpu.memory_space<vmem>>, %arg5: memref<49x128xf32, #tpu.memory_space<vmem>>, %arg6: memref<21x128xf32, #tpu.memory_space<vmem>>) attributes {dimension_semantics = [#tpu.dimension_semantics<parallel>], iteration_bounds = array<i64: 2>, scalar_prefetch = 0 : i64, scratch_operands = 2 : i64, tpu.core_type = #tpu.core_type<tc>, window_params = [{transform_indices = @transform_0, window_bounds = array<i64: 1, 49, 576>}, {pipeline_mode = #tpu.pipeline_mode<synchronous>, transform_indices = @transform_1, window_bounds = array<i64: 576, 128>}, {pipeline_mode = #tpu.pipeline_mode<synchronous>, transform_indices = @transform_2, window_bounds = array<i64: 1, 128>}, {transform_indices = @transform_3, window_bounds = array<i64: 1, 9, 128>}]} {
    %c0 = arith.constant 0 : index
    %c0_0 = arith.constant 0 : index
    %c0_1 = arith.constant 0 : index
    %0 = vector.load %arg1[%c0, %c0_0, %c0_1] : memref<1x49x576xbf16, #tpu.memory_space<vmem>>, vector<1x49x576xbf16>
    %1 = vector.shape_cast %0 : vector<1x49x576xbf16> to vector<49x576xbf16>
    %c0_2 = arith.constant 0 : index
    %c0_3 = arith.constant 0 : index
    %2 = vector.load %arg2[%c0_2, %c0_3] : memref<576x128xbf16, #tpu.memory_space<vmem>>, vector<576x128xbf16>
    %cst = arith.constant dense<0.000000e+00> : vector<49x128xf32>
    %3 = tpu.matmul %1, %2, %cst {dimension_numbers = #tpu.dot_dimension_numbers<[1], [0], [0], [1], [0, 0, 1, 1], [], []>} : vector<49x576xbf16>, vector<576x128xbf16>, vector<49x128xf32> -> vector<49x128xf32>
    %c0_4 = arith.constant 0 : index
    %c0_5 = arith.constant 0 : index
    %4 = vector.load %arg3[%c0_4, %c0_5] : memref<1x128xf32, #tpu.memory_space<vmem>>, vector<1x128xf32>
    %5 = vector.broadcast %4 : vector<1x128xf32> to vector<49x128xf32>
    %6 = arith.addf %3, %5 : vector<49x128xf32>
    %cst_6 = arith.constant 0.000000e+00 : f32
    %7 = vector.broadcast %cst_6 : f32 to vector<49x128xf32>
    %8 = arith.maximumf %6, %7 : vector<49x128xf32>
    %c0_7 = arith.constant 0 : index
    %c0_8 = arith.constant 0 : index
    %9 = vector.load %arg5[%c0_7, %c0_8] : memref<49x128xf32, #tpu.memory_space<vmem>>, vector<49x128xf32>
    tpu.vector_store %arg5[%c0_7, %c0_8], %8 {strides = array<i32>} : memref<49x128xf32, #tpu.memory_space<vmem>>, vector<49x128xf32>,
    %c0_9 = arith.constant 0 : index
    %c0_10 = arith.constant 0 : index
    %10 = vector.load %arg5[%c0_9, %c0_10] : memref<49x128xf32, #tpu.memory_space<vmem>>, vector<7x128xf32>
    %c7 = arith.constant 7 : index
    %c0_11 = arith.constant 0 : index
    %11 = vector.load %arg5[%c7, %c0_11] : memref<49x128xf32, #tpu.memory_space<vmem>>, vector<7x128xf32>
    %12 = arith.maximumf %10, %11 : vector<7x128xf32>
    %c0_12 = arith.constant 0 : index
    %c0_13 = arith.constant 0 : index
    %13 = vector.load %arg6[%c0_12, %c0_13] : memref<21x128xf32, #tpu.memory_space<vmem>>, vector<7x128xf32>
    tpu.vector_store %arg6[%c0_12, %c0_13], %12 {strides = array<i32>} : memref<21x128xf32, #tpu.memory_space<vmem>>, vector<7x128xf32>,
    %c14 = arith.constant 14 : index
    %c0_14 = arith.constant 0 : index
    %14 = vector.load %arg5[%c14, %c0_14] : memref<49x128xf32, #tpu.memory_space<vmem>>, vector<7x128xf32>
    %c21 = arith.constant 21 : index
    %c0_15 = arith.constant 0 : index
    %15 = vector.load %arg5[%c21, %c0_15] : memref<49x128xf32, #tpu.memory_space<vmem>>, vector<7x128xf32>
    %16 = arith.maximumf %14, %15 : vector<7x128xf32>
    %c7_16 = arith.constant 7 : index
    %c0_17 = arith.constant 0 : index
    %17 = vector.load %arg6[%c7_16, %c0_17] : memref<21x128xf32, #tpu.memory_space<vmem>>, vector<7x128xf32>
    tpu.vector_store %arg6[%c7_16, %c0_17], %16 {strides = array<i32>} : memref<21x128xf32, #tpu.memory_space<vmem>>, vector<7x128xf32>,
    %c28 = arith.constant 28 : index
    %c0_18 = arith.constant 0 : index
    %18 = vector.load %arg5[%c28, %c0_18] : memref<49x128xf32, #tpu.memory_space<vmem>>, vector<7x128xf32>
    %c35 = arith.constant 35 : index
    %c0_19 = arith.constant 0 : index
    %19 = vector.load %arg5[%c35, %c0_19] : memref<49x128xf32, #tpu.memory_space<vmem>>, vector<7x128xf32>
    %20 = arith.maximumf %18, %19 : vector<7x128xf32>
    %c14_20 = arith.constant 14 : index
    %c0_21 = arith.constant 0 : index
    %21 = vector.load %arg6[%c14_20, %c0_21] : memref<21x128xf32, #tpu.memory_space<vmem>>, vector<7x128xf32>
    tpu.vector_store %arg6[%c14_20, %c0_21], %20 {strides = array<i32>} : memref<21x128xf32, #tpu.memory_space<vmem>>, vector<7x128xf32>,
    %c0_22 = arith.constant 0 : index
    %c0_23 = arith.constant 0 : index
    %22 = tpu.strided_load %arg6[%c0_22, %c0_23] {strides = array<i32: 2, 1>} : memref<21x128xf32, #tpu.memory_space<vmem>>, vector<3x128xf32>
    %c1 = arith.constant 1 : index
    %c0_24 = arith.constant 0 : index
    %23 = tpu.strided_load %arg6[%c1, %c0_24] {strides = array<i32: 2, 1>} : memref<21x128xf32, #tpu.memory_space<vmem>>, vector<3x128xf32>
    %24 = arith.maximumf %22, %23 : vector<3x128xf32>
    %c7_25 = arith.constant 7 : index
    %c0_26 = arith.constant 0 : index
    %25 = tpu.strided_load %arg6[%c7_25, %c0_26] {strides = array<i32: 2, 1>} : memref<21x128xf32, #tpu.memory_space<vmem>>, vector<3x128xf32>
    %c8 = arith.constant 8 : index
    %c0_27 = arith.constant 0 : index
    %26 = tpu.strided_load %arg6[%c8, %c0_27] {strides = array<i32: 2, 1>} : memref<21x128xf32, #tpu.memory_space<vmem>>, vector<3x128xf32>
    %27 = arith.maximumf %25, %26 : vector<3x128xf32>
    %c14_28 = arith.constant 14 : index
    %c0_29 = arith.constant 0 : index
    %28 = tpu.strided_load %arg6[%c14_28, %c0_29] {strides = array<i32: 2, 1>} : memref<21x128xf32, #tpu.memory_space<vmem>>, vector<3x128xf32>
    %c15 = arith.constant 15 : index
    %c0_30 = arith.constant 0 : index
    %29 = tpu.strided_load %arg6[%c15, %c0_30] {strides = array<i32: 2, 1>} : memref<21x128xf32, #tpu.memory_space<vmem>>, vector<3x128xf32>
    %30 = arith.maximumf %28, %29 : vector<3x128xf32>
    %31 = tpu.concatenate %24, %27, %30 in 0 : vector<3x128xf32>, vector<3x128xf32>, vector<3x128xf32> -> vector<9x128xf32>
    %c0_31 = arith.constant 0 : index
    %c0_32 = arith.constant 0 : index
    %c0_33 = arith.constant 0 : index
    %32 = vector.load %arg4[%c0_31, %c0_32, %c0_33] : memref<1x9x128xf32, #tpu.memory_space<vmem>>, vector<1x9x128xf32>
    %33 = vector.shape_cast %32 : vector<1x9x128xf32> to vector<9x128xf32>
    %34 = vector.shape_cast %31 : vector<9x128xf32> to vector<1x9x128xf32>
    tpu.vector_store %arg4[%c0_31, %c0_32, %c0_33], %34 {strides = array<i32>} : memref<1x9x128xf32, #tpu.memory_space<vmem>>, vector<1x9x128xf32>,
    return
  }
  func.func @transform_0(%arg0: i32) -> (i32, i32, i32) {
    %c0_i32 = arith.constant 0 : i32
    %c0_i32_0 = arith.constant 0 : i32
    %c0_i32_1 = arith.constant 0 : i32
    return %arg0, %c0_i32, %c0_i32_0 : i32, i32, i32
  }
  func.func @transform_1(%arg0: i32) -> (i32, i32) {
    %c0_i32 = arith.constant 0 : i32
    %c0_i32_0 = arith.constant 0 : i32
    %c0_i32_1 = arith.constant 0 : i32
    return %c0_i32, %c0_i32_0 : i32, i32
  }
  func.func @transform_2(%arg0: i32) -> (i32, i32) {
    %c0_i32 = arith.constant 0 : i32
    %c0_i32_0 = arith.constant 0 : i32
    %c0_i32_1 = arith.constant 0 : i32
    return %c0_i32, %c0_i32_0 : i32, i32
  }
  func.func @transform_3(%arg0: i32) -> (i32, i32, i32) {
    %c0_i32 = arith.constant 0 : i32
    %c0_i32_0 = arith.constant 0 : i32
    %c0_i32_1 = arith.constant 0 : i32
    return %arg0, %c0_i32, %c0_i32_0 : i32, i32, i32
  }
}

module attributes {stable_mosaic.version = 11 : i64} {
  func.func @_conv4_fc_kernel(%arg0: i32, %arg1: memref<1x9x1152xbf16, #tpu.memory_space<vmem>>, %arg2: memref<1152x256xbf16, #tpu.memory_space<vmem>>, %arg3: memref<1x256xf32, #tpu.memory_space<vmem>>, %arg4: memref<256x10xbf16, #tpu.memory_space<vmem>>, %arg5: memref<1x10xf32, #tpu.memory_space<vmem>>, %arg6: memref<1x1x10xf32, #tpu.memory_space<vmem>>, %arg7: memref<9x256xf32, #tpu.memory_space<vmem>>) attributes {dimension_semantics = [#tpu.dimension_semantics<parallel>], iteration_bounds = array<i64: 2>, scalar_prefetch = 0 : i64, scratch_operands = 1 : i64, tpu.core_type = #tpu.core_type<tc>, window_params = [{transform_indices = @transform_0, window_bounds = array<i64: 1, 9, 1152>}, {pipeline_mode = #tpu.pipeline_mode<synchronous>, transform_indices = @transform_1, window_bounds = array<i64: 1152, 256>}, {pipeline_mode = #tpu.pipeline_mode<synchronous>, transform_indices = @transform_2, window_bounds = array<i64: 1, 256>}, {pipeline_mode = #tpu.pipeline_mode<synchronous>, transform_indices = @transform_3, window_bounds = array<i64: 256, 10>}, {pipeline_mode = #tpu.pipeline_mode<synchronous>, transform_indices = @transform_4, window_bounds = array<i64: 1, 10>}, {transform_indices = @transform_5, window_bounds = array<i64: 1, 1, 10>}]} {
    %c0 = arith.constant 0 : index
    %c0_0 = arith.constant 0 : index
    %c0_1 = arith.constant 0 : index
    %0 = vector.load %arg1[%c0, %c0_0, %c0_1] : memref<1x9x1152xbf16, #tpu.memory_space<vmem>>, vector<1x9x1152xbf16>
    %1 = vector.shape_cast %0 : vector<1x9x1152xbf16> to vector<9x1152xbf16>
    %c0_2 = arith.constant 0 : index
    %c0_3 = arith.constant 0 : index
    %2 = vector.load %arg2[%c0_2, %c0_3] : memref<1152x256xbf16, #tpu.memory_space<vmem>>, vector<1152x256xbf16>
    %cst = arith.constant dense<0.000000e+00> : vector<9x256xf32>
    %3 = tpu.matmul %1, %2, %cst {dimension_numbers = #tpu.dot_dimension_numbers<[1], [0], [0], [1], [0, 0, 1, 1], [], []>} : vector<9x1152xbf16>, vector<1152x256xbf16>, vector<9x256xf32> -> vector<9x256xf32>
    %c0_4 = arith.constant 0 : index
    %c0_5 = arith.constant 0 : index
    %4 = vector.load %arg3[%c0_4, %c0_5] : memref<1x256xf32, #tpu.memory_space<vmem>>, vector<1x256xf32>
    %5 = vector.broadcast %4 : vector<1x256xf32> to vector<9x256xf32>
    %6 = arith.addf %3, %5 : vector<9x256xf32>
    %cst_6 = arith.constant 0.000000e+00 : f32
    %7 = vector.broadcast %cst_6 : f32 to vector<9x256xf32>
    %8 = arith.maximumf %6, %7 : vector<9x256xf32>
    %c0_7 = arith.constant 0 : index
    %c0_8 = arith.constant 0 : index
    %9 = vector.load %arg7[%c0_7, %c0_8] : memref<9x256xf32, #tpu.memory_space<vmem>>, vector<9x256xf32>
    tpu.vector_store %arg7[%c0_7, %c0_8], %8 {strides = array<i32>} : memref<9x256xf32, #tpu.memory_space<vmem>>, vector<9x256xf32>,
    %c0_9 = arith.constant 0 : index
    %c0_10 = arith.constant 0 : index
    %10 = vector.load %arg7[%c0_9, %c0_10] : memref<9x256xf32, #tpu.memory_space<vmem>>, vector<1x256xf32>
    %c1 = arith.constant 1 : index
    %c0_11 = arith.constant 0 : index
    %11 = vector.load %arg7[%c1, %c0_11] : memref<9x256xf32, #tpu.memory_space<vmem>>, vector<1x256xf32>
    %c3 = arith.constant 3 : index
    %c0_12 = arith.constant 0 : index
    %12 = vector.load %arg7[%c3, %c0_12] : memref<9x256xf32, #tpu.memory_space<vmem>>, vector<1x256xf32>
    %c4 = arith.constant 4 : index
    %c0_13 = arith.constant 0 : index
    %13 = vector.load %arg7[%c4, %c0_13] : memref<9x256xf32, #tpu.memory_space<vmem>>, vector<1x256xf32>
    %14 = arith.maximumf %10, %11 : vector<1x256xf32>
    %15 = arith.maximumf %12, %13 : vector<1x256xf32>
    %16 = arith.maximumf %14, %15 : vector<1x256xf32>
    %17 = arith.truncf %16 : vector<1x256xf32> to vector<1x256xbf16>
    %c0_14 = arith.constant 0 : index
    %c0_15 = arith.constant 0 : index
    %18 = vector.load %arg4[%c0_14, %c0_15] : memref<256x10xbf16, #tpu.memory_space<vmem>>, vector<256x10xbf16>
    %cst_16 = arith.constant dense<0.000000e+00> : vector<1x10xf32>
    %19 = tpu.matmul %17, %18, %cst_16 {dimension_numbers = #tpu.dot_dimension_numbers<[1], [0], [0], [1], [0, 0, 1, 1], [], []>} : vector<1x256xbf16>, vector<256x10xbf16>, vector<1x10xf32> -> vector<1x10xf32>
    %c0_17 = arith.constant 0 : index
    %c0_18 = arith.constant 0 : index
    %20 = vector.load %arg5[%c0_17, %c0_18] : memref<1x10xf32, #tpu.memory_space<vmem>>, vector<1x10xf32>
    %21 = arith.addf %19, %20 : vector<1x10xf32>
    %cst_19 = arith.constant dense<0xFF800000> : vector<1xf32>
    %22 = vector.multi_reduction <maximumf>, %21, %cst_19 [1] : vector<1x10xf32> to vector<1xf32>
    %23 = vector.shape_cast %22 : vector<1xf32> to vector<1x1xf32>
    %24 = vector.broadcast %23 : vector<1x1xf32> to vector<1x10xf32>
    %25 = arith.subf %21, %24 : vector<1x10xf32>
    %26 = math.exp %25 : vector<1x10xf32>
    %cst_20 = arith.constant dense<0.000000e+00> : vector<1xf32>
    %27 = vector.multi_reduction <add>, %26, %cst_20 [1] : vector<1x10xf32> to vector<1xf32>
    %28 = vector.shape_cast %27 : vector<1xf32> to vector<1x1xf32>
    %29 = math.log %28 : vector<1x1xf32>
    %30 = vector.broadcast %29 : vector<1x1xf32> to vector<1x10xf32>
    %31 = arith.subf %25, %30 : vector<1x10xf32>
    %c0_21 = arith.constant 0 : index
    %c0_22 = arith.constant 0 : index
    %c0_23 = arith.constant 0 : index
    %32 = vector.load %arg6[%c0_21, %c0_22, %c0_23] : memref<1x1x10xf32, #tpu.memory_space<vmem>>, vector<1x1x10xf32>
    %33 = vector.shape_cast %32 : vector<1x1x10xf32> to vector<1x10xf32>
    %34 = vector.shape_cast %31 : vector<1x10xf32> to vector<1x1x10xf32>
    tpu.vector_store %arg6[%c0_21, %c0_22, %c0_23], %34 {strides = array<i32>} : memref<1x1x10xf32, #tpu.memory_space<vmem>>, vector<1x1x10xf32>,
    return
  }
  func.func @transform_0(%arg0: i32) -> (i32, i32, i32) {
    %c0_i32 = arith.constant 0 : i32
    %c0_i32_0 = arith.constant 0 : i32
    %c0_i32_1 = arith.constant 0 : i32
    return %arg0, %c0_i32, %c0_i32_0 : i32, i32, i32
  }
  func.func @transform_1(%arg0: i32) -> (i32, i32) {
    %c0_i32 = arith.constant 0 : i32
    %c0_i32_0 = arith.constant 0 : i32
    %c0_i32_1 = arith.constant 0 : i32
    return %c0_i32, %c0_i32_0 : i32, i32
  }
  func.func @transform_2(%arg0: i32) -> (i32, i32) {
    %c0_i32 = arith.constant 0 : i32
    %c0_i32_0 = arith.constant 0 : i32
    %c0_i32_1 = arith.constant 0 : i32
    return %c0_i32, %c0_i32_0 : i32, i32
  }
  func.func @transform_3(%arg0: i32) -> (i32, i32) {
    %c0_i32 = arith.constant 0 : i32
    %c0_i32_0 = arith.constant 0 : i32
    %c0_i32_1 = arith.constant 0 : i32
    return %c0_i32, %c0_i32_0 : i32, i32
  }
  func.func @transform_4(%arg0: i32) -> (i32, i32) {
    %c0_i32 = arith.constant 0 : i32
    %c0_i32_0 = arith.constant 0 : i32
    %c0_i32_1 = arith.constant 0 : i32
    return %c0_i32, %c0_i32_0 : i32, i32
  }
  func.func @transform_5(%arg0: i32) -> (i32, i32, i32) {
    %c0_i32 = arith.constant 0 : i32
    %c0_i32_0 = arith.constant 0 : i32
    %c0_i32_1 = arith.constant 0 : i32
    return %arg0, %c0_i32, %c0_i32_0 : i32, i32, i32
  }
}

</mosaic_0001>

<llo_original>
// kernel: cnn_classifier_forward.4
$region0: #{cnn_classifier_forward.4}
  #allocation0 [shape = 'u32[]', space=smem, size = 0x4, offset = 0x4, fixed_abs, tag = 'smem constant byte address 0x4 - core index']
  #allocation1 [shape = 'u32[72,128]{1,0:T(1,128)}', space=vmem, size = 0x9000, scoped, tag = 'internal scratch']
  #allocation2 [shape = 'f32[784,32]{1,0:T(8,128)}', space=vmem, size = 0x62000, scoped, tag = 'scratch operand']
  #allocation3 [shape = 'f32[392,32]{1,0:T(8,128)}', space=vmem, size = 0x31000, scoped, tag = 'scratch operand']
  %s0 = inlined_call_operand.vmem [shape: bf16[2,784,9], index: 0, kind: input, shape index: {}]
  %s1 = inlined_call_operand.vmem [shape: bf16[9,32], index: 1, kind: input, shape index: {}]
  %s2 = inlined_call_operand.vmem [shape: f32[1,32], index: 2, kind: input, shape index: {}]
  %s3 = inlined_call_operand.vmem [shape: f32[2,196,32], index: 3, kind: output, shape index: {}]
  %s4 = sld [smem:[#allocation0]]
  $region45: #{cnn_classifier_forward.4} parent=0
    _
  %s6 = ssub.s32 1, %s4
  %s7 = scalar_select 0, %s6, %s4
  loop: start=0, step=1, limit=4
  $region2: #{cnn_classifier_forward.4} parent=0 // loop_pre_header
    _
  $region3: #{cnn_classifier_forward.4} parent=0 // loop_header
    %s9 = sphi 0, %s13
    %p10 = scmp.ge.s32.totalorder %s9, 4
    %s19 = sphi 0, %s21
    %s22 = sphi 0, %s19
    %s23 = sphi 0, %s22
    %s39 = sphi 0, %s23
    %s43 = sphi 0, %s43
    %s45 = sphi 0, %s43
    %s46 = sphi 0, %s45
    %s60 = sphi 0, %s46
    %s64 = sphi 0, %s64
    %s66 = sphi 0, %s64
    %s67 = sphi 0, %s66
    %s81 = sphi 0, %s67
    %s87 = sphi 0, %s89
    %s90 = sphi 0, %s87
    %s91 = sphi 0, %s90
    %s107 = sphi 0, %s91
  $region4: #{cnn_classifier_forward.4} parent=0 // loop_header_branch
    %12 = sbr.rel (%p10) target = $region8
  $region5: #{cnn_classifier_forward.4} parent=0 // loop_body
    %s14 = ssub.s32 %s9, 1
    %s15 = ssub.s32 %s9, 2
    %s16 = sadd.s32 %s9, 1
    %s17 = ssub.s32 %s9, %s16
    %p18 = scmp.eq.s32.totalorder %s17, 0
    %s20 = sadd.s32 %s19, 1
    %s21 = scalar_select %p18, %s19, %s20
    %p24 = pneg %p18
    %p25 = scmp.eq.s32.totalorder %s9, 1
    %p26 = por %p24, %p25
    %p27 = scmp.ne.s32.totalorder %s19, %s22
    %p28 = scmp.eq.s32.totalorder %s9, 0
    %p29 = por %p27, %p28
    %p30 = scmp.ne.s32.totalorder %s19, %s22
    %p31 = scmp.eq.s32.totalorder %s14, 1
    %p32 = por %p30, %p31
    %p33 = scmp.ne.s32.totalorder %s22, %s23
    %p34 = scmp.eq.s32.totalorder %s14, 0
    %p35 = por %p33, %p34
    %p36 = scmp.ne.s32.totalorder %s22, %s23
    %p37 = scmp.eq.s32.totalorder %s15, 1
    %p38 = por %p36, %p37
    %p40 = scmp.ne.s32.totalorder %s23, %s39
    %p41 = scmp.eq.s32.totalorder %s15, 0
    %p42 = por %p40, %p41
    %s44 = sadd.s32 %s43, 1
    %p47 = scmp.eq.s32.totalorder %s9, 1
    %p48 = scmp.ne.s32.totalorder %s43, %s45
    %p49 = scmp.eq.s32.totalorder %s9, 0
    %p50 = por %p48, %p49
    %p51 = scmp.ne.s32.totalorder %s43, %s45
    %p52 = scmp.eq.s32.totalorder %s14, 1
    %p53 = por %p51, %p52
    %p54 = scmp.ne.s32.totalorder %s45, %s46
    %p55 = scmp.eq.s32.totalorder %s14, 0
    %p56 = por %p54, %p55
    %p57 = scmp.ne.s32.totalorder %s45, %s46
    %p58 = scmp.eq.s32.totalorder %s15, 1
    %p59 = por %p57, %p58
    %p61 = scmp.ne.s32.totalorder %s46, %s60
    %p62 = scmp.eq.s32.totalorder %s15, 0
    %p63 = por %p61, %p62
    %s65 = sadd.s32 %s64, 1
    %p68 = scmp.eq.s32.totalorder %s9, 1
    %p69 = scmp.ne.s32.totalorder %s64, %s66
    %p70 = scmp.eq.s32.totalorder %s9, 0
    %p71 = por %p69, %p70
    %p72 = scmp.ne.s32.totalorder %s64, %s66
    %p73 = scmp.eq.s32.totalorder %s14, 1
    %p74 = por %p72, %p73
    %p75 = scmp.ne.s32.totalorder %s66, %s67
    %p76 = scmp.eq.s32.totalorder %s14, 0
    %p77 = por %p75, %p76
    %p78 = scmp.ne.s32.totalorder %s66, %s67
    %p79 = scmp.eq.s32.totalorder %s15, 1
    %p80 = por %p78, %p79
    %p82 = scmp.ne.s32.totalorder %s67, %s81
    %p83 = scmp.eq.s32.totalorder %s15, 0
    %p84 = por %p82, %p83
    %s85 = ssub.s32 %s9, %s16
    %p86 = scmp.eq.s32.totalorder %s85, 0
    %s88 = sadd.s32 %s87, 1
    %s89 = scalar_select %p86, %s87, %s88
    %p92 = pneg %p86
    %p93 = scmp.eq.s32.totalorder %s9, 1
    %p94 = por %p92, %p93
    %p95 = scmp.ne.s32.totalorder %s87, %s90
    %p96 = scmp.eq.s32.totalorder %s9, 0
    %p97 = por %p95, %p96
    %p98 = scmp.ne.s32.totalorder %s87, %s90
    %p99 = scmp.eq.s32.totalorder %s14, 1
    %p100 = por %p98, %p99
    %p101 = scmp.ne.s32.totalorder %s90, %s91
    %p102 = scmp.eq.s32.totalorder %s14, 0
    %p103 = por %p101, %p102
    %p104 = scmp.ne.s32.totalorder %s90, %s91
    %p105 = scmp.eq.s32.totalorder %s15, 1
    %p106 = por %p104, %p105
    %p108 = scmp.ne.s32.totalorder %s91, %s107
    %p109 = scmp.eq.s32.totalorder %s15, 0
    %p110 = por %p108, %p109
    %p111 = scmp.le.s32.totalorder 1, %s9
    %p112 = scmp.lt.s32.totalorder %s9, 3
    %p113 = pnand %p111, %p112
    %p114 = pneg %p113
    // Predicated region
    $region9: #{cnn_classifier_forward.4} parent=5 // pred_check
      _
    $region10: #{cnn_classifier_forward.4} parent=5 // pred_check_branch
      %116 = sbr.rel (%p113) target = $region12
    $region11: #{cnn_classifier_forward.4} parent=5 // pred_region
      %s117 = ssub.s32 %s9, 1
      // Predicated region
      $region13: #{cnn_classifier_forward.4} parent=11 // pred_check
        %p118 = pneg %p56
      $region14: #{cnn_classifier_forward.4} parent=11 // pred_check_branch
        %120 = sbr.rel (%p118) target = $region16
      $region15: #{cnn_classifier_forward.4} parent=11 // pred_region
        _
      $region16: #{cnn_classifier_forward.4} parent=11 // pred_fallthru
        _
      // Predicated region
      $region17: #{cnn_classifier_forward.4} parent=11 // pred_check
        %p121 = pneg %p77
      $region18: #{cnn_classifier_forward.4} parent=11 // pred_check_branch
        %123 = sbr.rel (%p121) target = $region20
      $region19: #{cnn_classifier_forward.4} parent=11 // pred_region
        _
      $region20: #{cnn_classifier_forward.4} parent=11 // pred_fallthru
        _
    $region12: #{cnn_classifier_forward.4} parent=5 // pred_fallthru
      _
    %p124 = scmp.lt.s32.totalorder %s9, 2
    // Predicated region
    $region21: #{cnn_classifier_forward.4} parent=5 // pred_check
      %p125 = pneg %p124
    $region22: #{cnn_classifier_forward.4} parent=5 // pred_check_branch
      %127 = sbr.rel (%p125) target = $region24
    $region23: #{cnn_classifier_forward.4} parent=5 // pred_region
      // Predicated region
      $region25: #{cnn_classifier_forward.4} parent=23 // pred_check
        %p128 = pneg %p29
      $region26: #{cnn_classifier_forward.4} parent=23 // pred_check_branch
        %130 = sbr.rel (%p128) target = $region28
      $region27: #{cnn_classifier_forward.4} parent=23 // pred_region
        %p131 = scmp.lt.s32.totalorder %s9, 1
        %s132 = scalar_select %p131, %s9, 1
        %s133 = smul.addr %s132, 98
        %s134 = smul.addr %s133, 4
        %s135 = scalar_lea.vmem %s0, %s134
      $region28: #{cnn_classifier_forward.4} parent=23 // pred_fallthru
        _
    $region24: #{cnn_classifier_forward.4} parent=5 // pred_fallthru
      _
    %p136 = scmp.le.s32.totalorder 1, %s9
    %p137 = scmp.lt.s32.totalorder %s9, 3
    %p138 = pnand %p136, %p137
    %p139 = pneg %p138
    // Predicated region
    $region29: #{cnn_classifier_forward.4} parent=5 // pred_check
      _
    $region30: #{cnn_classifier_forward.4} parent=5 // pred_check_branch
      %141 = sbr.rel (%p138) target = $region32
    $region31: #{cnn_classifier_forward.4} parent=5 // pred_region
      %s142 = ssub.s32 %s9, 1
      %p143 = scmp.lt.s32.totalorder %s14, 1
      %s144 = scalar_select %p143, %s14, 1
      %s145 = smul.addr %s144, 98
      %s146 = smul.addr %s145, 4
      %s147 = scalar_lea.vmem %s0, %s146
      %p148 = pneg %p35
      %p149 = pneg %p32
      %p150 = pneg %p56
      %p151 = pneg %p53
      %p152 = pneg %p77
      %p153 = pneg %p74
      %p154 = pneg %p103
      %p155 = pneg %p100
      %p156 = scmp.lt.s32.totalorder %s14, 1
      %s157 = scalar_select %p156, %s14, 1
      %s158 = smul.addr %s157, 25
      %s159 = smul.addr %s158, 8
      %s160 = scalar_lea.vmem %s3, %s159
      %p161 = scmp.lt.s32.totalorder %s14, 1
      %s162 = scalar_select %p161, %s14, 1
      %s163 = smul.addr %s162, 98
      %s164 = smul.addr %s163, 4
      %s165 = scalar_lea.vmem %s0, %s164
      %p166 = scmp.lt.s32.totalorder %s14, 1
      %s167 = scalar_select %p166, %s14, 1
      %s168 = smul.addr %s167, 25
      %s169 = smul.addr %s168, 8
      %s170 = scalar_lea.vmem %s3, %s169
      %v172 = vld [vmem:[%s165] sm:$0xf]
      %v173 = vld [vmem:[%s165 + $0x4] sm:$0xf]
      %v174 = vld [vmem:[%s165 + $0x8] sm:$0xf]
      %v175 = vld [vmem:[%s165 + $0xc] sm:$0xf]
      %v176 = vld [vmem:[%s165 + $0x10] sm:$0xf]
      %v177 = vld [vmem:[%s165 + $0x14] sm:$0xf]
      %v178 = vld [vmem:[%s165 + $0x18] sm:$0xf]
      %v179 = vld [vmem:[%s165 + $0x1c] sm:$0xf]
      %v180 = vld [vmem:[%s165 + $0x20] sm:$0xf]
      %v181 = vld [vmem:[%s165 + $0x24] sm:$0xf]
      %v182 = vld [vmem:[%s165 + $0x28] sm:$0xf]
      %v183 = vld [vmem:[%s165 + $0x2c] sm:$0xf]
      %v184 = vld [vmem:[%s165 + $0x30] sm:$0xf]
      %v185 = vld [vmem:[%s165 + $0x34] sm:$0xf]
      %v186 = vld [vmem:[%s165 + $0x38] sm:$0xf]
      %v187 = vld [vmem:[%s165 + $0x3c] sm:$0xf]
      %v188 = vld [vmem:[%s165 + $0x40] sm:$0xf]
      %v189 = vld [vmem:[%s165 + $0x44] sm:$0xf]
      %v190 = vld [vmem:[%s165 + $0x48] sm:$0xf]
      %v191 = vld [vmem:[%s165 + $0x4c] sm:$0xf]
      %v192 = vld [vmem:[%s165 + $0x50] sm:$0xf]
      %v193 = vld [vmem:[%s165 + $0x54] sm:$0xf]
      %v194 = vld [vmem:[%s165 + $0x58] sm:$0xf]
      %v195 = vld [vmem:[%s165 + $0x5c] sm:$0xf]
      %v196 = vld [vmem:[%s165 + $0x60] sm:$0xf]
      %v197 = vld [vmem:[%s165 + $0x64] sm:$0xf]
      %v198 = vld [vmem:[%s165 + $0x68] sm:$0xf]
      %v199 = vld [vmem:[%s165 + $0x6c] sm:$0xf]
      %v200 = vld [vmem:[%s165 + $0x70] sm:$0xf]
      %v201 = vld [vmem:[%s165 + $0x74] sm:$0xf]
      %v202 = vld [vmem:[%s165 + $0x78] sm:$0xf]
      %v203 = vld [vmem:[%s165 + $0x7c] sm:$0xf]
      %v204 = vld [vmem:[%s165 + $0x80] sm:$0xf]
      %v205 = vld [vmem:[%s165 + $0x84] sm:$0xf]
      %v206 = vld [vmem:[%s165 + $0x88] sm:$0xf]
      %v207 = vld [vmem:[%s165 + $0x8c] sm:$0xf]
      %v208 = vld [vmem:[%s165 + $0x90] sm:$0xf]
      %v209 = vld [vmem:[%s165 + $0x94] sm:$0xf]
      %v210 = vld [vmem:[%s165 + $0x98] sm:$0xf]
      %v211 = vld [vmem:[%s165 + $0x9c] sm:$0xf]
      %v212 = vld [vmem:[%s165 + $0xa0] sm:$0xf]
      %v213 = vld [vmem:[%s165 + $0xa4] sm:$0xf]
      %v214 = vld [vmem:[%s165 + $0xa8] sm:$0xf]
      %v215 = vld [vmem:[%s165 + $0xac] sm:$0xf]
      %v216 = vld [vmem:[%s165 + $0xb0] sm:$0xf]
      %v217 = vld [vmem:[%s165 + $0xb4] sm:$0xf]
      %v218 = vld [vmem:[%s165 + $0xb8] sm:$0xf]
      %v219 = vld [vmem:[%s165 + $0xbc] sm:$0xf]
      %v220 = vld [vmem:[%s165 + $0xc0] sm:$0xf]
      %v221 = vld [vmem:[%s165 + $0xc4] sm:$0xf]
      %v222 = vld [vmem:[%s165 + $0xc8] sm:$0xf]
      %v223 = vld [vmem:[%s165 + $0xcc] sm:$0xf]
      %v224 = vld [vmem:[%s165 + $0xd0] sm:$0xf]
      %v225 = vld [vmem:[%s165 + $0xd4] sm:$0xf]
      %v226 = vld [vmem:[%s165 + $0xd8] sm:$0xf]
      %v227 = vld [vmem:[%s165 + $0xdc] sm:$0xf]
      %v228 = vld [vmem:[%s165 + $0xe0] sm:$0xf]
      %v229 = vld [vmem:[%s165 + $0xe4] sm:$0xf]
      %v230 = vld [vmem:[%s165 + $0xe8] sm:$0xf]
      %v231 = vld [vmem:[%s165 + $0xec] sm:$0xf]
      %v232 = vld [vmem:[%s165 + $0xf0] sm:$0xf]
      %v233 = vld [vmem:[%s165 + $0xf4] sm:$0xf]
      %v234 = vld [vmem:[%s165 + $0xf8] sm:$0xf]
      %v235 = vld [vmem:[%s165 + $0xfc] sm:$0xf]
      %v236 = vld [vmem:[%s165 + $0x100] sm:$0xf]
      %v237 = vld [vmem:[%s165 + $0x104] sm:$0xf]
      %v238 = vld [vmem:[%s165 + $0x108] sm:$0xf]
      %v239 = vld [vmem:[%s165 + $0x10c] sm:$0xf]
      %v240 = vld [vmem:[%s165 + $0x110] sm:$0xf]
      %v241 = vld [vmem:[%s165 + $0x114] sm:$0xf]
      %v242 = vld [vmem:[%s165 + $0x118] sm:$0xf]
      %v243 = vld [vmem:[%s165 + $0x11c] sm:$0xf]
      %v244 = vld [vmem:[%s165 + $0x120] sm:$0xf]
      %v245 = vld [vmem:[%s165 + $0x124] sm:$0xf]
      %v246 = vld [vmem:[%s165 + $0x128] sm:$0xf]
      %v247 = vld [vmem:[%s165 + $0x12c] sm:$0xf]
      %v248 = vld [vmem:[%s165 + $0x130] sm:$0xf]
      %v249 = vld [vmem:[%s165 + $0x134] sm:$0xf]
      %v250 = vld [vmem:[%s165 + $0x138] sm:$0xf]
      %v251 = vld [vmem:[%s165 + $0x13c] sm:$0xf]
      %v252 = vld [vmem:[%s165 + $0x140] sm:$0xf]
      %v253 = vld [vmem:[%s165 + $0x144] sm:$0xf]
      %v254 = vld [vmem:[%s165 + $0x148] sm:$0xf]
      %v255 = vld [vmem:[%s165 + $0x14c] sm:$0xf]
      %v256 = vld [vmem:[%s165 + $0x150] sm:$0xf]
      %v257 = vld [vmem:[%s165 + $0x154] sm:$0xf]
      %v258 = vld [vmem:[%s165 + $0x158] sm:$0xf]
      %v259 = vld [vmem:[%s165 + $0x15c] sm:$0xf]
      %v260 = vld [vmem:[%s165 + $0x160] sm:$0xf]
      %v261 = vld [vmem:[%s165 + $0x164] sm:$0xf]
      %v262 = vld [vmem:[%s165 + $0x168] sm:$0xf]
      %v263 = vld [vmem:[%s165 + $0x16c] sm:$0xf]
      %v264 = vld [vmem:[%s165 + $0x170] sm:$0xf]
      %v265 = vld [vmem:[%s165 + $0x174] sm:$0xf]
      %v266 = vld [vmem:[%s165 + $0x178] sm:$0xf]
      %v267 = vld [vmem:[%s165 + $0x17c] sm:$0xf]
      %v268 = vld [vmem:[%s165 + $0x180] sm:$0xf]
      %v269 = vld [vmem:[%s165 + $0x184] sm:$0xf]
      %v270 = vld [vmem:[%s1] sm:$0xf]
      %v271 = vld [vmem:[%s1 + $0x4] sm:$0x1]
      %v272 = vld [vmem:[%s2] sm:$0x1]
      %v274 = vperm.slane %v272, 0
      %v374 = vunpack.c.l.b16 %v172
      %v375 = vunpack.c.l.b16 %v173
      %v376 = vunpack.c.l.b16 %v174
      %v377 = vunpack.c.l.b16 %v175
      %v378 = vunpack.c.l.b16 %v176
      %v379 = vunpack.c.l.b16 %v177
      %v380 = vunpack.c.l.b16 %v178
      %v381 = vunpack.c.l.b16 %v179
      %v382 = vunpack.c.l.b16 %v180
      %v383 = vunpack.c.l.b16 %v181
      %v384 = vunpack.c.l.b16 %v182
      %v385 = vunpack.c.l.b16 %v183
      %v386 = vunpack.c.l.b16 %v184
      %v387 = vunpack.c.l.b16 %v185
      %v388 = vunpack.c.l.b16 %v186
      %v389 = vunpack.c.l.b16 %v187
      %v390 = vunpack.c.l.b16 %v188
      %v391 = vunpack.c.l.b16 %v189
      %v392 = vunpack.c.l.b16 %v190
      %v393 = vunpack.c.l.b16 %v191
      %v394 = vunpack.c.l.b16 %v192
      %v395 = vunpack.c.l.b16 %v193
      %v396 = vunpack.c.l.b16 %v194
      %v397 = vunpack.c.l.b16 %v195
      %v398 = vunpack.c.l.b16 %v196
      %v399 = vunpack.c.l.b16 %v197
      %v400 = vunpack.c.l.b16 %v198
      %v401 = vunpack.c.l.b16 %v199
      %v402 = vunpack.c.l.b16 %v200
      %v403 = vunpack.c.l.b16 %v201
      %v404 = vunpack.c.l.b16 %v202
      %v405 = vunpack.c.l.b16 %v203
      %v406 = vunpack.c.l.b16 %v204
      %v407 = vunpack.c.l.b16 %v205
      %v408 = vunpack.c.l.b16 %v206
      %v409 = vunpack.c.l.b16 %v207
      %v410 = vunpack.c.l.b16 %v208
      %v411 = vunpack.c.l.b16 %v209
      %v412 = vunpack.c.l.b16 %v210
      %v413 = vunpack.c.l.b16 %v211
      %v414 = vunpack.c.l.b16 %v212
      %v415 = vunpack.c.l.b16 %v213
      %v416 = vunpack.c.l.b16 %v214
      %v417 = vunpack.c.l.b16 %v215
      %v418 = vunpack.c.l.b16 %v216
      %v419 = vunpack.c.l.b16 %v217
      %v420 = vunpack.c.l.b16 %v218
      %v421 = vunpack.c.l.b16 %v219
      %v422 = vunpack.c.l.b16 %v220
      %v423 = vunpack.c.l.b16 %v221
      %v424 = vunpack.c.l.b16 %v222
      %v425 = vunpack.c.l.b16 %v223
      %v426 = vunpack.c.l.b16 %v224
      %v427 = vunpack.c.l.b16 %v225
      %v428 = vunpack.c.l.b16 %v226
      %v429 = vunpack.c.l.b16 %v227
      %v430 = vunpack.c.l.b16 %v228
      %v431 = vunpack.c.l.b16 %v229
      %v432 = vunpack.c.l.b16 %v230
      %v433 = vunpack.c.l.b16 %v231
      %v434 = vunpack.c.l.b16 %v232
      %v435 = vunpack.c.l.b16 %v233
      %v436 = vunpack.c.l.b16 %v234
      %v437 = vunpack.c.l.b16 %v235
      %v438 = vunpack.c.l.b16 %v236
      %v439 = vunpack.c.l.b16 %v237
      %v440 = vunpack.c.l.b16 %v238
      %v441 = vunpack.c.l.b16 %v239
      %v442 = vunpack.c.l.b16 %v240
      %v443 = vunpack.c.l.b16 %v241
      %v444 = vunpack.c.l.b16 %v242
      %v445 = vunpack.c.l.b16 %v243
      %v446 = vunpack.c.l.b16 %v244
      %v447 = vunpack.c.l.b16 %v245
      %v448 = vunpack.c.l.b16 %v246
      %v449 = vunpack.c.l.b16 %v247
      %v450 = vunpack.c.l.b16 %v248
      %v451 = vunpack.c.l.b16 %v249
      %v452 = vunpack.c.l.b16 %v250
      %v453 = vunpack.c.l.b16 %v251
      %v454 = vunpack.c.l.b16 %v252
      %v455 = vunpack.c.l.b16 %v253
      %v456 = vunpack.c.l.b16 %v254
      %v457 = vunpack.c.l.b16 %v255
      %v458 = vunpack.c.l.b16 %v256
      %v459 = vunpack.c.l.b16 %v257
      %v460 = vunpack.c.l.b16 %v258
      %v461 = vunpack.c.l.b16 %v259
      %v462 = vunpack.c.l.b16 %v260
      %v463 = vunpack.c.l.b16 %v261
      %v464 = vunpack.c.l.b16 %v262
      %v465 = vunpack.c.l.b16 %v263
      %v466 = vunpack.c.l.b16 %v264
      %v467 = vunpack.c.l.b16 %v265
      %v468 = vunpack.c.l.b16 %v266
      %v469 = vunpack.c.l.b16 %v267
      %v470 = vunpack.c.l.b16 %v268
      %v471 = vunpack.c.l.b16 %v269
      %v472 = vpack.c.b16 %v375, %v374
      %v473 = vpack.c.b16 %v377, %v376
      %v474 = vpack.c.b16 %v379, %v378
      %v475 = vpack.c.b16 %v381, %v380
      %v476 = vpack.c.b16 %v383, %v382
      %v477 = vpack.c.b16 %v385, %v384
      %v478 = vpack.c.b16 %v387, %v386
      %v479 = vpack.c.b16 %v389, %v388
      %v480 = vpack.c.b16 %v391, %v390
      %v481 = vpack.c.b16 %v393, %v392
      %v482 = vpack.c.b16 %v395, %v394
      %v483 = vpack.c.b16 %v397, %v396
      %v484 = vpack.c.b16 %v399, %v398
      %v485 = vpack.c.b16 %v401, %v400
      %v486 = vpack.c.b16 %v403, %v402
      %v487 = vpack.c.b16 %v405, %v404
      %v488 = vpack.c.b16 %v407, %v406
      %v489 = vpack.c.b16 %v409, %v408
      %v490 = vpack.c.b16 %v411, %v410
      %v491 = vpack.c.b16 %v413, %v412
      %v492 = vpack.c.b16 %v415, %v414
      %v493 = vpack.c.b16 %v417, %v416
      %v494 = vpack.c.b16 %v419, %v418
      %v495 = vpack.c.b16 %v421, %v420
      %v496 = vpack.c.b16 %v423, %v422
      %v497 = vpack.c.b16 %v425, %v424
      %v498 = vpack.c.b16 %v427, %v426
      %v499 = vpack.c.b16 %v429, %v428
      %v500 = vpack.c.b16 %v431, %v430
      %v501 = vpack.c.b16 %v433, %v432
      %v502 = vpack.c.b16 %v435, %v434
      %v503 = vpack.c.b16 %v437, %v436
      %v504 = vpack.c.b16 %v439, %v438
      %v505 = vpack.c.b16 %v441, %v440
      %v506 = vpack.c.b16 %v443, %v442
      %v507 = vpack.c.b16 %v445, %v444
      %v508 = vpack.c.b16 %v447, %v446
      %v509 = vpack.c.b16 %v449, %v448
      %v510 = vpack.c.b16 %v451, %v450
      %v511 = vpack.c.b16 %v453, %v452
      %v512 = vpack.c.b16 %v455, %v454
      %v513 = vpack.c.b16 %v457, %v456
      %v514 = vpack.c.b16 %v459, %v458
      %v515 = vpack.c.b16 %v461, %v460
      %v516 = vpack.c.b16 %v463, %v462
      %v517 = vpack.c.b16 %v465, %v464
      %v518 = vpack.c.b16 %v467, %v466
      %v519 = vpack.c.b16 %v469, %v468
      %v520 = vpack.c.b16 %v471, %v470
      %v523 = vunpack.c.l.b16 %v270
      %v524 = vunpack.c.l.b16 %v271
      %v525 = vpack.c.b16 %v524, %v523
      %vm526 = vcmask 72704
      %v528 = vsel %vm526, %v472, 0
      %v531 = vsel %vm526, %v473, 0
      %v534 = vsel %vm526, %v474, 0
      %v537 = vsel %vm526, %v475, 0
      %v540 = vsel %vm526, %v476, 0
      %v543 = vsel %vm526, %v477, 0
      %v546 = vsel %vm526, %v478, 0
      %v549 = vsel %vm526, %v479, 0
      %v552 = vsel %vm526, %v480, 0
      %v555 = vsel %vm526, %v481, 0
      %v558 = vsel %vm526, %v482, 0
      %v561 = vsel %vm526, %v483, 0
      %v564 = vsel %vm526, %v484, 0
      %v567 = vsel %vm526, %v485, 0
      %v570 = vsel %vm526, %v486, 0
      %v573 = vsel %vm526, %v487, 0
      %v576 = vsel %vm526, %v488, 0
      %v579 = vsel %vm526, %v489, 0
      %v582 = vsel %vm526, %v490, 0
      %v585 = vsel %vm526, %v491, 0
      %v588 = vsel %vm526, %v492, 0
      %v591 = vsel %vm526, %v493, 0
      %v594 = vsel %vm526, %v494, 0
      %v597 = vsel %vm526, %v495, 0
      %v600 = vsel %vm526, %v496, 0
      %v603 = vsel %vm526, %v497, 0
      %v606 = vsel %vm526, %v498, 0
      %v609 = vsel %vm526, %v499, 0
      %v612 = vsel %vm526, %v500, 0
      %v615 = vsel %vm526, %v501, 0
      %v618 = vsel %vm526, %v502, 0
      %v621 = vsel %vm526, %v503, 0
      %v624 = vsel %vm526, %v504, 0
      %v627 = vsel %vm526, %v505, 0
      %v630 = vsel %vm526, %v506, 0
      %v633 = vsel %vm526, %v507, 0
      %v636 = vsel %vm526, %v508, 0
      %v639 = vsel %vm526, %v509, 0
      %v642 = vsel %vm526, %v510, 0
      %v645 = vsel %vm526, %v511, 0
      %v648 = vsel %vm526, %v512, 0
      %v651 = vsel %vm526, %v513, 0
      %v654 = vsel %vm526, %v514, 0
      %v657 = vsel %vm526, %v515, 0
      %v660 = vsel %vm526, %v516, 0
      %v663 = vsel %vm526, %v517, 0
      %v666 = vsel %vm526, %v518, 0
      %v669 = vsel %vm526, %v519, 0
      %v672 = vsel %vm526, %v520, 0
      %vm674 = vcmask 1043456
      %vm675 = vcmask 1044480
      %v676 = vsel %vm674, 4294967295, 65535
      %v677 = vsel %vm675, %v676, 0
      %v679 = vand.u32 %v525, %v677
      %681 = vmatpush.bf16.msra.mxu0 0
      %682 = vmatpush.bf16.msra.mxu0 0
      %683 = vmatpush.bf16.msra.mxu0 0
      %684 = vmatpush.bf16.msra.mxu0 0
      %685 = vmatpush.bf16.msra.mxu0 0
      %686 = vmatpush.bf16.msra.mxu0 0
      %687 = vmatpush.bf16.msra.mxu0 0
      %688 = vmatpush.bf16.msra.mxu0 %v679
      %689 = vmatmul.bf16.gmra.mxu0 %v528
      %v690 = vpop.f32.mrf.mxu0
      %v691 = vadd.f32 %v274, %v690
      %v692 = vpop.f32.mrf.mxu0
      %v693 = vadd.f32 %v274, %v692
      %694 = vmatmul.bf16.gmra.mxu0 %v531
      %v695 = vpop.f32.mrf.mxu0
      %v696 = vadd.f32 %v274, %v695
      %v697 = vpop.f32.mrf.mxu0
      %v698 = vadd.f32 %v274, %v697
      %699 = vmatmul.bf16.gmra.mxu0 %v534
      %v700 = vpop.f32.mrf.mxu0
      %v701 = vadd.f32 %v274, %v700
      %v702 = vpop.f32.mrf.mxu0
      %v703 = vadd.f32 %v274, %v702
      %704 = vmatmul.bf16.gmra.mxu0 %v537
      %v705 = vpop.f32.mrf.mxu0
      %v706 = vadd.f32 %v274, %v705
      %v707 = vpop.f32.mrf.mxu0
      %v708 = vadd.f32 %v274, %v707
      %709 = vmatmul.bf16.gmra.mxu0 %v540
      %v710 = vpop.f32.mrf.mxu0
      %v711 = vadd.f32 %v274, %v710
      %v712 = vpop.f32.mrf.mxu0
      %v713 = vadd.f32 %v274, %v712
      %714 = vmatmul.bf16.gmra.mxu0 %v543
      %v715 = vpop.f32.mrf.mxu0
      %v716 = vadd.f32 %v274, %v715
      %v717 = vpop.f32.mrf.mxu0
      %v718 = vadd.f32 %v274, %v717
      %719 = vmatmul.bf16.gmra.mxu0 %v546
      %v720 = vpop.f32.mrf.mxu0
      %v721 = vadd.f32 %v274, %v720
      %v722 = vpop.f32.mrf.mxu0
      %v723 = vadd.f32 %v274, %v722
      %724 = vmatmul.bf16.gmra.mxu0 %v549
      %v725 = vpop.f32.mrf.mxu0
      %v726 = vadd.f32 %v274, %v725
      %v727 = vpop.f32.mrf.mxu0
      %v728 = vadd.f32 %v274, %v727
      %729 = vmatmul.bf16.gmra.mxu0 %v552
      %v730 = vpop.f32.mrf.mxu0
      %v731 = vadd.f32 %v274, %v730
      %v732 = vpop.f32.mrf.mxu0
      %v733 = vadd.f32 %v274, %v732
      %734 = vmatmul.bf16.gmra.mxu0 %v555
      %v735 = vpop.f32.mrf.mxu0
      %v736 = vadd.f32 %v274, %v735
      %v737 = vpop.f32.mrf.mxu0
      %v738 = vadd.f32 %v274, %v737
      %739 = vmatmul.bf16.gmra.mxu0 %v558
      %v740 = vpop.f32.mrf.mxu0
      %v741 = vadd.f32 %v274, %v740
      %v742 = vpop.f32.mrf.mxu0
      %v743 = vadd.f32 %v274, %v742
      %744 = vmatmul.bf16.gmra.mxu0 %v561
      %v745 = vpop.f32.mrf.mxu0
      %v746 = vadd.f32 %v274, %v745
      %v747 = vpop.f32.mrf.mxu0
      %v748 = vadd.f32 %v274, %v747
      %749 = vmatmul.bf16.gmra.mxu0 %v564
      %v750 = vpop.f32.mrf.mxu0
      %v751 = vadd.f32 %v274, %v750
      %v752 = vpop.f32.mrf.mxu0
      %v753 = vadd.f32 %v274, %v752
      %754 = vmatmul.bf16.gmra.mxu0 %v567
      %v755 = vpop.f32.mrf.mxu0
      %v756 = vadd.f32 %v274, %v755
      %v757 = vpop.f32.mrf.mxu0
      %v758 = vadd.f32 %v274, %v757
      %759 = vmatmul.bf16.gmra.mxu0 %v570
      %v760 = vpop.f32.mrf.mxu0
      %v761 = vadd.f32 %v274, %v760
      %v762 = vpop.f32.mrf.mxu0
      %v763 = vadd.f32 %v274, %v762
      %764 = vmatmul.bf16.gmra.mxu0 %v573
      %v765 = vpop.f32.mrf.mxu0
      %v766 = vadd.f32 %v274, %v765
      %v767 = vpop.f32.mrf.mxu0
      %v768 = vadd.f32 %v274, %v767
      %769 = vmatmul.bf16.gmra.mxu0 %v576
      %v770 = vpop.f32.mrf.mxu0
      %v771 = vadd.f32 %v274, %v770
      %v772 = vpop.f32.mrf.mxu0
      %v773 = vadd.f32 %v274, %v772
      %774 = vmatmul.bf16.gmra.mxu0 %v579
      %v775 = vpop.f32.mrf.mxu0
      %v776 = vadd.f32 %v274, %v775
      %v777 = vpop.f32.mrf.mxu0
      %v778 = vadd.f32 %v274, %v777
      %779 = vmatmul.bf16.gmra.mxu0 %v582
      %v780 = vpop.f32.mrf.mxu0
      %v781 = vadd.f32 %v274, %v780
      %v782 = vpop.f32.mrf.mxu0
      %v783 = vadd.f32 %v274, %v782
      %784 = vmatmul.bf16.gmra.mxu0 %v585
      %v785 = vpop.f32.mrf.mxu0
      %v786 = vadd.f32 %v274, %v785
      %v787 = vpop.f32.mrf.mxu0
      %v788 = vadd.f32 %v274, %v787
      %789 = vmatmul.bf16.gmra.mxu0 %v588
      %v790 = vpop.f32.mrf.mxu0
      %v791 = vadd.f32 %v274, %v790
      %v792 = vpop.f32.mrf.mxu0
      %v793 = vadd.f32 %v274, %v792
      %794 = vmatmul.bf16.gmra.mxu0 %v591
      %v795 = vpop.f32.mrf.mxu0
      %v796 = vadd.f32 %v274, %v795
      %v797 = vpop.f32.mrf.mxu0
      %v798 = vadd.f32 %v274, %v797
      %799 = vmatmul.bf16.gmra.mxu0 %v594
      %v800 = vpop.f32.mrf.mxu0
      %v801 = vadd.f32 %v274, %v800
      %v802 = vpop.f32.mrf.mxu0
      %v803 = vadd.f32 %v274, %v802
      %804 = vmatmul.bf16.gmra.mxu0 %v597
      %v805 = vpop.f32.mrf.mxu0
      %v806 = vadd.f32 %v274, %v805
      %v807 = vpop.f32.mrf.mxu0
      %v808 = vadd.f32 %v274, %v807
      %809 = vmatmul.bf16.gmra.mxu0 %v600
      %v810 = vpop.f32.mrf.mxu0
      %v811 = vadd.f32 %v274, %v810
      %v812 = vpop.f32.mrf.mxu0
      %v813 = vadd.f32 %v274, %v812
      %814 = vmatmul.bf16.gmra.mxu0 %v603
      %v815 = vpop.f32.mrf.mxu0
      %v816 = vadd.f32 %v274, %v815
      %v817 = vpop.f32.mrf.mxu0
      %v818 = vadd.f32 %v274, %v817
      %819 = vmatmul.bf16.gmra.mxu0 %v606
      %v820 = vpop.f32.mrf.mxu0
      %v821 = vadd.f32 %v274, %v820
      %v822 = vpop.f32.mrf.mxu0
      %v823 = vadd.f32 %v274, %v822
      %824 = vmatmul.bf16.gmra.mxu0 %v609
      %v825 = vpop.f32.mrf.mxu0
      %v826 = vadd.f32 %v274, %v825
      %v827 = vpop.f32.mrf.mxu0
      %v828 = vadd.f32 %v274, %v827
      %829 = vmatmul.bf16.gmra.mxu0 %v612
      %v830 = vpop.f32.mrf.mxu0
      %v831 = vadd.f32 %v274, %v830
      %v832 = vpop.f32.mrf.mxu0
      %v833 = vadd.f32 %v274, %v832
      %834 = vmatmul.bf16.gmra.mxu0 %v615
      %v835 = vpop.f32.mrf.mxu0
      %v836 = vadd.f32 %v274, %v835
      %v837 = vpop.f32.mrf.mxu0
      %v838 = vadd.f32 %v274, %v837
      %839 = vmatmul.bf16.gmra.mxu0 %v618
      %v840 = vpop.f32.mrf.mxu0
      %v841 = vadd.f32 %v274, %v840
      %v842 = vpop.f32.mrf.mxu0
      %v843 = vadd.f32 %v274, %v842
      %844 = vmatmul.bf16.gmra.mxu0 %v621
      %v845 = vpop.f32.mrf.mxu0
      %v846 = vadd.f32 %v274, %v845
      %v847 = vpop.f32.mrf.mxu0
      %v848 = vadd.f32 %v274, %v847
      %849 = vmatmul.bf16.gmra.mxu0 %v624
      %v850 = vpop.f32.mrf.mxu0
      %v851 = vadd.f32 %v274, %v850
      %v852 = vpop.f32.mrf.mxu0
      %v853 = vadd.f32 %v274, %v852
      %854 = vmatmul.bf16.gmra.mxu0 %v627
      %v855 = vpop.f32.mrf.mxu0
      %v856 = vadd.f32 %v274, %v855
      %v857 = vpop.f32.mrf.mxu0
      %v858 = vadd.f32 %v274, %v857
      %859 = vmatmul.bf16.gmra.mxu0 %v630
      %v860 = vpop.f32.mrf.mxu0
      %v861 = vadd.f32 %v274, %v860
      %v862 = vpop.f32.mrf.mxu0
      %v863 = vadd.f32 %v274, %v862
      %864 = vmatmul.bf16.gmra.mxu0 %v633
      %v865 = vpop.f32.mrf.mxu0
      %v866 = vadd.f32 %v274, %v865
      %v867 = vpop.f32.mrf.mxu0
      %v868 = vadd.f32 %v274, %v867
      %869 = vmatmul.bf16.gmra.mxu0 %v636
      %v870 = vpop.f32.mrf.mxu0
      %v871 = vadd.f32 %v274, %v870
      %v872 = vpop.f32.mrf.mxu0
      %v873 = vadd.f32 %v274, %v872
      %874 = vmatmul.bf16.gmra.mxu0 %v639
      %v875 = vpop.f32.mrf.mxu0
      %v876 = vadd.f32 %v274, %v875
      %v877 = vpop.f32.mrf.mxu0
      %v878 = vadd.f32 %v274, %v877
      %879 = vmatmul.bf16.gmra.mxu0 %v642
      %v880 = vpop.f32.mrf.mxu0
      %v881 = vadd.f32 %v274, %v880
      %v882 = vpop.f32.mrf.mxu0
      %v883 = vadd.f32 %v274, %v882
      %884 = vmatmul.bf16.gmra.mxu0 %v645
      %v885 = vpop.f32.mrf.mxu0
      %v886 = vadd.f32 %v274, %v885
      %v887 = vpop.f32.mrf.mxu0
      %v888 = vadd.f32 %v274, %v887
      %889 = vmatmul.bf16.gmra.mxu0 %v648
      %v890 = vpop.f32.mrf.mxu0
      %v891 = vadd.f32 %v274, %v890
      %v892 = vpop.f32.mrf.mxu0
      %v893 = vadd.f32 %v274, %v892
      %894 = vmatmul.bf16.gmra.mxu0 %v651
      %v895 = vpop.f32.mrf.mxu0
      %v896 = vadd.f32 %v274, %v895
      %v897 = vpop.f32.mrf.mxu0
      %v898 = vadd.f32 %v274, %v897
      %899 = vmatmul.bf16.gmra.mxu0 %v654
      %v900 = vpop.f32.mrf.mxu0
      %v901 = vadd.f32 %v274, %v900
      %v902 = vpop.f32.mrf.mxu0
      %v903 = vadd.f32 %v274, %v902
      %904 = vmatmul.bf16.gmra.mxu0 %v657
      %v905 = vpop.f32.mrf.mxu0
      %v906 = vadd.f32 %v274, %v905
      %v907 = vpop.f32.mrf.mxu0
      %v908 = vadd.f32 %v274, %v907
      %909 = vmatmul.bf16.gmra.mxu0 %v660
      %v910 = vpop.f32.mrf.mxu0
      %v911 = vadd.f32 %v274, %v910
      %v912 = vpop.f32.mrf.mxu0
      %v913 = vadd.f32 %v274, %v912
      %914 = vmatmul.bf16.gmra.mxu0 %v663
      %v915 = vpop.f32.mrf.mxu0
      %v916 = vadd.f32 %v274, %v915
      %v917 = vpop.f32.mrf.mxu0
      %v918 = vadd.f32 %v274, %v917
      %919 = vmatmul.bf16.gmra.mxu0 %v666
      %v920 = vpop.f32.mrf.mxu0
      %v921 = vadd.f32 %v274, %v920
      %v922 = vpop.f32.mrf.mxu0
      %v923 = vadd.f32 %v274, %v922
      %924 = vmatmul.bf16.gmra.mxu0 %v669
      %v925 = vpop.f32.mrf.mxu0
      %v926 = vadd.f32 %v274, %v925
      %v927 = vpop.f32.mrf.mxu0
      %v928 = vadd.f32 %v274, %v927
      %929 = vmatmul.bf16.gmra.mxu0 %v672
      %v930 = vpop.f32.mrf.mxu0
      %v931 = vadd.f32 %v274, %v930
      %v932 = vpop.f32.mrf.mxu0
      %v933 = vadd.f32 %v274, %v932
      %934 = vdwg.mxu0
      %v935 = vmax.f32 %v691, 0.0
      %v936 = vmax.f32 %v693, 0.0
      %v937 = vmax.f32 %v696, 0.0
      %v938 = vmax.f32 %v698, 0.0
      %v939 = vmax.f32 %v701, 0.0
      %v940 = vmax.f32 %v703, 0.0
      %v941 = vmax.f32 %v706, 0.0
      %v942 = vmax.f32 %v708, 0.0
      %v943 = vmax.f32 %v711, 0.0
      %v944 = vmax.f32 %v713, 0.0
      %v945 = vmax.f32 %v716, 0.0
      %v946 = vmax.f32 %v718, 0.0
      %v947 = vmax.f32 %v721, 0.0
      %v948 = vmax.f32 %v723, 0.0
      %v949 = vmax.f32 %v726, 0.0
      %v950 = vmax.f32 %v728, 0.0
      %v951 = vmax.f32 %v731, 0.0
      %v952 = vmax.f32 %v733, 0.0
      %v953 = vmax.f32 %v736, 0.0
      %v954 = vmax.f32 %v738, 0.0
      %v955 = vmax.f32 %v741, 0.0
      %v956 = vmax.f32 %v743, 0.0
      %v957 = vmax.f32 %v746, 0.0
      %v958 = vmax.f32 %v748, 0.0
      %v959 = vmax.f32 %v751, 0.0
      %v960 = vmax.f32 %v753, 0.0
      %v961 = vmax.f32 %v756, 0.0
      %v962 = vmax.f32 %v758, 0.0
      %v963 = vmax.f32 %v761, 0.0
      %v964 = vmax.f32 %v763, 0.0
      %v965 = vmax.f32 %v766, 0.0
      %v966 = vmax.f32 %v768, 0.0
      %v967 = vmax.f32 %v771, 0.0
      %v968 = vmax.f32 %v773, 0.0
      %v969 = vmax.f32 %v776, 0.0
      %v970 = vmax.f32 %v778, 0.0
      %v971 = vmax.f32 %v781, 0.0
      %v972 = vmax.f32 %v783, 0.0
      %v973 = vmax.f32 %v786, 0.0
      %v974 = vmax.f32 %v788, 0.0
      %v975 = vmax.f32 %v791, 0.0
      %v976 = vmax.f32 %v793, 0.0
      %v977 = vmax.f32 %v796, 0.0
      %v978 = vmax.f32 %v798, 0.0
      %v979 = vmax.f32 %v801, 0.0
      %v980 = vmax.f32 %v803, 0.0
      %v981 = vmax.f32 %v806, 0.0
      %v982 = vmax.f32 %v808, 0.0
      %v983 = vmax.f32 %v811, 0.0
      %v984 = vmax.f32 %v813, 0.0
      %v985 = vmax.f32 %v816, 0.0
      %v986 = vmax.f32 %v818, 0.0
      %v987 = vmax.f32 %v821, 0.0
      %v988 = vmax.f32 %v823, 0.0
      %v989 = vmax.f32 %v826, 0.0
      %v990 = vmax.f32 %v828, 0.0
      %v991 = vmax.f32 %v831, 0.0
      %v992 = vmax.f32 %v833, 0.0
      %v993 = vmax.f32 %v836, 0.0
      %v994 = vmax.f32 %v838, 0.0
      %v995 = vmax.f32 %v841, 0.0
      %v996 = vmax.f32 %v843, 0.0
      %v997 = vmax.f32 %v846, 0.0
      %v998 = vmax.f32 %v848, 0.0
      %v999 = vmax.f32 %v851, 0.0
      %v1000 = vmax.f32 %v853, 0.0
      %v1001 = vmax.f32 %v856, 0.0
      %v1002 = vmax.f32 %v858, 0.0
      %v1003 = vmax.f32 %v861, 0.0
      %v1004 = vmax.f32 %v863, 0.0
      %v1005 = vmax.f32 %v866, 0.0
      %v1006 = vmax.f32 %v868, 0.0
      %v1007 = vmax.f32 %v871, 0.0
      %v1008 = vmax.f32 %v873, 0.0
      %v1009 = vmax.f32 %v876, 0.0
      %v1010 = vmax.f32 %v878, 0.0
      %v1011 = vmax.f32 %v881, 0.0
      %v1012 = vmax.f32 %v883, 0.0
      %v1013 = vmax.f32 %v886, 0.0
      %v1014 = vmax.f32 %v888, 0.0
      %v1015 = vmax.f32 %v891, 0.0
      %v1016 = vmax.f32 %v893, 0.0
      %v1017 = vmax.f32 %v896, 0.0
      %v1018 = vmax.f32 %v898, 0.0
      %v1019 = vmax.f32 %v901, 0.0
      %v1020 = vmax.f32 %v903, 0.0
      %v1021 = vmax.f32 %v906, 0.0
      %v1022 = vmax.f32 %v908, 0.0
      %v1023 = vmax.f32 %v911, 0.0
      %v1024 = vmax.f32 %v913, 0.0
      %v1025 = vmax.f32 %v916, 0.0
      %v1026 = vmax.f32 %v918, 0.0
      %v1027 = vmax.f32 %v921, 0.0
      %v1028 = vmax.f32 %v923, 0.0
      %v1029 = vmax.f32 %v926, 0.0
      %v1030 = vmax.f32 %v928, 0.0
      %v1031 = vmax.f32 %v931, 0.0
      %v1032 = vmax.f32 %v933, 0.0
      %vm1033 = vcmask 261120
      %1034 = vst.msk [vmem:[#allocation2] sm:$0xff] %vm1033, %v935
      %1035 = vst.msk [vmem:[#allocation2 + $0x8] sm:$0xff] %vm1033, %v936
      %1036 = vst.msk [vmem:[#allocation2 + $0x10] sm:$0xff] %vm1033, %v937
      %1037 = vst.msk [vmem:[#allocation2 + $0x18] sm:$0xff] %vm1033, %v938
      %1038 = vst.msk [vmem:[#allocation2 + $0x20] sm:$0xff] %vm1033, %v939
      %1039 = vst.msk [vmem:[#allocation2 + $0x28] sm:$0xff] %vm1033, %v940
      %1040 = vst.msk [vmem:[#allocation2 + $0x30] sm:$0xff] %vm1033, %v941
      %1041 = vst.msk [vmem:[#allocation2 + $0x38] sm:$0xff] %vm1033, %v942
      %1042 = vst.msk [vmem:[#allocation2 + $0x40] sm:$0xff] %vm1033, %v943
      %1043 = vst.msk [vmem:[#allocation2 + $0x48] sm:$0xff] %vm1033, %v944
      %1044 = vst.msk [vmem:[#allocation2 + $0x50] sm:$0xff] %vm1033, %v945
      %1045 = vst.msk [vmem:[#allocation2 + $0x58] sm:$0xff] %vm1033, %v946
      %1046 = vst.msk [vmem:[#allocation2 + $0x60] sm:$0xff] %vm1033, %v947
      %1047 = vst.msk [vmem:[#allocation2 + $0x68] sm:$0xff] %vm1033, %v948
      %1048 = vst.msk [vmem:[#allocation2 + $0x70] sm:$0xff] %vm1033, %v949
      %1049 = vst.msk [vmem:[#allocation2 + $0x78] sm:$0xff] %vm1033, %v950
      %1050 = vst.msk [vmem:[#allocation2 + $0x80] sm:$0xff] %vm1033, %v951
      %1051 = vst.msk [vmem:[#allocation2 + $0x88] sm:$0xff] %vm1033, %v952
      %1052 = vst.msk [vmem:[#allocation2 + $0x90] sm:$0xff] %vm1033, %v953
      %1053 = vst.msk [vmem:[#allocation2 + $0x98] sm:$0xff] %vm1033, %v954
      %1054 = vst.msk [vmem:[#allocation2 + $0xa0] sm:$0xff] %vm1033, %v955
      %1055 = vst.msk [vmem:[#allocation2 + $0xa8] sm:$0xff] %vm1033, %v956
      %1056 = vst.msk [vmem:[#allocation2 + $0xb0] sm:$0xff] %vm1033, %v957
      %1057 = vst.msk [vmem:[#allocation2 + $0xb8] sm:$0xff] %vm1033, %v958
      %1058 = vst.msk [vmem:[#allocation2 + $0xc0] sm:$0xff] %vm1033, %v959
      %1059 = vst.msk [vmem:[#allocation2 + $0xc8] sm:$0xff] %vm1033, %v960
      %1060 = vst.msk [vmem:[#allocation2 + $0xd0] sm:$0xff] %vm1033, %v961
      %1061 = vst.msk [vmem:[#allocation2 + $0xd8] sm:$0xff] %vm1033, %v962
      %1062 = vst.msk [vmem:[#allocation2 + $0xe0] sm:$0xff] %vm1033, %v963
      %1063 = vst.msk [vmem:[#allocation2 + $0xe8] sm:$0xff] %vm1033, %v964
      %1064 = vst.msk [vmem:[#allocation2 + $0xf0] sm:$0xff] %vm1033, %v965
      %1065 = vst.msk [vmem:[#allocation2 + $0xf8] sm:$0xff] %vm1033, %v966
      %1066 = vst.msk [vmem:[#allocation2 + $0x100] sm:$0xff] %vm1033, %v967
      %1067 = vst.msk [vmem:[#allocation2 + $0x108] sm:$0xff] %vm1033, %v968
      %1068 = vst.msk [vmem:[#allocation2 + $0x110] sm:$0xff] %vm1033, %v969
      %1069 = vst.msk [vmem:[#allocation2 + $0x118] sm:$0xff] %vm1033, %v970
      %1070 = vst.msk [vmem:[#allocation2 + $0x120] sm:$0xff] %vm1033, %v971
      %1071 = vst.msk [vmem:[#allocation2 + $0x128] sm:$0xff] %vm1033, %v972
      %1072 = vst.msk [vmem:[#allocation2 + $0x130] sm:$0xff] %vm1033, %v973
      %1073 = vst.msk [vmem:[#allocation2 + $0x138] sm:$0xff] %vm1033, %v974
      %1074 = vst.msk [vmem:[#allocation2 + $0x140] sm:$0xff] %vm1033, %v975
      %1075 = vst.msk [vmem:[#allocation2 + $0x148] sm:$0xff] %vm1033, %v976
      %1076 = vst.msk [vmem:[#allocation2 + $0x150] sm:$0xff] %vm1033, %v977
      %1077 = vst.msk [vmem:[#allocation2 + $0x158] sm:$0xff] %vm1033, %v978
      %1078 = vst.msk [vmem:[#allocation2 + $0x160] sm:$0xff] %vm1033, %v979
      %1079 = vst.msk [vmem:[#allocation2 + $0x168] sm:$0xff] %vm1033, %v980
      %1080 = vst.msk [vmem:[#allocation2 + $0x170] sm:$0xff] %vm1033, %v981
      %1081 = vst.msk [vmem:[#allocation2 + $0x178] sm:$0xff] %vm1033, %v982
      %1082 = vst.msk [vmem:[#allocation2 + $0x180] sm:$0xff] %vm1033, %v983
      %1083 = vst.msk [vmem:[#allocation2 + $0x188] sm:$0xff] %vm1033, %v984
      %1084 = vst.msk [vmem:[#allocation2 + $0x190] sm:$0xff] %vm1033, %v985
      %1085 = vst.msk [vmem:[#allocation2 + $0x198] sm:$0xff] %vm1033, %v986
      %1086 = vst.msk [vmem:[#allocation2 + $0x1a0] sm:$0xff] %vm1033, %v987
      %1087 = vst.msk [vmem:[#allocation2 + $0x1a8] sm:$0xff] %vm1033, %v988
      %1088 = vst.msk [vmem:[#allocation2 + $0x1b0] sm:$0xff] %vm1033, %v989
      %1089 = vst.msk [vmem:[#allocation2 + $0x1b8] sm:$0xff] %vm1033, %v990
      %1090 = vst.msk [vmem:[#allocation2 + $0x1c0] sm:$0xff] %vm1033, %v991
      %1091 = vst.msk [vmem:[#allocation2 + $0x1c8] sm:$0xff] %vm1033, %v992
      %1092 = vst.msk [vmem:[#allocation2 + $0x1d0] sm:$0xff] %vm1033, %v993
      %1093 = vst.msk [vmem:[#allocation2 + $0x1d8] sm:$0xff] %vm1033, %v994
      %1094 = vst.msk [vmem:[#allocation2 + $0x1e0] sm:$0xff] %vm1033, %v995
      %1095 = vst.msk [vmem:[#allocation2 + $0x1e8] sm:$0xff] %vm1033, %v996
      %1096 = vst.msk [vmem:[#allocation2 + $0x1f0] sm:$0xff] %vm1033, %v997
      %1097 = vst.msk [vmem:[#allocation2 + $0x1f8] sm:$0xff] %vm1033, %v998
      %1098 = vst.msk [vmem:[#allocation2 + $0x200] sm:$0xff] %vm1033, %v999
      %1099 = vst.msk [vmem:[#allocation2 + $0x208] sm:$0xff] %vm1033, %v1000
      %1100 = vst.msk [vmem:[#allocation2 + $0x210] sm:$0xff] %vm1033, %v1001
      %1101 = vst.msk [vmem:[#allocation2 + $0x218] sm:$0xff] %vm1033, %v1002
      %1102 = vst.msk [vmem:[#allocation2 + $0x220] sm:$0xff] %vm1033, %v1003
      %1103 = vst.msk [vmem:[#allocation2 + $0x228] sm:$0xff] %vm1033, %v1004
      %1104 = vst.msk [vmem:[#allocation2 + $0x230] sm:$0xff] %vm1033, %v1005
      %1105 = vst.msk [vmem:[#allocation2 + $0x238] sm:$0xff] %vm1033, %v1006
      %1106 = vst.msk [vmem:[#allocation2 + $0x240] sm:$0xff] %vm1033, %v1007
      %1107 = vst.msk [vmem:[#allocation2 + $0x248] sm:$0xff] %vm1033, %v1008
      %1108 = vst.msk [vmem:[#allocation2 + $0x250] sm:$0xff] %vm1033, %v1009
      %1109 = vst.msk [vmem:[#allocation2 + $0x258] sm:$0xff] %vm1033, %v1010
      %1110 = vst.msk [vmem:[#allocation2 + $0x260] sm:$0xff] %vm1033, %v1011
      %1111 = vst.msk [vmem:[#allocation2 + $0x268] sm:$0xff] %vm1033, %v1012
      %1112 = vst.msk [vmem:[#allocation2 + $0x270] sm:$0xff] %vm1033, %v1013
      %1113 = vst.msk [vmem:[#allocation2 + $0x278] sm:$0xff] %vm1033, %v1014
      %1114 = vst.msk [vmem:[#allocation2 + $0x280] sm:$0xff] %vm1033, %v1015
      %1115 = vst.msk [vmem:[#allocation2 + $0x288] sm:$0xff] %vm1033, %v1016
      %1116 = vst.msk [vmem:[#allocation2 + $0x290] sm:$0xff] %vm1033, %v1017
      %1117 = vst.msk [vmem:[#allocation2 + $0x298] sm:$0xff] %vm1033, %v1018
      %1118 = vst.msk [vmem:[#allocation2 + $0x2a0] sm:$0xff] %vm1033, %v1019
      %1119 = vst.msk [vmem:[#allocation2 + $0x2a8] sm:$0xff] %vm1033, %v1020
      %1120 = vst.msk [vmem:[#allocation2 + $0x2b0] sm:$0xff] %vm1033, %v1021
      %1121 = vst.msk [vmem:[#allocation2 + $0x2b8] sm:$0xff] %vm1033, %v1022
      %1122 = vst.msk [vmem:[#allocation2 + $0x2c0] sm:$0xff] %vm1033, %v1023
      %1123 = vst.msk [vmem:[#allocation2 + $0x2c8] sm:$0xff] %vm1033, %v1024
      %1124 = vst.msk [vmem:[#allocation2 + $0x2d0] sm:$0xff] %vm1033, %v1025
      %1125 = vst.msk [vmem:[#allocation2 + $0x2d8] sm:$0xff] %vm1033, %v1026
      %1126 = vst.msk [vmem:[#allocation2 + $0x2e0] sm:$0xff] %vm1033, %v1027
      %1127 = vst.msk [vmem:[#allocation2 + $0x2e8] sm:$0xff] %vm1033, %v1028
      %1128 = vst.msk [vmem:[#allocation2 + $0x2f0] sm:$0xff] %vm1033, %v1029
      %1129 = vst.msk [vmem:[#allocation2 + $0x2f8] sm:$0xff] %vm1033, %v1030
      %1130 = vst.msk [vmem:[#allocation2 + $0x300] sm:$0xff] %vm1033, %v1031
      %1131 = vst.msk [vmem:[#allocation2 + $0x308] sm:$0xff] %vm1033, %v1032
      %v1132 = vld [vmem:[#allocation2] sm:$0xff]
      %v1133 = vld [vmem:[#allocation2 + $0x8] sm:$0xff]
      %v1134 = vld [vmem:[#allocation2 + $0x10] sm:$0xff]
      %v1135 = vld [vmem:[#allocation2 + $0x18] sm:$0xf]
      %v1136 = vld [vmem:[#allocation2 + $0x1c] sm:$0xff]
      %v1137 = vld [vmem:[#allocation2 + $0x24] sm:$0xff]
      %v1138 = vld [vmem:[#allocation2 + $0x2c] sm:$0xff]
      %v1139 = vld [vmem:[#allocation2 + $0x34] sm:$0xf]
      %v1140 = vmax.f32 %v1132, %v1136
      %v1141 = vmax.f32 %v1133, %v1137
      %v1142 = vmax.f32 %v1134, %v1138
      %v1143 = vmax.f32 %v1135, %v1139
      %1144 = vst.msk [vmem:[#allocation3] sm:$0xff] %vm1033, %v1140
      %1145 = vst.msk [vmem:[#allocation3 + $0x8] sm:$0xff] %vm1033, %v1141
      %1146 = vst.msk [vmem:[#allocation3 + $0x10] sm:$0xff] %vm1033, %v1142
      %vm1147 = vcmask 257024
      %1148 = vst.msk [vmem:[#allocation3 + $0x18] sm:$0xf] %vm1147, %v1143
      %v1149 = vld [vmem:[#allocation2 + $0x38] sm:$0xff]
      %v1150 = vld [vmem:[#allocation2 + $0x40] sm:$0xff]
      %v1151 = vld [vmem:[#allocation2 + $0x48] sm:$0xff]
      %v1152 = vld [vmem:[#allocation2 + $0x50] sm:$0xf]
      %v1153 = vld [vmem:[#allocation2 + $0x54] sm:$0xff]
      %v1154 = vld [vmem:[#allocation2 + $0x5c] sm:$0xff]
      %v1155 = vld [vmem:[#allocation2 + $0x64] sm:$0xff]
      %v1156 = vld [vmem:[#allocation2 + $0x6c] sm:$0xf]
      %v1157 = vmax.f32 %v1149, %v1153
      %v1158 = vmax.f32 %v1150, %v1154
      %v1159 = vmax.f32 %v1151, %v1155
      %v1160 = vmax.f32 %v1152, %v1156
      %1161 = vst.msk [vmem:[#allocation3 + $0x1c] sm:$0xff] %vm1033, %v1157
      %1162 = vst.msk [vmem:[#allocation3 + $0x24] sm:$0xff] %vm1033, %v1158
      %1163 = vst.msk [vmem:[#allocation3 + $0x2c] sm:$0xff] %vm1033, %v1159
      %1164 = vst.msk [vmem:[#allocation3 + $0x34] sm:$0xf] %vm1147, %v1160
      %v1165 = vld [vmem:[#allocation2 + $0x70] sm:$0xff]
      %v1166 = vld [vmem:[#allocation2 + $0x78] sm:$0xff]
      %v1167 = vld [vmem:[#allocation2 + $0x80] sm:$0xff]
      %v1168 = vld [vmem:[#allocation2 + $0x88] sm:$0xf]
      %v1169 = vld [vmem:[#allocation2 + $0x8c] sm:$0xff]
      %v1170 = vld [vmem:[#allocation2 + $0x94] sm:$0xff]
      %v1171 = vld [vmem:[#allocation2 + $0x9c] sm:$0xff]
      %v1172 = vld [vmem:[#allocation2 + $0xa4] sm:$0xf]
      %v1173 = vmax.f32 %v1165, %v1169
      %v1174 = vmax.f32 %v1166, %v1170
      %v1175 = vmax.f32 %v1167, %v1171
      %v1176 = vmax.f32 %v1168, %v1172
      %1177 = vst.msk [vmem:[#allocation3 + $0x38] sm:$0xff] %vm1033, %v1173
      %1178 = vst.msk [vmem:[#allocation3 + $0x40] sm:$0xff] %vm1033, %v1174
      %1179 = vst.msk [vmem:[#allocation3 + $0x48] sm:$0xff] %vm1033, %v1175
      %1180 = vst.msk [vmem:[#allocation3 + $0x50] sm:$0xf] %vm1147, %v1176
      %v1181 = vld [vmem:[#allocation2 + $0xa8] sm:$0xff]
      %v1182 = vld [vmem:[#allocation2 + $0xb0] sm:$0xff]
      %v1183 = vld [vmem:[#allocation2 + $0xb8] sm:$0xff]
      %v1184 = vld [vmem:[#allocation2 + $0xc0] sm:$0xf]
      %v1185 = vld [vmem:[#allocation2 + $0xc4] sm:$0xff]
      %v1186 = vld [vmem:[#allocation2 + $0xcc] sm:$0xff]
      %v1187 = vld [vmem:[#allocation2 + $0xd4] sm:$0xff]
      %v1188 = vld [vmem:[#allocation2 + $0xdc] sm:$0xf]
      %v1189 = vmax.f32 %v1181, %v1185
      %v1190 = vmax.f32 %v1182, %v1186
      %v1191 = vmax.f32 %v1183, %v1187
      %v1192 = vmax.f32 %v1184, %v1188
      %1193 = vst.msk [vmem:[#allocation3 + $0x54] sm:$0xff] %vm1033, %v1189
      %1194 = vst.msk [vmem:[#allocation3 + $0x5c] sm:$0xff] %vm1033, %v1190
      %1195 = vst.msk [vmem:[#allocation3 + $0x64] sm:$0xff] %vm1033, %v1191
      %1196 = vst.msk [vmem:[#allocation3 + $0x6c] sm:$0xf] %vm1147, %v1192
      %v1197 = vld [vmem:[#allocation2 + $0xe0] sm:$0xff]
      %v1198 = vld [vmem:[#allocation2 + $0xe8] sm:$0xff]
      %v1199 = vld [vmem:[#allocation2 + $0xf0] sm:$0xff]
      %v1200 = vld [vmem:[#allocation2 + $0xf8] sm:$0xf]
      %v1201 = vld [vmem:[#allocation2 + $0xfc] sm:$0xff]
      %v1202 = vld [vmem:[#allocation2 + $0x104] sm:$0xff]
      %v1203 = vld [vmem:[#allocation2 + $0x10c] sm:$0xff]
      %v1204 = vld [vmem:[#allocation2 + $0x114] sm:$0xf]
      %v1205 = vmax.f32 %v1197, %v1201
      %v1206 = vmax.f32 %v1198, %v1202
      %v1207 = vmax.f32 %v1199, %v1203
      %v1208 = vmax.f32 %v1200, %v1204
      %1209 = vst.msk [vmem:[#allocation3 + $0x70] sm:$0xff] %vm1033, %v1205
      %1210 = vst.msk [vmem:[#allocation3 + $0x78] sm:$0xff] %vm1033, %v1206
      %1211 = vst.msk [vmem:[#allocation3 + $0x80] sm:$0xff] %vm1033, %v1207
      %1212 = vst.msk [vmem:[#allocation3 + $0x88] sm:$0xf] %vm1147, %v1208
      %v1213 = vld [vmem:[#allocation2 + $0x118] sm:$0xff]
      %v1214 = vld [vmem:[#allocation2 + $0x120] sm:$0xff]
      %v1215 = vld [vmem:[#allocation2 + $0x128] sm:$0xff]
      %v1216 = vld [vmem:[#allocation2 + $0x130] sm:$0xf]
      %v1217 = vld [vmem:[#allocation2 + $0x134] sm:$0xff]
      %v1218 = vld [vmem:[#allocation2 + $0x13c] sm:$0xff]
      %v1219 = vld [vmem:[#allocation2 + $0x144] sm:$0xff]
      %v1220 = vld [vmem:[#allocation2 + $0x14c] sm:$0xf]
      %v1221 = vmax.f32 %v1213, %v1217
      %v1222 = vmax.f32 %v1214, %v1218
      %v1223 = vmax.f32 %v1215, %v1219
      %v1224 = vmax.f32 %v1216, %v1220
      %1225 = vst.msk [vmem:[#allocation3 + $0x8c] sm:$0xff] %vm1033, %v1221
      %1226 = vst.msk [vmem:[#allocation3 + $0x94] sm:$0xff] %vm1033, %v1222
      %1227 = vst.msk [vmem:[#allocation3 + $0x9c] sm:$0xff] %vm1033, %v1223
      %1228 = vst.msk [vmem:[#allocation3 + $0xa4] sm:$0xf] %vm1147, %v1224
      %v1229 = vld [vmem:[#allocation2 + $0x150] sm:$0xff]
      %v1230 = vld [vmem:[#allocation2 + $0x158] sm:$0xff]
      %v1231 = vld [vmem:[#allocation2 + $0x160] sm:$0xff]
      %v1232 = vld [vmem:[#allocation2 + $0x168] sm:$0xf]
      %v1233 = vld [vmem:[#allocation2 + $0x16c] sm:$0xff]
      %v1234 = vld [vmem:[#allocation2 + $0x174] sm:$0xff]
      %v1235 = vld [vmem:[#allocation2 + $0x17c] sm:$0xff]
      %v1236 = vld [vmem:[#allocation2 + $0x184] sm:$0xf]
      %v1237 = vmax.f32 %v1229, %v1233
      %v1238 = vmax.f32 %v1230, %v1234
      %v1239 = vmax.f32 %v1231, %v1235
      %v1240 = vmax.f32 %v1232, %v1236
      %1241 = vst.msk [vmem:[#allocation3 + $0xa8] sm:$0xff] %vm1033, %v1237
      %1242 = vst.msk [vmem:[#allocation3 + $0xb0] sm:$0xff] %vm1033, %v1238
      %1243 = vst.msk [vmem:[#allocation3 + $0xb8] sm:$0xff] %vm1033, %v1239
      %1244 = vst.msk [vmem:[#allocation3 + $0xc0] sm:$0xf] %vm1147, %v1240
      %v1245 = vld [vmem:[#allocation2 + $0x188] sm:$0xff]
      %v1246 = vld [vmem:[#allocation2 + $0x190] sm:$0xff]
      %v1247 = vld [vmem:[#allocation2 + $0x198] sm:$0xff]
      %v1248 = vld [vmem:[#allocation2 + $0x1a0] sm:$0xf]
      %v1249 = vld [vmem:[#allocation2 + $0x1a4] sm:$0xff]
      %v1250 = vld [vmem:[#allocation2 + $0x1ac] sm:$0xff]
      %v1251 = vld [vmem:[#allocation2 + $0x1b4] sm:$0xff]
      %v1252 = vld [vmem:[#allocation2 + $0x1bc] sm:$0xf]
      %v1253 = vmax.f32 %v1245, %v1249
      %v1254 = vmax.f32 %v1246, %v1250
      %v1255 = vmax.f32 %v1247, %v1251
      %v1256 = vmax.f32 %v1248, %v1252
      %1257 = vst.msk [vmem:[#allocation3 + $0xc4] sm:$0xff] %vm1033, %v1253
      %1258 = vst.msk [vmem:[#allocation3 + $0xcc] sm:$0xff] %vm1033, %v1254
      %1259 = vst.msk [vmem:[#allocation3 + $0xd4] sm:$0xff] %vm1033, %v1255
      %1260 = vst.msk [vmem:[#allocation3 + $0xdc] sm:$0xf] %vm1147, %v1256
      %v1261 = vld [vmem:[#allocation2 + $0x1c0] sm:$0xff]
      %v1262 = vld [vmem:[#allocation2 + $0x1c8] sm:$0xff]
      %v1263 = vld [vmem:[#allocation2 + $0x1d0] sm:$0xff]
      %v1264 = vld [vmem:[#allocation2 + $0x1d8] sm:$0xf]
      %v1265 = vld [vmem:[#allocation2 + $0x1dc] sm:$0xff]
      %v1266 = vld [vmem:[#allocation2 + $0x1e4] sm:$0xff]
      %v1267 = vld [vmem:[#allocation2 + $0x1ec] sm:$0xff]
      %v1268 = vld [vmem:[#allocation2 + $0x1f4] sm:$0xf]
      %v1269 = vmax.f32 %v1261, %v1265
      %v1270 = vmax.f32 %v1262, %v1266
      %v1271 = vmax.f32 %v1263, %v1267
      %v1272 = vmax.f32 %v1264, %v1268
      %1273 = vst.msk [vmem:[#allocation3 + $0xe0] sm:$0xff] %vm1033, %v1269
      %1274 = vst.msk [vmem:[#allocation3 + $0xe8] sm:$0xff] %vm1033, %v1270
      %1275 = vst.msk [vmem:[#allocation3 + $0xf0] sm:$0xff] %vm1033, %v1271
      %1276 = vst.msk [vmem:[#allocation3 + $0xf8] sm:$0xf] %vm1147, %v1272
      %v1277 = vld [vmem:[#allocation2 + $0x1f8] sm:$0xff]
      %v1278 = vld [vmem:[#allocation2 + $0x200] sm:$0xff]
      %v1279 = vld [vmem:[#allocation2 + $0x208] sm:$0xff]
      %v1280 = vld [vmem:[#allocation2 + $0x210] sm:$0xf]
      %v1281 = vld [vmem:[#allocation2 + $0x214] sm:$0xff]
      %v1282 = vld [vmem:[#allocation2 + $0x21c] sm:$0xff]
      %v1283 = vld [vmem:[#allocation2 + $0x224] sm:$0xff]
      %v1284 = vld [vmem:[#allocation2 + $0x22c] sm:$0xf]
      %v1285 = vmax.f32 %v1277, %v1281
      %v1286 = vmax.f32 %v1278, %v1282
      %v1287 = vmax.f32 %v1279, %v1283
      %v1288 = vmax.f32 %v1280, %v1284
      %1289 = vst.msk [vmem:[#allocation3 + $0xfc] sm:$0xff] %vm1033, %v1285
      %1290 = vst.msk [vmem:[#allocation3 + $0x104] sm:$0xff] %vm1033, %v1286
      %1291 = vst.msk [vmem:[#allocation3 + $0x10c] sm:$0xff] %vm1033, %v1287
      %1292 = vst.msk [vmem:[#allocation3 + $0x114] sm:$0xf] %vm1147, %v1288
      %v1293 = vld [vmem:[#allocation2 + $0x230] sm:$0xff]
      %v1294 = vld [vmem:[#allocation2 + $0x238] sm:$0xff]
      %v1295 = vld [vmem:[#allocation2 + $0x240] sm:$0xff]
      %v1296 = vld [vmem:[#allocation2 + $0x248] sm:$0xf]
      %v1297 = vld [vmem:[#allocation2 + $0x24c] sm:$0xff]
      %v1298 = vld [vmem:[#allocation2 + $0x254] sm:$0xff]
      %v1299 = vld [vmem:[#allocation2 + $0x25c] sm:$0xff]
      %v1300 = vld [vmem:[#allocation2 + $0x264] sm:$0xf]
      %v1301 = vmax.f32 %v1293, %v1297
      %v1302 = vmax.f32 %v1294, %v1298
      %v1303 = vmax.f32 %v1295, %v1299
      %v1304 = vmax.f32 %v1296, %v1300
      %1305 = vst.msk [vmem:[#allocation3 + $0x118] sm:$0xff] %vm1033, %v1301
      %1306 = vst.msk [vmem:[#allocation3 + $0x120] sm:$0xff] %vm1033, %v1302
      %1307 = vst.msk [vmem:[#allocation3 + $0x128] sm:$0xff] %vm1033, %v1303
      %1308 = vst.msk [vmem:[#allocation3 + $0x130] sm:$0xf] %vm1147, %v1304
      %v1309 = vld [vmem:[#allocation2 + $0x268] sm:$0xff]
      %v1310 = vld [vmem:[#allocation2 + $0x270] sm:$0xff]
      %v1311 = vld [vmem:[#allocation2 + $0x278] sm:$0xff]
      %v1312 = vld [vmem:[#allocation2 + $0x280] sm:$0xf]
      %v1313 = vld [vmem:[#allocation2 + $0x284] sm:$0xff]
      %v1314 = vld [vmem:[#allocation2 + $0x28c] sm:$0xff]
      %v1315 = vld [vmem:[#allocation2 + $0x294] sm:$0xff]
      %v1316 = vld [vmem:[#allocation2 + $0x29c] sm:$0xf]
      %v1317 = vmax.f32 %v1309, %v1313
      %v1318 = vmax.f32 %v1310, %v1314
      %v1319 = vmax.f32 %v1311, %v1315
      %v1320 = vmax.f32 %v1312, %v1316
      %1321 = vst.msk [vmem:[#allocation3 + $0x134] sm:$0xff] %vm1033, %v1317
      %1322 = vst.msk [vmem:[#allocation3 + $0x13c] sm:$0xff] %vm1033, %v1318
      %1323 = vst.msk [vmem:[#allocation3 + $0x144] sm:$0xff] %vm1033, %v1319
      %1324 = vst.msk [vmem:[#allocation3 + $0x14c] sm:$0xf] %vm1147, %v1320
      %v1325 = vld [vmem:[#allocation2 + $0x2a0] sm:$0xff]
      %v1326 = vld [vmem:[#allocation2 + $0x2a8] sm:$0xff]
      %v1327 = vld [vmem:[#allocation2 + $0x2b0] sm:$0xff]
      %v1328 = vld [vmem:[#allocation2 + $0x2b8] sm:$0xf]
      %v1329 = vld [vmem:[#allocation2 + $0x2bc] sm:$0xff]
      %v1330 = vld [vmem:[#allocation2 + $0x2c4] sm:$0xff]
      %v1331 = vld [vmem:[#allocation2 + $0x2cc] sm:$0xff]
      %v1332 = vld [vmem:[#allocation2 + $0x2d4] sm:$0xf]
      %v1333 = vmax.f32 %v1325, %v1329
      %v1334 = vmax.f32 %v1326, %v1330
      %v1335 = vmax.f32 %v1327, %v1331
      %v1336 = vmax.f32 %v1328, %v1332
      %1337 = vst.msk [vmem:[#allocation3 + $0x150] sm:$0xff] %vm1033, %v1333
      %1338 = vst.msk [vmem:[#allocation3 + $0x158] sm:$0xff] %vm1033, %v1334
      %1339 = vst.msk [vmem:[#allocation3 + $0x160] sm:$0xff] %vm1033, %v1335
      %1340 = vst.msk [vmem:[#allocation3 + $0x168] sm:$0xf] %vm1147, %v1336
      %v1341 = vld [vmem:[#allocation2 + $0x2d8] sm:$0xff]
      %v1342 = vld [vmem:[#allocation2 + $0x2e0] sm:$0xff]
      %v1343 = vld [vmem:[#allocation2 + $0x2e8] sm:$0xff]
      %v1344 = vld [vmem:[#allocation2 + $0x2f0] sm:$0xf]
      %v1345 = vld [vmem:[#allocation2 + $0x2f4] sm:$0xff]
      %v1346 = vld [vmem:[#allocation2 + $0x2fc] sm:$0xff]
      %v1347 = vld [vmem:[#allocation2 + $0x304] sm:$0xff]
      %v1348 = vld [vmem:[#allocation2 + $0x30c] sm:$0xf]
      %v1349 = vmax.f32 %v1341, %v1345
      %v1350 = vmax.f32 %v1342, %v1346
      %v1351 = vmax.f32 %v1343, %v1347
      %v1352 = vmax.f32 %v1344, %v1348
      %1353 = vst.msk [vmem:[#allocation3 + $0x16c] sm:$0xff] %vm1033, %v1349
      %1354 = vst.msk [vmem:[#allocation3 + $0x174] sm:$0xff] %vm1033, %v1350
      %1355 = vst.msk [vmem:[#allocation3 + $0x17c] sm:$0xff] %vm1033, %v1351
      %1356 = vst.msk [vmem:[#allocation3 + $0x184] sm:$0xf] %vm1147, %v1352
      %v1357 = vld [vmem:[#allocation3] ss:$2 sm:$0xff]
      %s1358 = scalar_lea.vmem [#allocation3], 16
      %v1359 = vld [vmem:[%s1358] ss:$2 sm:$0xff]
      %s1360 = scalar_lea.vmem [#allocation3], 32
      %v1361 = vld [vmem:[%s1360] ss:$2 sm:$0xff]
      %s1362 = scalar_lea.vmem [#allocation3], 48
      %v1363 = vld [vmem:[%s1362] ss:$2 sm:$0xff]
      %s1364 = scalar_lea.vmem [#allocation3], 64
      %v1365 = vld [vmem:[%s1364] ss:$2 sm:$0xff]
      %s1366 = scalar_lea.vmem [#allocation3], 80
      %v1367 = vld [vmem:[%s1366] ss:$2 sm:$0xff]
      %s1368 = scalar_lea.vmem [#allocation3], 96
      %v1369 = vld [vmem:[%s1368] ss:$2 sm:$0xff]
      %s1370 = scalar_lea.vmem [#allocation3], 112
      %v1371 = vld [vmem:[%s1370] ss:$2 sm:$0xff]
      %s1372 = scalar_lea.vmem [#allocation3], 128
      %v1373 = vld [vmem:[%s1372] ss:$2 sm:$0xff]
      %s1374 = scalar_lea.vmem [#allocation3], 144
      %v1375 = vld [vmem:[%s1374] ss:$2 sm:$0xff]
      %s1376 = scalar_lea.vmem [#allocation3], 160
      %v1377 = vld [vmem:[%s1376] ss:$2 sm:$0xff]
      %s1378 = scalar_lea.vmem [#allocation3], 176
      %v1379 = vld [vmem:[%s1378] ss:$2 sm:$0xff]
      %s1380 = scalar_lea.vmem [#allocation3], 192
      %v1381 = vld [vmem:[%s1380] ss:$2 sm:$0xff]
      %s1382 = scalar_lea.vmem [#allocation3], 208
      %v1383 = vld [vmem:[%s1382] ss:$2 sm:$0xff]
      %s1384 = scalar_lea.vmem [#allocation3], 224
      %v1385 = vld [vmem:[%s1384] ss:$2 sm:$0xff]
      %s1386 = scalar_lea.vmem [#allocation3], 240
      %v1387 = vld [vmem:[%s1386] ss:$2 sm:$0xff]
      %s1388 = scalar_lea.vmem [#allocation3], 256
      %v1389 = vld [vmem:[%s1388] ss:$2 sm:$0xff]
      %s1390 = scalar_lea.vmem [#allocation3], 272
      %v1391 = vld [vmem:[%s1390] ss:$2 sm:$0xff]
      %s1392 = scalar_lea.vmem [#allocation3], 288
      %v1393 = vld [vmem:[%s1392] ss:$2 sm:$0xff]
      %s1394 = scalar_lea.vmem [#allocation3], 304
      %v1395 = vld [vmem:[%s1394] ss:$2 sm:$0xff]
      %s1396 = scalar_lea.vmem [#allocation3], 320
      %v1397 = vld [vmem:[%s1396] ss:$2 sm:$0xff]
      %s1398 = scalar_lea.vmem [#allocation3], 336
      %v1399 = vld [vmem:[%s1398] ss:$2 sm:$0xff]
      %s1400 = scalar_lea.vmem [#allocation3], 352
      %v1401 = vld [vmem:[%s1400] ss:$2 sm:$0xff]
      %s1402 = scalar_lea.vmem [#allocation3], 368
      %v1403 = vld [vmem:[%s1402] ss:$2 sm:$0xff]
      %s1404 = scalar_lea.vmem [#allocation3], 384
      %v1405 = vld [vmem:[%s1404] ss:$2 sm:$0xf]
      %s1406 = scalar_lea.vmem [#allocation3], 1
      %v1407 = vld [vmem:[%s1406] ss:$2 sm:$0xff]
      %s1408 = scalar_lea.vmem [#allocation3], 17
      %v1409 = vld [vmem:[%s1408] ss:$2 sm:$0xff]
      %s1410 = scalar_lea.vmem [#allocation3], 33
      %v1411 = vld [vmem:[%s1410] ss:$2 sm:$0xff]
      %s1412 = scalar_lea.vmem [#allocation3], 49
      %v1413 = vld [vmem:[%s1412] ss:$2 sm:$0xff]
      %s1414 = scalar_lea.vmem [#allocation3], 65
      %v1415 = vld [vmem:[%s1414] ss:$2 sm:$0xff]
      %s1416 = scalar_lea.vmem [#allocation3], 81
      %v1417 = vld [vmem:[%s1416] ss:$2 sm:$0xff]
      %s1418 = scalar_lea.vmem [#allocation3], 97
      %v1419 = vld [vmem:[%s1418] ss:$2 sm:$0xff]
      %s1420 = scalar_lea.vmem [#allocation3], 113
      %v1421 = vld [vmem:[%s1420] ss:$2 sm:$0xff]
      %s1422 = scalar_lea.vmem [#allocation3], 129
      %v1423 = vld [vmem:[%s1422] ss:$2 sm:$0xff]
      %s1424 = scalar_lea.vmem [#allocation3], 145
      %v1425 = vld [vmem:[%s1424] ss:$2 sm:$0xff]
      %s1426 = scalar_lea.vmem [#allocation3], 161
      %v1427 = vld [vmem:[%s1426] ss:$2 sm:$0xff]
      %s1428 = scalar_lea.vmem [#allocation3], 177
      %v1429 = vld [vmem:[%s1428] ss:$2 sm:$0xff]
      %s1430 = scalar_lea.vmem [#allocation3], 193
      %v1431 = vld [vmem:[%s1430] ss:$2 sm:$0xff]
      %s1432 = scalar_lea.vmem [#allocation3], 209
      %v1433 = vld [vmem:[%s1432] ss:$2 sm:$0xff]
      %s1434 = scalar_lea.vmem [#allocation3], 225
      %v1435 = vld [vmem:[%s1434] ss:$2 sm:$0xff]
      %s1436 = scalar_lea.vmem [#allocation3], 241
      %v1437 = vld [vmem:[%s1436] ss:$2 sm:$0xff]
      %s1438 = scalar_lea.vmem [#allocation3], 257
      %v1439 = vld [vmem:[%s1438] ss:$2 sm:$0xff]
      %s1440 = scalar_lea.vmem [#allocation3], 273
      %v1441 = vld [vmem:[%s1440] ss:$2 sm:$0xff]
      %s1442 = scalar_lea.vmem [#allocation3], 289
      %v1443 = vld [vmem:[%s1442] ss:$2 sm:$0xff]
      %s1444 = scalar_lea.vmem [#allocation3], 305
      %v1445 = vld [vmem:[%s1444] ss:$2 sm:$0xff]
      %s1446 = scalar_lea.vmem [#allocation3], 321
      %v1447 = vld [vmem:[%s1446] ss:$2 sm:$0xff]
      %s1448 = scalar_lea.vmem [#allocation3], 337
      %v1449 = vld [vmem:[%s1448] ss:$2 sm:$0xff]
      %s1450 = scalar_lea.vmem [#allocation3], 353
      %v1451 = vld [vmem:[%s1450] ss:$2 sm:$0xff]
      %s1452 = scalar_lea.vmem [#allocation3], 369
      %v1453 = vld [vmem:[%s1452] ss:$2 sm:$0xff]
      %s1454 = scalar_lea.vmem [#allocation3], 385
      %v1455 = vld [vmem:[%s1454] ss:$2 sm:$0xf]
      %v1456 = vmax.f32 %v1357, %v1407
      %v1457 = vmax.f32 %v1359, %v1409
      %v1458 = vmax.f32 %v1361, %v1411
      %v1459 = vmax.f32 %v1363, %v1413
      %v1460 = vmax.f32 %v1365, %v1415
      %v1461 = vmax.f32 %v1367, %v1417
      %v1462 = vmax.f32 %v1369, %v1419
      %v1463 = vmax.f32 %v1371, %v1421
      %v1464 = vmax.f32 %v1373, %v1423
      %v1465 = vmax.f32 %v1375, %v1425
      %v1466 = vmax.f32 %v1377, %v1427
      %v1467 = vmax.f32 %v1379, %v1429
      %v1468 = vmax.f32 %v1381, %v1431
      %v1469 = vmax.f32 %v1383, %v1433
      %v1470 = vmax.f32 %v1385, %v1435
      %v1471 = vmax.f32 %v1387, %v1437
      %v1472 = vmax.f32 %v1389, %v1439
      %v1473 = vmax.f32 %v1391, %v1441
      %v1474 = vmax.f32 %v1393, %v1443
      %v1475 = vmax.f32 %v1395, %v1445
      %v1476 = vmax.f32 %v1397, %v1447
      %v1477 = vmax.f32 %v1399, %v1449
      %v1478 = vmax.f32 %v1401, %v1451
      %v1479 = vmax.f32 %v1403, %v1453
      %v1480 = vmax.f32 %v1405, %v1455
      %1481 = vst.msk [vmem:[%s170] sm:$0xff] %vm1033, %v1456
      %1482 = vst.msk [vmem:[%s170 + $0x8] sm:$0xff] %vm1033, %v1457
      %1483 = vst.msk [vmem:[%s170 + $0x10] sm:$0xff] %vm1033, %v1458
      %1484 = vst.msk [vmem:[%s170 + $0x18] sm:$0xff] %vm1033, %v1459
      %1485 = vst.msk [vmem:[%s170 + $0x20] sm:$0xff] %vm1033, %v1460
      %1486 = vst.msk [vmem:[%s170 + $0x28] sm:$0xff] %vm1033, %v1461
      %1487 = vst.msk [vmem:[%s170 + $0x30] sm:$0xff] %vm1033, %v1462
      %1488 = vst.msk [vmem:[%s170 + $0x38] sm:$0xff] %vm1033, %v1463
      %1489 = vst.msk [vmem:[%s170 + $0x40] sm:$0xff] %vm1033, %v1464
      %1490 = vst.msk [vmem:[%s170 + $0x48] sm:$0xff] %vm1033, %v1465
      %1491 = vst.msk [vmem:[%s170 + $0x50] sm:$0xff] %vm1033, %v1466
      %1492 = vst.msk [vmem:[%s170 + $0x58] sm:$0xff] %vm1033, %v1467
      %1493 = vst.msk [vmem:[%s170 + $0x60] sm:$0xff] %vm1033, %v1468
      %1494 = vst.msk [vmem:[%s170 + $0x68] sm:$0xff] %vm1033, %v1469
      %1495 = vst.msk [vmem:[%s170 + $0x70] sm:$0xff] %vm1033, %v1470
      %1496 = vst.msk [vmem:[%s170 + $0x78] sm:$0xff] %vm1033, %v1471
      %1497 = vst.msk [vmem:[%s170 + $0x80] sm:$0xff] %vm1033, %v1472
      %1498 = vst.msk [vmem:[%s170 + $0x88] sm:$0xff] %vm1033, %v1473
      %1499 = vst.msk [vmem:[%s170 + $0x90] sm:$0xff] %vm1033, %v1474
      %1500 = vst.msk [vmem:[%s170 + $0x98] sm:$0xff] %vm1033, %v1475
      %1501 = vst.msk [vmem:[%s170 + $0xa0] sm:$0xff] %vm1033, %v1476
      %1502 = vst.msk [vmem:[%s170 + $0xa8] sm:$0xff] %vm1033, %v1477
      %1503 = vst.msk [vmem:[%s170 + $0xb0] sm:$0xff] %vm1033, %v1478
      %1504 = vst.msk [vmem:[%s170 + $0xb8] sm:$0xff] %vm1033, %v1479
      %1505 = vst.msk [vmem:[%s170 + $0xc0] sm:$0xf] %vm1147, %v1480
      %p1506 = scmp.lt.s32.totalorder %s14, 1
      %s1507 = scalar_select %p1506, %s14, 1
      %s1508 = smul.addr %s1507, 25
      %s1509 = smul.addr %s1508, 8
      %s1510 = scalar_lea.vmem %s3, %s1509
      // Predicated region
      $region33: #{cnn_classifier_forward.4} parent=31 // pred_check
        %p1511 = pneg %p100
      $region34: #{cnn_classifier_forward.4} parent=31 // pred_check_branch
        %1513 = sbr.rel (%p1511) target = $region36
      $region35: #{cnn_classifier_forward.4} parent=31 // pred_region
        _
      $region36: #{cnn_classifier_forward.4} parent=31 // pred_fallthru
        _
    $region32: #{cnn_classifier_forward.4} parent=5 // pred_fallthru
      _
    %p1514 = scmp.le.s32.totalorder 2, %s9
    // Predicated region
    $region37: #{cnn_classifier_forward.4} parent=5 // pred_check
      %p1515 = pneg %p1514
    $region38: #{cnn_classifier_forward.4} parent=5 // pred_check_branch
      %1517 = sbr.rel (%p1515) target = $region40
    $region39: #{cnn_classifier_forward.4} parent=5 // pred_region
      %s1518 = ssub.s32 %s9, 2
      // Predicated region
      $region41: #{cnn_classifier_forward.4} parent=39 // pred_check
        %p1519 = pneg %p106
      $region42: #{cnn_classifier_forward.4} parent=39 // pred_check_branch
        %1521 = sbr.rel (%p1519) target = $region44
      $region43: #{cnn_classifier_forward.4} parent=39 // pred_region
        %p1522 = scmp.lt.s32.totalorder %s15, 1
        %s1523 = scalar_select %p1522, %s15, 1
        %s1524 = smul.addr %s1523, 25
        %s1525 = smul.addr %s1524, 8
        %s1526 = scalar_lea.vmem %s3, %s1525
      $region44: #{cnn_classifier_forward.4} parent=39 // pred_fallthru
        _
    $region40: #{cnn_classifier_forward.4} parent=5 // pred_fallthru
      _
  $region6: #{cnn_classifier_forward.4} parent=0 // loop_footer
    %s13 = sadd.s32 1, %s9
  $region7: #{cnn_classifier_forward.4} parent=0 // loop_footer_branch
    %8 = sbr.rel target = $region3
  $region8: #{cnn_classifier_forward.4} parent=0 // loop_exit
    _

// kernel: cnn_classifier_forward.5
$region0: #{cnn_classifier_forward.5}
  #allocation0 [shape = 'u32[]', space=smem, size = 0x4, offset = 0x4, fixed_abs, tag = 'smem constant byte address 0x4 - core index']
  #allocation1 [shape = 'u32[72,128]{1,0:T(1,128)}', space=vmem, size = 0x9000, scoped, tag = 'internal scratch']
  #allocation2 [shape = 'f32[196,64]{1,0:T(8,128)}', space=vmem, size = 0x19000, scoped, tag = 'scratch operand']
  #allocation3 [shape = 'f32[98,64]{1,0:T(8,128)}', space=vmem, size = 0xd000, scoped, tag = 'scratch operand']
  %s0 = inlined_call_operand.vmem [shape: bf16[2,196,288], index: 0, kind: input, shape index: {}]
  %s1 = inlined_call_operand.vmem [shape: bf16[288,64], index: 1, kind: input, shape index: {}]
  %s2 = inlined_call_operand.vmem [shape: f32[1,64], index: 2, kind: input, shape index: {}]
  %s3 = inlined_call_operand.vmem [shape: f32[2,49,64], index: 3, kind: output, shape index: {}]
  %s4 = sld [smem:[#allocation0]]
  $region45: #{cnn_classifier_forward.5} parent=0
    _
  %s6 = ssub.s32 1, %s4
  %s7 = scalar_select 0, %s6, %s4
  loop: start=0, step=1, limit=4
  $region2: #{cnn_classifier_forward.5} parent=0 // loop_pre_header
    _
  $region3: #{cnn_classifier_forward.5} parent=0 // loop_header
    %s9 = sphi 0, %s13
    %p10 = scmp.ge.s32.totalorder %s9, 4
    %s19 = sphi 0, %s21
    %s22 = sphi 0, %s19
    %s23 = sphi 0, %s22
    %s39 = sphi 0, %s23
    %s43 = sphi 0, %s43
    %s45 = sphi 0, %s43
    %s46 = sphi 0, %s45
    %s60 = sphi 0, %s46
    %s64 = sphi 0, %s64
    %s66 = sphi 0, %s64
    %s67 = sphi 0, %s66
    %s81 = sphi 0, %s67
    %s87 = sphi 0, %s89
    %s90 = sphi 0, %s87
    %s91 = sphi 0, %s90
    %s107 = sphi 0, %s91
  $region4: #{cnn_classifier_forward.5} parent=0 // loop_header_branch
    %12 = sbr.rel (%p10) target = $region8
  $region5: #{cnn_classifier_forward.5} parent=0 // loop_body
    %s14 = ssub.s32 %s9, 1
    %s15 = ssub.s32 %s9, 2
    %s16 = sadd.s32 %s9, 1
    %s17 = ssub.s32 %s9, %s16
    %p18 = scmp.eq.s32.totalorder %s17, 0
    %s20 = sadd.s32 %s19, 1
    %s21 = scalar_select %p18, %s19, %s20
    %p24 = pneg %p18
    %p25 = scmp.eq.s32.totalorder %s9, 1
    %p26 = por %p24, %p25
    %p27 = scmp.ne.s32.totalorder %s19, %s22
    %p28 = scmp.eq.s32.totalorder %s9, 0
    %p29 = por %p27, %p28
    %p30 = scmp.ne.s32.totalorder %s19, %s22
    %p31 = scmp.eq.s32.totalorder %s14, 1
    %p32 = por %p30, %p31
    %p33 = scmp.ne.s32.totalorder %s22, %s23
    %p34 = scmp.eq.s32.totalorder %s14, 0
    %p35 = por %p33, %p34
    %p36 = scmp.ne.s32.totalorder %s22, %s23
    %p37 = scmp.eq.s32.totalorder %s15, 1
    %p38 = por %p36, %p37
    %p40 = scmp.ne.s32.totalorder %s23, %s39
    %p41 = scmp.eq.s32.totalorder %s15, 0
    %p42 = por %p40, %p41
    %s44 = sadd.s32 %s43, 1
    %p47 = scmp.eq.s32.totalorder %s9, 1
    %p48 = scmp.ne.s32.totalorder %s43, %s45
    %p49 = scmp.eq.s32.totalorder %s9, 0
    %p50 = por %p48, %p49
    %p51 = scmp.ne.s32.totalorder %s43, %s45
    %p52 = scmp.eq.s32.totalorder %s14, 1
    %p53 = por %p51, %p52
    %p54 = scmp.ne.s32.totalorder %s45, %s46
    %p55 = scmp.eq.s32.totalorder %s14, 0
    %p56 = por %p54, %p55
    %p57 = scmp.ne.s32.totalorder %s45, %s46
    %p58 = scmp.eq.s32.totalorder %s15, 1
    %p59 = por %p57, %p58
    %p61 = scmp.ne.s32.totalorder %s46, %s60
    %p62 = scmp.eq.s32.totalorder %s15, 0
    %p63 = por %p61, %p62
    %s65 = sadd.s32 %s64, 1
    %p68 = scmp.eq.s32.totalorder %s9, 1
    %p69 = scmp.ne.s32.totalorder %s64, %s66
    %p70 = scmp.eq.s32.totalorder %s9, 0
    %p71 = por %p69, %p70
    %p72 = scmp.ne.s32.totalorder %s64, %s66
    %p73 = scmp.eq.s32.totalorder %s14, 1
    %p74 = por %p72, %p73
    %p75 = scmp.ne.s32.totalorder %s66, %s67
    %p76 = scmp.eq.s32.totalorder %s14, 0
    %p77 = por %p75, %p76
    %p78 = scmp.ne.s32.totalorder %s66, %s67
    %p79 = scmp.eq.s32.totalorder %s15, 1
    %p80 = por %p78, %p79
    %p82 = scmp.ne.s32.totalorder %s67, %s81
    %p83 = scmp.eq.s32.totalorder %s15, 0
    %p84 = por %p82, %p83
    %s85 = ssub.s32 %s9, %s16
    %p86 = scmp.eq.s32.totalorder %s85, 0
    %s88 = sadd.s32 %s87, 1
    %s89 = scalar_select %p86, %s87, %s88
    %p92 = pneg %p86
    %p93 = scmp.eq.s32.totalorder %s9, 1
    %p94 = por %p92, %p93
    %p95 = scmp.ne.s32.totalorder %s87, %s90
    %p96 = scmp.eq.s32.totalorder %s9, 0
    %p97 = por %p95, %p96
    %p98 = scmp.ne.s32.totalorder %s87, %s90
    %p99 = scmp.eq.s32.totalorder %s14, 1
    %p100 = por %p98, %p99
    %p101 = scmp.ne.s32.totalorder %s90, %s91
    %p102 = scmp.eq.s32.totalorder %s14, 0
    %p103 = por %p101, %p102
    %p104 = scmp.ne.s32.totalorder %s90, %s91
    %p105 = scmp.eq.s32.totalorder %s15, 1
    %p106 = por %p104, %p105
    %p108 = scmp.ne.s32.totalorder %s91, %s107
    %p109 = scmp.eq.s32.totalorder %s15, 0
    %p110 = por %p108, %p109
    %p111 = scmp.le.s32.totalorder 1, %s9
    %p112 = scmp.lt.s32.totalorder %s9, 3
    %p113 = pnand %p111, %p112
    %p114 = pneg %p113
    // Predicated region
    $region9: #{cnn_classifier_forward.5} parent=5 // pred_check
      _
    $region10: #{cnn_classifier_forward.5} parent=5 // pred_check_branch
      %116 = sbr.rel (%p113) target = $region12
    $region11: #{cnn_classifier_forward.5} parent=5 // pred_region
      %s117 = ssub.s32 %s9, 1
      // Predicated region
      $region13: #{cnn_classifier_forward.5} parent=11 // pred_check
        %p118 = pneg %p56
      $region14: #{cnn_classifier_forward.5} parent=11 // pred_check_branch
        %120 = sbr.rel (%p118) target = $region16
      $region15: #{cnn_classifier_forward.5} parent=11 // pred_region
        _
      $region16: #{cnn_classifier_forward.5} parent=11 // pred_fallthru
        _
      // Predicated region
      $region17: #{cnn_classifier_forward.5} parent=11 // pred_check
        %p121 = pneg %p77
      $region18: #{cnn_classifier_forward.5} parent=11 // pred_check_branch
        %123 = sbr.rel (%p121) target = $region20
      $region19: #{cnn_classifier_forward.5} parent=11 // pred_region
        _
      $region20: #{cnn_classifier_forward.5} parent=11 // pred_fallthru
        _
    $region12: #{cnn_classifier_forward.5} parent=5 // pred_fallthru
      _
    %p124 = scmp.lt.s32.totalorder %s9, 2
    // Predicated region
    $region21: #{cnn_classifier_forward.5} parent=5 // pred_check
      %p125 = pneg %p124
    $region22: #{cnn_classifier_forward.5} parent=5 // pred_check_branch
      %127 = sbr.rel (%p125) target = $region24
    $region23: #{cnn_classifier_forward.5} parent=5 // pred_region
      // Predicated region
      $region25: #{cnn_classifier_forward.5} parent=23 // pred_check
        %p128 = pneg %p29
      $region26: #{cnn_classifier_forward.5} parent=23 // pred_check_branch
        %130 = sbr.rel (%p128) target = $region28
      $region27: #{cnn_classifier_forward.5} parent=23 // pred_region
        %p131 = scmp.lt.s32.totalorder %s9, 1
        %s132 = scalar_select %p131, %s9, 1
        %s133 = smul.addr %s132, 75
        %s134 = smul.addr %s133, 4
        %s135 = scalar_lea.vmem %s0, %s134
      $region28: #{cnn_classifier_forward.5} parent=23 // pred_fallthru
        _
    $region24: #{cnn_classifier_forward.5} parent=5 // pred_fallthru
      _
    %p136 = scmp.le.s32.totalorder 1, %s9
    %p137 = scmp.lt.s32.totalorder %s9, 3
    %p138 = pnand %p136, %p137
    %p139 = pneg %p138
    // Predicated region
    $region29: #{cnn_classifier_forward.5} parent=5 // pred_check
      _
    $region30: #{cnn_classifier_forward.5} parent=5 // pred_check_branch
      %141 = sbr.rel (%p138) target = $region32
    $region31: #{cnn_classifier_forward.5} parent=5 // pred_region
      %s142 = ssub.s32 %s9, 1
      %p143 = scmp.lt.s32.totalorder %s14, 1
      %s144 = scalar_select %p143, %s14, 1
      %s145 = smul.addr %s144, 75
      %s146 = smul.addr %s145, 4
      %s147 = scalar_lea.vmem %s0, %s146
      %p148 = pneg %p35
      %p149 = pneg %p32
      %p150 = pneg %p56
      %p151 = pneg %p53
      %p152 = pneg %p77
      %p153 = pneg %p74
      %p154 = pneg %p103
      %p155 = pneg %p100
      %p156 = scmp.lt.s32.totalorder %s14, 1
      %s157 = scalar_select %p156, %s14, 1
      %s158 = smul.addr %s157, 7
      %s159 = smul.addr %s158, 8
      %s160 = scalar_lea.vmem %s3, %s159
      %p161 = scmp.lt.s32.totalorder %s14, 1
      %s162 = scalar_select %p161, %s14, 1
      %s163 = smul.addr %s162, 75
      %s164 = smul.addr %s163, 4
      %s165 = scalar_lea.vmem %s0, %s164
      %p166 = scmp.lt.s32.totalorder %s14, 1
      %s167 = scalar_select %p166, %s14, 1
      %s168 = smul.addr %s167, 7
      %s169 = smul.addr %s168, 8
      %s170 = scalar_lea.vmem %s3, %s169
      %v172 = vld [vmem:[%s165] sm:$0xff]
      %v173 = vld [vmem:[%s165 + $0x8] sm:$0xf]
      %v174 = vld [vmem:[%s165 + $0xc] sm:$0xff]
      %v175 = vld [vmem:[%s165 + $0x14] sm:$0xf]
      %v176 = vld [vmem:[%s165 + $0x18] sm:$0xff]
      %v177 = vld [vmem:[%s165 + $0x20] sm:$0xf]
      %v178 = vld [vmem:[%s165 + $0x24] sm:$0xff]
      %v179 = vld [vmem:[%s165 + $0x2c] sm:$0xf]
      %v180 = vld [vmem:[%s165 + $0x30] sm:$0xff]
      %v181 = vld [vmem:[%s165 + $0x38] sm:$0xf]
      %v182 = vld [vmem:[%s165 + $0x3c] sm:$0xff]
      %v183 = vld [vmem:[%s165 + $0x44] sm:$0xf]
      %v184 = vld [vmem:[%s165 + $0x48] sm:$0xff]
      %v185 = vld [vmem:[%s165 + $0x50] sm:$0xf]
      %v186 = vld [vmem:[%s165 + $0x54] sm:$0xff]
      %v187 = vld [vmem:[%s165 + $0x5c] sm:$0xf]
      %v188 = vld [vmem:[%s165 + $0x60] sm:$0xff]
      %v189 = vld [vmem:[%s165 + $0x68] sm:$0xf]
      %v190 = vld [vmem:[%s165 + $0x6c] sm:$0xff]
      %v191 = vld [vmem:[%s165 + $0x74] sm:$0xf]
      %v192 = vld [vmem:[%s165 + $0x78] sm:$0xff]
      %v193 = vld [vmem:[%s165 + $0x80] sm:$0xf]
      %v194 = vld [vmem:[%s165 + $0x84] sm:$0xff]
      %v195 = vld [vmem:[%s165 + $0x8c] sm:$0xf]
      %v196 = vld [vmem:[%s165 + $0x90] sm:$0xff]
      %v197 = vld [vmem:[%s165 + $0x98] sm:$0xf]
      %v198 = vld [vmem:[%s165 + $0x9c] sm:$0xff]
      %v199 = vld [vmem:[%s165 + $0xa4] sm:$0xf]
      %v200 = vld [vmem:[%s165 + $0xa8] sm:$0xff]
      %v201 = vld [vmem:[%s165 + $0xb0] sm:$0xf]
      %v202 = vld [vmem:[%s165 + $0xb4] sm:$0xff]
      %v203 = vld [vmem:[%s165 + $0xbc] sm:$0xf]
      %v204 = vld [vmem:[%s165 + $0xc0] sm:$0xff]
      %v205 = vld [vmem:[%s165 + $0xc8] sm:$0xf]
      %v206 = vld [vmem:[%s165 + $0xcc] sm:$0xff]
      %v207 = vld [vmem:[%s165 + $0xd4] sm:$0xf]
      %v208 = vld [vmem:[%s165 + $0xd8] sm:$0xff]
      %v209 = vld [vmem:[%s165 + $0xe0] sm:$0xf]
      %v210 = vld [vmem:[%s165 + $0xe4] sm:$0xff]
      %v211 = vld [vmem:[%s165 + $0xec] sm:$0xf]
      %v212 = vld [vmem:[%s165 + $0xf0] sm:$0xff]
      %v213 = vld [vmem:[%s165 + $0xf8] sm:$0xf]
      %v214 = vld [vmem:[%s165 + $0xfc] sm:$0xff]
      %v215 = vld [vmem:[%s165 + $0x104] sm:$0xf]
      %v216 = vld [vmem:[%s165 + $0x108] sm:$0xff]
      %v217 = vld [vmem:[%s165 + $0x110] sm:$0xf]
      %v218 = vld [vmem:[%s165 + $0x114] sm:$0xff]
      %v219 = vld [vmem:[%s165 + $0x11c] sm:$0xf]
      %v220 = vld [vmem:[%s165 + $0x120] sm:$0x33]
      %v221 = vld [vmem:[%s165 + $0x128] sm:$0x3]
      %v222 = vld [vmem:[%s1] sm:$0xf]
      %v223 = vld [vmem:[%s1 + $0x4] sm:$0xf]
      %v224 = vld [vmem:[%s1 + $0x8] sm:$0xf]
      %v225 = vld [vmem:[%s1 + $0xc] sm:$0xf]
      %v226 = vld [vmem:[%s1 + $0x10] sm:$0xf]
      %v227 = vld [vmem:[%s1 + $0x14] sm:$0xf]
      %v228 = vld [vmem:[%s1 + $0x18] sm:$0xf]
      %v229 = vld [vmem:[%s1 + $0x1c] sm:$0xf]
      %v230 = vld [vmem:[%s1 + $0x20] sm:$0xf]
      %v231 = vld [vmem:[%s1 + $0x24] sm:$0xf]
      %v232 = vld [vmem:[%s1 + $0x28] sm:$0xf]
      %v233 = vld [vmem:[%s1 + $0x2c] sm:$0xf]
      %v234 = vld [vmem:[%s1 + $0x30] sm:$0xf]
      %v235 = vld [vmem:[%s1 + $0x34] sm:$0xf]
      %v236 = vld [vmem:[%s1 + $0x38] sm:$0xf]
      %v237 = vld [vmem:[%s1 + $0x3c] sm:$0xf]
      %v238 = vld [vmem:[%s1 + $0x40] sm:$0xf]
      %v239 = vld [vmem:[%s1 + $0x44] sm:$0xf]
      %v240 = vld [vmem:[%s1 + $0x48] sm:$0xf]
      %v241 = vld [vmem:[%s1 + $0x4c] sm:$0xf]
      %v242 = vld [vmem:[%s1 + $0x50] sm:$0xf]
      %v243 = vld [vmem:[%s1 + $0x54] sm:$0xf]
      %v244 = vld [vmem:[%s1 + $0x58] sm:$0xf]
      %v245 = vld [vmem:[%s1 + $0x5c] sm:$0xf]
      %v246 = vld [vmem:[%s1 + $0x60] sm:$0xf]
      %v247 = vld [vmem:[%s1 + $0x64] sm:$0xf]
      %v248 = vld [vmem:[%s1 + $0x68] sm:$0xf]
      %v249 = vld [vmem:[%s1 + $0x6c] sm:$0xf]
      %v250 = vld [vmem:[%s1 + $0x70] sm:$0xf]
      %v251 = vld [vmem:[%s1 + $0x74] sm:$0xf]
      %v252 = vld [vmem:[%s1 + $0x78] sm:$0xf]
      %v253 = vld [vmem:[%s1 + $0x7c] sm:$0xf]
      %v254 = vld [vmem:[%s1 + $0x80] sm:$0xf]
      %v255 = vld [vmem:[%s1 + $0x84] sm:$0xf]
      %v256 = vld [vmem:[%s1 + $0x88] sm:$0xf]
      %v257 = vld [vmem:[%s1 + $0x8c] sm:$0xf]
      %v258 = vld [vmem:[%s2] sm:$0x1]
      %v260 = vperm.slane %v258, 0
      %v312 = vunpack.c.l.b16 %v172
      %v313 = vunpack.c.h.b16 %v172
      %v314 = vunpack.c.l.b16 %v173
      %v315 = vunpack.c.l.b16 %v174
      %v316 = vunpack.c.h.b16 %v174
      %v317 = vunpack.c.l.b16 %v175
      %v318 = vunpack.c.l.b16 %v176
      %v319 = vunpack.c.h.b16 %v176
      %v320 = vunpack.c.l.b16 %v177
      %v321 = vunpack.c.l.b16 %v178
      %v322 = vunpack.c.h.b16 %v178
      %v323 = vunpack.c.l.b16 %v179
      %v324 = vunpack.c.l.b16 %v180
      %v325 = vunpack.c.h.b16 %v180
      %v326 = vunpack.c.l.b16 %v181
      %v327 = vunpack.c.l.b16 %v182
      %v328 = vunpack.c.h.b16 %v182
      %v329 = vunpack.c.l.b16 %v183
      %v330 = vunpack.c.l.b16 %v184
      %v331 = vunpack.c.h.b16 %v184
      %v332 = vunpack.c.l.b16 %v185
      %v333 = vunpack.c.l.b16 %v186
      %v334 = vunpack.c.h.b16 %v186
      %v335 = vunpack.c.l.b16 %v187
      %v336 = vunpack.c.l.b16 %v188
      %v337 = vunpack.c.h.b16 %v188
      %v338 = vunpack.c.l.b16 %v189
      %v339 = vunpack.c.l.b16 %v190
      %v340 = vunpack.c.h.b16 %v190
      %v341 = vunpack.c.l.b16 %v191
      %v342 = vunpack.c.l.b16 %v192
      %v343 = vunpack.c.h.b16 %v192
      %v344 = vunpack.c.l.b16 %v193
      %v345 = vunpack.c.l.b16 %v194
      %v346 = vunpack.c.h.b16 %v194
      %v347 = vunpack.c.l.b16 %v195
      %v348 = vunpack.c.l.b16 %v196
      %v349 = vunpack.c.h.b16 %v196
      %v350 = vunpack.c.l.b16 %v197
      %v351 = vunpack.c.l.b16 %v198
      %v352 = vunpack.c.h.b16 %v198
      %v353 = vunpack.c.l.b16 %v199
      %v354 = vunpack.c.l.b16 %v200
      %v355 = vunpack.c.h.b16 %v200
      %v356 = vunpack.c.l.b16 %v201
      %v357 = vunpack.c.l.b16 %v202
      %v358 = vunpack.c.h.b16 %v202
      %v359 = vunpack.c.l.b16 %v203
      %v360 = vunpack.c.l.b16 %v204
      %v361 = vunpack.c.h.b16 %v204
      %v362 = vunpack.c.l.b16 %v205
      %v363 = vunpack.c.l.b16 %v206
      %v364 = vunpack.c.h.b16 %v206
      %v365 = vunpack.c.l.b16 %v207
      %v366 = vunpack.c.l.b16 %v208
      %v367 = vunpack.c.h.b16 %v208
      %v368 = vunpack.c.l.b16 %v209
      %v369 = vunpack.c.l.b16 %v210
      %v370 = vunpack.c.h.b16 %v210
      %v371 = vunpack.c.l.b16 %v211
      %v372 = vunpack.c.l.b16 %v212
      %v373 = vunpack.c.h.b16 %v212
      %v374 = vunpack.c.l.b16 %v213
      %v375 = vunpack.c.l.b16 %v214
      %v376 = vunpack.c.h.b16 %v214
      %v377 = vunpack.c.l.b16 %v215
      %v378 = vunpack.c.l.b16 %v216
      %v379 = vunpack.c.h.b16 %v216
      %v380 = vunpack.c.l.b16 %v217
      %v381 = vunpack.c.l.b16 %v218
      %v382 = vunpack.c.h.b16 %v218
      %v383 = vunpack.c.l.b16 %v219
      %v384 = vunpack.c.l.b16 %v220
      %v385 = vunpack.c.h.b16 %v220
      %v386 = vunpack.c.l.b16 %v221
      %v387 = vpack.c.b16 %v315, %v312
      %v388 = vpack.c.b16 %v316, %v313
      %v389 = vpack.c.b16 %v317, %v314
      %v390 = vpack.c.b16 %v321, %v318
      %v391 = vpack.c.b16 %v322, %v319
      %v392 = vpack.c.b16 %v323, %v320
      %v393 = vpack.c.b16 %v327, %v324
      %v394 = vpack.c.b16 %v328, %v325
      %v395 = vpack.c.b16 %v329, %v326
      %v396 = vpack.c.b16 %v333, %v330
      %v397 = vpack.c.b16 %v334, %v331
      %v398 = vpack.c.b16 %v335, %v332
      %v399 = vpack.c.b16 %v339, %v336
      %v400 = vpack.c.b16 %v340, %v337
      %v401 = vpack.c.b16 %v341, %v338
      %v402 = vpack.c.b16 %v345, %v342
      %v403 = vpack.c.b16 %v346, %v343
      %v404 = vpack.c.b16 %v347, %v344
      %v405 = vpack.c.b16 %v351, %v348
      %v406 = vpack.c.b16 %v352, %v349
      %v407 = vpack.c.b16 %v353, %v350
      %v408 = vpack.c.b16 %v357, %v354
      %v409 = vpack.c.b16 %v358, %v355
      %v410 = vpack.c.b16 %v359, %v356
      %v411 = vpack.c.b16 %v363, %v360
      %v412 = vpack.c.b16 %v364, %v361
      %v413 = vpack.c.b16 %v365, %v362
      %v414 = vpack.c.b16 %v369, %v366
      %v415 = vpack.c.b16 %v370, %v367
      %v416 = vpack.c.b16 %v371, %v368
      %v417 = vpack.c.b16 %v375, %v372
      %v418 = vpack.c.b16 %v376, %v373
      %v419 = vpack.c.b16 %v377, %v374
      %v420 = vpack.c.b16 %v381, %v378
      %v421 = vpack.c.b16 %v382, %v379
      %v422 = vpack.c.b16 %v383, %v380
      %v423 = vpack.c.b16 %v384, %v384
      %v424 = vpack.c.b16 %v385, %v385
      %v425 = vpack.c.b16 %v386, %v386
      %v488 = vunpack.c.l.b16 %v222
      %v489 = vunpack.c.l.b16 %v223
      %v490 = vunpack.c.l.b16 %v224
      %v491 = vunpack.c.l.b16 %v225
      %v492 = vunpack.c.l.b16 %v226
      %v493 = vunpack.c.l.b16 %v227
      %v494 = vunpack.c.l.b16 %v228
      %v495 = vunpack.c.l.b16 %v229
      %v496 = vunpack.c.l.b16 %v230
      %v497 = vunpack.c.l.b16 %v231
      %v498 = vunpack.c.l.b16 %v232
      %v499 = vunpack.c.l.b16 %v233
      %v500 = vunpack.c.l.b16 %v234
      %v501 = vunpack.c.l.b16 %v235
      %v502 = vunpack.c.l.b16 %v236
      %v503 = vunpack.c.l.b16 %v237
      %v504 = vunpack.c.l.b16 %v238
      %v505 = vunpack.c.l.b16 %v239
      %v506 = vunpack.c.l.b16 %v240
      %v507 = vunpack.c.l.b16 %v241
      %v508 = vunpack.c.l.b16 %v242
      %v509 = vunpack.c.l.b16 %v243
      %v510 = vunpack.c.l.b16 %v244
      %v511 = vunpack.c.l.b16 %v245
      %v512 = vunpack.c.l.b16 %v246
      %v513 = vunpack.c.l.b16 %v247
      %v514 = vunpack.c.l.b16 %v248
      %v515 = vunpack.c.l.b16 %v249
      %v516 = vunpack.c.l.b16 %v250
      %v517 = vunpack.c.l.b16 %v251
      %v518 = vunpack.c.l.b16 %v252
      %v519 = vunpack.c.l.b16 %v253
      %v520 = vunpack.c.l.b16 %v254
      %v521 = vunpack.c.l.b16 %v255
      %v522 = vunpack.c.l.b16 %v256
      %v523 = vunpack.c.l.b16 %v257
      %v524 = vpack.c.b16 %v489, %v488
      %v525 = vpack.c.b16 %v491, %v490
      %v526 = vpack.c.b16 %v493, %v492
      %v527 = vpack.c.b16 %v495, %v494
      %v528 = vpack.c.b16 %v497, %v496
      %v529 = vpack.c.b16 %v499, %v498
      %v530 = vpack.c.b16 %v501, %v500
      %v531 = vpack.c.b16 %v503, %v502
      %v532 = vpack.c.b16 %v505, %v504
      %v533 = vpack.c.b16 %v507, %v506
      %v534 = vpack.c.b16 %v509, %v508
      %v535 = vpack.c.b16 %v511, %v510
      %v536 = vpack.c.b16 %v513, %v512
      %v537 = vpack.c.b16 %v515, %v514
      %v538 = vpack.c.b16 %v517, %v516
      %v539 = vpack.c.b16 %v519, %v518
      %v540 = vpack.c.b16 %v521, %v520
      %v541 = vpack.c.b16 %v523, %v522
      %vm560 = vcmask 261120
      %v562 = vsel %vm560, %v389, 0
      %v565 = vsel %vm560, %v392, 0
      %v568 = vsel %vm560, %v395, 0
      %v571 = vsel %vm560, %v398, 0
      %v574 = vsel %vm560, %v401, 0
      %v577 = vsel %vm560, %v404, 0
      %v580 = vsel %vm560, %v407, 0
      %v583 = vsel %vm560, %v410, 0
      %v586 = vsel %vm560, %v413, 0
      %v589 = vsel %vm560, %v416, 0
      %v592 = vsel %vm560, %v419, 0
      %v595 = vsel %vm560, %v422, 0
      %v598 = vsel %vm560, %v425, 0
      %600 = vmatpush.bf16.msra.mxu0 %v531
      %601 = vmatpush.bf16.msra.mxu0 %v530
      %602 = vmatpush.bf16.msra.mxu0 %v529
      %603 = vmatpush.bf16.msra.mxu0 %v528
      %604 = vmatpush.bf16.msra.mxu0 %v527
      %605 = vmatpush.bf16.msra.mxu0 %v526
      %606 = vmatpush.bf16.msra.mxu0 %v525
      %607 = vmatpush.bf16.msra.mxu0 %v524
      %608 = vmatmul.bf16.gmra.mxu0 %v387
      %v609 = vpop.f32.mrf.mxu0
      %v610 = vadd.f32 %v260, %v609
      %v611 = vpop.f32.mrf.mxu0
      %v612 = vadd.f32 %v260, %v611
      %613 = vmatmul.bf16.gmra.mxu0 %v390
      %v614 = vpop.f32.mrf.mxu0
      %v615 = vadd.f32 %v260, %v614
      %v616 = vpop.f32.mrf.mxu0
      %v617 = vadd.f32 %v260, %v616
      %618 = vmatmul.bf16.gmra.mxu0 %v393
      %v619 = vpop.f32.mrf.mxu0
      %v620 = vadd.f32 %v260, %v619
      %v621 = vpop.f32.mrf.mxu0
      %v622 = vadd.f32 %v260, %v621
      %623 = vmatmul.bf16.gmra.mxu0 %v396
      %v624 = vpop.f32.mrf.mxu0
      %v625 = vadd.f32 %v260, %v624
      %v626 = vpop.f32.mrf.mxu0
      %v627 = vadd.f32 %v260, %v626
      %628 = vmatmul.bf16.gmra.mxu0 %v399
      %v629 = vpop.f32.mrf.mxu0
      %v630 = vadd.f32 %v260, %v629
      %v631 = vpop.f32.mrf.mxu0
      %v632 = vadd.f32 %v260, %v631
      %633 = vmatmul.bf16.gmra.mxu0 %v402
      %v634 = vpop.f32.mrf.mxu0
      %v635 = vadd.f32 %v260, %v634
      %v636 = vpop.f32.mrf.mxu0
      %v637 = vadd.f32 %v260, %v636
      %638 = vmatmul.bf16.gmra.mxu0 %v405
      %v639 = vpop.f32.mrf.mxu0
      %v640 = vadd.f32 %v260, %v639
      %v641 = vpop.f32.mrf.mxu0
      %v642 = vadd.f32 %v260, %v641
      %643 = vmatmul.bf16.gmra.mxu0 %v408
      %v644 = vpop.f32.mrf.mxu0
      %v645 = vadd.f32 %v260, %v644
      %v646 = vpop.f32.mrf.mxu0
      %v647 = vadd.f32 %v260, %v646
      %648 = vmatmul.bf16.gmra.mxu0 %v411
      %v649 = vpop.f32.mrf.mxu0
      %v650 = vadd.f32 %v260, %v649
      %v651 = vpop.f32.mrf.mxu0
      %v652 = vadd.f32 %v260, %v651
      %653 = vmatmul.bf16.gmra.mxu0 %v414
      %v654 = vpop.f32.mrf.mxu0
      %v655 = vadd.f32 %v260, %v654
      %v656 = vpop.f32.mrf.mxu0
      %v657 = vadd.f32 %v260, %v656
      %658 = vmatmul.bf16.gmra.mxu0 %v417
      %v659 = vpop.f32.mrf.mxu0
      %v660 = vadd.f32 %v260, %v659
      %v661 = vpop.f32.mrf.mxu0
      %v662 = vadd.f32 %v260, %v661
      %663 = vmatmul.bf16.gmra.mxu0 %v420
      %v664 = vpop.f32.mrf.mxu0
      %v665 = vadd.f32 %v260, %v664
      %v666 = vpop.f32.mrf.mxu0
      %v667 = vadd.f32 %v260, %v666
      %668 = vmatmul.bf16.gmra.mxu0 %v423
      %v669 = vpop.f32.mrf.mxu0
      %v670 = vadd.f32 %v260, %v669
      %v671 = vpop.f32.mrf.mxu0
      %672 = vdwg.mxu0
      %673 = vmatpush.bf16.msra.mxu0 %v539
      %674 = vmatpush.bf16.msra.mxu0 %v538
      %675 = vmatpush.bf16.msra.mxu0 %v537
      %676 = vmatpush.bf16.msra.mxu0 %v536
      %677 = vmatpush.bf16.msra.mxu0 %v535
      %678 = vmatpush.bf16.msra.mxu0 %v534
      %679 = vmatpush.bf16.msra.mxu0 %v533
      %680 = vmatpush.bf16.msra.mxu0 %v532
      %681 = vmatmul.bf16.gmra.mxu0 %v388
      %v682 = vpop.f32.mrf.mxu0
      %v683 = vadd.f32 %v610, %v682
      %v684 = vpop.f32.mrf.mxu0
      %v685 = vadd.f32 %v612, %v684
      %686 = vmatmul.bf16.gmra.mxu0 %v391
      %v687 = vpop.f32.mrf.mxu0
      %v688 = vadd.f32 %v615, %v687
      %v689 = vpop.f32.mrf.mxu0
      %v690 = vadd.f32 %v617, %v689
      %691 = vmatmul.bf16.gmra.mxu0 %v394
      %v692 = vpop.f32.mrf.mxu0
      %v693 = vadd.f32 %v620, %v692
      %v694 = vpop.f32.mrf.mxu0
      %v695 = vadd.f32 %v622, %v694
      %696 = vmatmul.bf16.gmra.mxu0 %v397
      %v697 = vpop.f32.mrf.mxu0
      %v698 = vadd.f32 %v625, %v697
      %v699 = vpop.f32.mrf.mxu0
      %v700 = vadd.f32 %v627, %v699
      %701 = vmatmul.bf16.gmra.mxu0 %v400
      %v702 = vpop.f32.mrf.mxu0
      %v703 = vadd.f32 %v630, %v702
      %v704 = vpop.f32.mrf.mxu0
      %v705 = vadd.f32 %v632, %v704
      %706 = vmatmul.bf16.gmra.mxu0 %v403
      %v707 = vpop.f32.mrf.mxu0
      %v708 = vadd.f32 %v635, %v707
      %v709 = vpop.f32.mrf.mxu0
      %v710 = vadd.f32 %v637, %v709
      %711 = vmatmul.bf16.gmra.mxu0 %v406
      %v712 = vpop.f32.mrf.mxu0
      %v713 = vadd.f32 %v640, %v712
      %v714 = vpop.f32.mrf.mxu0
      %v715 = vadd.f32 %v642, %v714
      %716 = vmatmul.bf16.gmra.mxu0 %v409
      %v717 = vpop.f32.mrf.mxu0
      %v718 = vadd.f32 %v645, %v717
      %v719 = vpop.f32.mrf.mxu0
      %v720 = vadd.f32 %v647, %v719
      %721 = vmatmul.bf16.gmra.mxu0 %v412
      %v722 = vpop.f32.mrf.mxu0
      %v723 = vadd.f32 %v650, %v722
      %v724 = vpop.f32.mrf.mxu0
      %v725 = vadd.f32 %v652, %v724
      %726 = vmatmul.bf16.gmra.mxu0 %v415
      %v727 = vpop.f32.mrf.mxu0
      %v728 = vadd.f32 %v655, %v727
      %v729 = vpop.f32.mrf.mxu0
      %v730 = vadd.f32 %v657, %v729
      %731 = vmatmul.bf16.gmra.mxu0 %v418
      %v732 = vpop.f32.mrf.mxu0
      %v733 = vadd.f32 %v660, %v732
      %v734 = vpop.f32.mrf.mxu0
      %v735 = vadd.f32 %v662, %v734
      %736 = vmatmul.bf16.gmra.mxu0 %v421
      %v737 = vpop.f32.mrf.mxu0
      %v738 = vadd.f32 %v665, %v737
      %v739 = vpop.f32.mrf.mxu0
      %v740 = vadd.f32 %v667, %v739
      %741 = vmatmul.bf16.gmra.mxu0 %v424
      %v742 = vpop.f32.mrf.mxu0
      %v743 = vadd.f32 %v670, %v742
      %v744 = vpop.f32.mrf.mxu0
      %745 = vdwg.mxu0
      %746 = vmatpush.bf16.msra.mxu0 0
      %747 = vmatpush.bf16.msra.mxu0 0
      %748 = vmatpush.bf16.msra.mxu0 0
      %749 = vmatpush.bf16.msra.mxu0 0
      %750 = vmatpush.bf16.msra.mxu0 0
      %751 = vmatpush.bf16.msra.mxu0 0
      %752 = vmatpush.bf16.msra.mxu0 %v541
      %753 = vmatpush.bf16.msra.mxu0 %v540
      %754 = vmatmul.bf16.gmra.mxu0 %v562
      %v755 = vpop.f32.mrf.mxu0
      %v756 = vadd.f32 %v683, %v755
      %v757 = vpop.f32.mrf.mxu0
      %v758 = vadd.f32 %v685, %v757
      %759 = vmatmul.bf16.gmra.mxu0 %v565
      %v760 = vpop.f32.mrf.mxu0
      %v761 = vadd.f32 %v688, %v760
      %v762 = vpop.f32.mrf.mxu0
      %v763 = vadd.f32 %v690, %v762
      %764 = vmatmul.bf16.gmra.mxu0 %v568
      %v765 = vpop.f32.mrf.mxu0
      %v766 = vadd.f32 %v693, %v765
      %v767 = vpop.f32.mrf.mxu0
      %v768 = vadd.f32 %v695, %v767
      %769 = vmatmul.bf16.gmra.mxu0 %v571
      %v770 = vpop.f32.mrf.mxu0
      %v771 = vadd.f32 %v698, %v770
      %v772 = vpop.f32.mrf.mxu0
      %v773 = vadd.f32 %v700, %v772
      %774 = vmatmul.bf16.gmra.mxu0 %v574
      %v775 = vpop.f32.mrf.mxu0
      %v776 = vadd.f32 %v703, %v775
      %v777 = vpop.f32.mrf.mxu0
      %v778 = vadd.f32 %v705, %v777
      %779 = vmatmul.bf16.gmra.mxu0 %v577
      %v780 = vpop.f32.mrf.mxu0
      %v781 = vadd.f32 %v708, %v780
      %v782 = vpop.f32.mrf.mxu0
      %v783 = vadd.f32 %v710, %v782
      %784 = vmatmul.bf16.gmra.mxu0 %v580
      %v785 = vpop.f32.mrf.mxu0
      %v786 = vadd.f32 %v713, %v785
      %v787 = vpop.f32.mrf.mxu0
      %v788 = vadd.f32 %v715, %v787
      %789 = vmatmul.bf16.gmra.mxu0 %v583
      %v790 = vpop.f32.mrf.mxu0
      %v791 = vadd.f32 %v718, %v790
      %v792 = vpop.f32.mrf.mxu0
      %v793 = vadd.f32 %v720, %v792
      %794 = vmatmul.bf16.gmra.mxu0 %v586
      %v795 = vpop.f32.mrf.mxu0
      %v796 = vadd.f32 %v723, %v795
      %v797 = vpop.f32.mrf.mxu0
      %v798 = vadd.f32 %v725, %v797
      %799 = vmatmul.bf16.gmra.mxu0 %v589
      %v800 = vpop.f32.mrf.mxu0
      %v801 = vadd.f32 %v728, %v800
      %v802 = vpop.f32.mrf.mxu0
      %v803 = vadd.f32 %v730, %v802
      %804 = vmatmul.bf16.gmra.mxu0 %v592
      %v805 = vpop.f32.mrf.mxu0
      %v806 = vadd.f32 %v733, %v805
      %v807 = vpop.f32.mrf.mxu0
      %v808 = vadd.f32 %v735, %v807
      %809 = vmatmul.bf16.gmra.mxu0 %v595
      %v810 = vpop.f32.mrf.mxu0
      %v811 = vadd.f32 %v738, %v810
      %v812 = vpop.f32.mrf.mxu0
      %v813 = vadd.f32 %v740, %v812
      %814 = vmatmul.bf16.gmra.mxu0 %v598
      %v815 = vpop.f32.mrf.mxu0
      %v816 = vadd.f32 %v743, %v815
      %v817 = vpop.f32.mrf.mxu0
      %818 = vdwg.mxu0
      %v819 = vmax.f32 %v756, 0.0
      %v820 = vmax.f32 %v758, 0.0
      %v821 = vmax.f32 %v761, 0.0
      %v822 = vmax.f32 %v763, 0.0
      %v823 = vmax.f32 %v766, 0.0
      %v824 = vmax.f32 %v768, 0.0
      %v825 = vmax.f32 %v771, 0.0
      %v826 = vmax.f32 %v773, 0.0
      %v827 = vmax.f32 %v776, 0.0
      %v828 = vmax.f32 %v778, 0.0
      %v829 = vmax.f32 %v781, 0.0
      %v830 = vmax.f32 %v783, 0.0
      %v831 = vmax.f32 %v786, 0.0
      %v832 = vmax.f32 %v788, 0.0
      %v833 = vmax.f32 %v791, 0.0
      %v834 = vmax.f32 %v793, 0.0
      %v835 = vmax.f32 %v796, 0.0
      %v836 = vmax.f32 %v798, 0.0
      %v837 = vmax.f32 %v801, 0.0
      %v838 = vmax.f32 %v803, 0.0
      %v839 = vmax.f32 %v806, 0.0
      %v840 = vmax.f32 %v808, 0.0
      %v841 = vmax.f32 %v811, 0.0
      %v842 = vmax.f32 %v813, 0.0
      %v843 = vmax.f32 %v816, 0.0
      %vm844 = vcmask 523264
      %845 = vst.msk [vmem:[#allocation2] sm:$0xff] %vm844, %v819
      %846 = vst.msk [vmem:[#allocation2 + $0x8] sm:$0xff] %vm844, %v820
      %847 = vst.msk [vmem:[#allocation2 + $0x10] sm:$0xff] %vm844, %v821
      %848 = vst.msk [vmem:[#allocation2 + $0x18] sm:$0xff] %vm844, %v822
      %849 = vst.msk [vmem:[#allocation2 + $0x20] sm:$0xff] %vm844, %v823
      %850 = vst.msk [vmem:[#allocation2 + $0x28] sm:$0xff] %vm844, %v824
      %851 = vst.msk [vmem:[#allocation2 + $0x30] sm:$0xff] %vm844, %v825
      %852 = vst.msk [vmem:[#allocation2 + $0x38] sm:$0xff] %vm844, %v826
      %853 = vst.msk [vmem:[#allocation2 + $0x40] sm:$0xff] %vm844, %v827
      %854 = vst.msk [vmem:[#allocation2 + $0x48] sm:$0xff] %vm844, %v828
      %855 = vst.msk [vmem:[#allocation2 + $0x50] sm:$0xff] %vm844, %v829
      %856 = vst.msk [vmem:[#allocation2 + $0x58] sm:$0xff] %vm844, %v830
      %857 = vst.msk [vmem:[#allocation2 + $0x60] sm:$0xff] %vm844, %v831
      %858 = vst.msk [vmem:[#allocation2 + $0x68] sm:$0xff] %vm844, %v832
      %859 = vst.msk [vmem:[#allocation2 + $0x70] sm:$0xff] %vm844, %v833
      %860 = vst.msk [vmem:[#allocation2 + $0x78] sm:$0xff] %vm844, %v834
      %861 = vst.msk [vmem:[#allocation2 + $0x80] sm:$0xff] %vm844, %v835
      %862 = vst.msk [vmem:[#allocation2 + $0x88] sm:$0xff] %vm844, %v836
      %863 = vst.msk [vmem:[#allocation2 + $0x90] sm:$0xff] %vm844, %v837
      %864 = vst.msk [vmem:[#allocation2 + $0x98] sm:$0xff] %vm844, %v838
      %865 = vst.msk [vmem:[#allocation2 + $0xa0] sm:$0xff] %vm844, %v839
      %866 = vst.msk [vmem:[#allocation2 + $0xa8] sm:$0xff] %vm844, %v840
      %867 = vst.msk [vmem:[#allocation2 + $0xb0] sm:$0xff] %vm844, %v841
      %868 = vst.msk [vmem:[#allocation2 + $0xb8] sm:$0xff] %vm844, %v842
      %vm869 = vcmask 519168
      %870 = vst.msk [vmem:[#allocation2 + $0xc0] sm:$0xf] %vm869, %v843
      %v871 = vld [vmem:[#allocation2] sm:$0xff]
      %v872 = vld [vmem:[#allocation2 + $0x8] sm:$0x3f]
      %v873 = vld [vmem:[#allocation2 + $0xe] sm:$0xff]
      %v874 = vld [vmem:[#allocation2 + $0x16] sm:$0x3f]
      %v875 = vmax.f32 %v871, %v873
      %v876 = vmax.f32 %v872, %v874
      %877 = vst.msk [vmem:[#allocation3] sm:$0xff] %vm844, %v875
      %vm878 = vcmask 521216
      %879 = vst.msk [vmem:[#allocation3 + $0x8] sm:$0x3f] %vm878, %v876
      %v880 = vld [vmem:[#allocation2 + $0x1c] sm:$0xff]
      %v881 = vld [vmem:[#allocation2 + $0x24] sm:$0x3f]
      %v882 = vld [vmem:[#allocation2 + $0x2a] sm:$0xff]
      %v883 = vld [vmem:[#allocation2 + $0x32] sm:$0x3f]
      %v884 = vmax.f32 %v880, %v882
      %v885 = vmax.f32 %v881, %v883
      %886 = vst.msk [vmem:[#allocation3 + $0xe] sm:$0xff] %vm844, %v884
      %887 = vst.msk [vmem:[#allocation3 + $0x16] sm:$0x3f] %vm878, %v885
      %v888 = vld [vmem:[#allocation2 + $0x38] sm:$0xff]
      %v889 = vld [vmem:[#allocation2 + $0x40] sm:$0x3f]
      %v890 = vld [vmem:[#allocation2 + $0x46] sm:$0xff]
      %v891 = vld [vmem:[#allocation2 + $0x4e] sm:$0x3f]
      %v892 = vmax.f32 %v888, %v890
      %v893 = vmax.f32 %v889, %v891
      %894 = vst.msk [vmem:[#allocation3 + $0x1c] sm:$0xff] %vm844, %v892
      %895 = vst.msk [vmem:[#allocation3 + $0x24] sm:$0x3f] %vm878, %v893
      %v896 = vld [vmem:[#allocation2 + $0x54] sm:$0xff]
      %v897 = vld [vmem:[#allocation2 + $0x5c] sm:$0x3f]
      %v898 = vld [vmem:[#allocation2 + $0x62] sm:$0xff]
      %v899 = vld [vmem:[#allocation2 + $0x6a] sm:$0x3f]
      %v900 = vmax.f32 %v896, %v898
      %v901 = vmax.f32 %v897, %v899
      %902 = vst.msk [vmem:[#allocation3 + $0x2a] sm:$0xff] %vm844, %v900
      %903 = vst.msk [vmem:[#allocation3 + $0x32] sm:$0x3f] %vm878, %v901
      %v904 = vld [vmem:[#allocation2 + $0x70] sm:$0xff]
      %v905 = vld [vmem:[#allocation2 + $0x78] sm:$0x3f]
      %v906 = vld [vmem:[#allocation2 + $0x7e] sm:$0xff]
      %v907 = vld [vmem:[#allocation2 + $0x86] sm:$0x3f]
      %v908 = vmax.f32 %v904, %v906
      %v909 = vmax.f32 %v905, %v907
      %910 = vst.msk [vmem:[#allocation3 + $0x38] sm:$0xff] %vm844, %v908
      %911 = vst.msk [vmem:[#allocation3 + $0x40] sm:$0x3f] %vm878, %v909
      %v912 = vld [vmem:[#allocation2 + $0x8c] sm:$0xff]
      %v913 = vld [vmem:[#allocation2 + $0x94] sm:$0x3f]
      %v914 = vld [vmem:[#allocation2 + $0x9a] sm:$0xff]
      %v915 = vld [vmem:[#allocation2 + $0xa2] sm:$0x3f]
      %v916 = vmax.f32 %v912, %v914
      %v917 = vmax.f32 %v913, %v915
      %918 = vst.msk [vmem:[#allocation3 + $0x46] sm:$0xff] %vm844, %v916
      %919 = vst.msk [vmem:[#allocation3 + $0x4e] sm:$0x3f] %vm878, %v917
      %v920 = vld [vmem:[#allocation2 + $0xa8] sm:$0xff]
      %v921 = vld [vmem:[#allocation2 + $0xb0] sm:$0x3f]
      %v922 = vld [vmem:[#allocation2 + $0xb6] sm:$0xff]
      %v923 = vld [vmem:[#allocation2 + $0xbe] sm:$0x3f]
      %v924 = vmax.f32 %v920, %v922
      %v925 = vmax.f32 %v921, %v923
      %926 = vst.msk [vmem:[#allocation3 + $0x54] sm:$0xff] %vm844, %v924
      %927 = vst.msk [vmem:[#allocation3 + $0x5c] sm:$0x3f] %vm878, %v925
      %v928 = vld [vmem:[#allocation3] ss:$2 sm:$0xff]
      %s929 = scalar_lea.vmem [#allocation3], 16
      %v930 = vld [vmem:[%s929] ss:$2 sm:$0xff]
      %s931 = scalar_lea.vmem [#allocation3], 32
      %v932 = vld [vmem:[%s931] ss:$2 sm:$0xff]
      %s933 = scalar_lea.vmem [#allocation3], 48
      %v934 = vld [vmem:[%s933] ss:$2 sm:$0xff]
      %s935 = scalar_lea.vmem [#allocation3], 64
      %v936 = vld [vmem:[%s935] ss:$2 sm:$0xff]
      %s937 = scalar_lea.vmem [#allocation3], 80
      %v938 = vld [vmem:[%s937] ss:$2 sm:$0xff]
      %s939 = scalar_lea.vmem [#allocation3], 96
      %v940 = vld [vmem:[%s939] ss:$2 sm:$0x1]
      %s941 = scalar_lea.vmem [#allocation3], 1
      %v942 = vld [vmem:[%s941] ss:$2 sm:$0xff]
      %s943 = scalar_lea.vmem [#allocation3], 17
      %v944 = vld [vmem:[%s943] ss:$2 sm:$0xff]
      %s945 = scalar_lea.vmem [#allocation3], 33
      %v946 = vld [vmem:[%s945] ss:$2 sm:$0xff]
      %s947 = scalar_lea.vmem [#allocation3], 49
      %v948 = vld [vmem:[%s947] ss:$2 sm:$0xff]
      %s949 = scalar_lea.vmem [#allocation3], 65
      %v950 = vld [vmem:[%s949] ss:$2 sm:$0xff]
      %s951 = scalar_lea.vmem [#allocation3], 81
      %v952 = vld [vmem:[%s951] ss:$2 sm:$0xff]
      %s953 = scalar_lea.vmem [#allocation3], 97
      %v954 = vld [vmem:[%s953] ss:$2 sm:$0x1]
      %v955 = vmax.f32 %v928, %v942
      %v956 = vmax.f32 %v930, %v944
      %v957 = vmax.f32 %v932, %v946
      %v958 = vmax.f32 %v934, %v948
      %v959 = vmax.f32 %v936, %v950
      %v960 = vmax.f32 %v938, %v952
      %v961 = vmax.f32 %v940, %v954
      %962 = vst.msk [vmem:[%s170] sm:$0xff] %vm844, %v955
      %963 = vst.msk [vmem:[%s170 + $0x8] sm:$0xff] %vm844, %v956
      %964 = vst.msk [vmem:[%s170 + $0x10] sm:$0xff] %vm844, %v957
      %965 = vst.msk [vmem:[%s170 + $0x18] sm:$0xff] %vm844, %v958
      %966 = vst.msk [vmem:[%s170 + $0x20] sm:$0xff] %vm844, %v959
      %967 = vst.msk [vmem:[%s170 + $0x28] sm:$0xff] %vm844, %v960
      %vm968 = vcmask 516096
      %969 = vst.msk [vmem:[%s170 + $0x30] sm:$0x1] %vm968, %v961
      %p970 = scmp.lt.s32.totalorder %s14, 1
      %s971 = scalar_select %p970, %s14, 1
      %s972 = smul.addr %s971, 7
      %s973 = smul.addr %s972, 8
      %s974 = scalar_lea.vmem %s3, %s973
      // Predicated region
      $region33: #{cnn_classifier_forward.5} parent=31 // pred_check
        %p975 = pneg %p100
      $region34: #{cnn_classifier_forward.5} parent=31 // pred_check_branch
        %977 = sbr.rel (%p975) target = $region36
      $region35: #{cnn_classifier_forward.5} parent=31 // pred_region
        _
      $region36: #{cnn_classifier_forward.5} parent=31 // pred_fallthru
        _
    $region32: #{cnn_classifier_forward.5} parent=5 // pred_fallthru
      _
    %p978 = scmp.le.s32.totalorder 2, %s9
    // Predicated region
    $region37: #{cnn_classifier_forward.5} parent=5 // pred_check
      %p979 = pneg %p978
    $region38: #{cnn_classifier_forward.5} parent=5 // pred_check_branch
      %981 = sbr.rel (%p979) target = $region40
    $region39: #{cnn_classifier_forward.5} parent=5 // pred_region
      %s982 = ssub.s32 %s9, 2
      // Predicated region
      $region41: #{cnn_classifier_forward.5} parent=39 // pred_check
        %p983 = pneg %p106
      $region42: #{cnn_classifier_forward.5} parent=39 // pred_check_branch
        %985 = sbr.rel (%p983) target = $region44
      $region43: #{cnn_classifier_forward.5} parent=39 // pred_region
        %p986 = scmp.lt.s32.totalorder %s15, 1
        %s987 = scalar_select %p986, %s15, 1
        %s988 = smul.addr %s987, 7
        %s989 = smul.addr %s988, 8
        %s990 = scalar_lea.vmem %s3, %s989
      $region44: #{cnn_classifier_forward.5} parent=39 // pred_fallthru
        _
    $region40: #{cnn_classifier_forward.5} parent=5 // pred_fallthru
      _
  $region6: #{cnn_classifier_forward.5} parent=0 // loop_footer
    %s13 = sadd.s32 1, %s9
  $region7: #{cnn_classifier_forward.5} parent=0 // loop_footer_branch
    %8 = sbr.rel target = $region3
  $region8: #{cnn_classifier_forward.5} parent=0 // loop_exit
    _

// kernel: cnn_classifier_forward.6
$region0: #{cnn_classifier_forward.6}
  #allocation0 [shape = 'u32[]', space=smem, size = 0x4, offset = 0x4, fixed_abs, tag = 'smem constant byte address 0x4 - core index']
  #allocation1 [shape = 'u32[72,128]{1,0:T(1,128)}', space=vmem, size = 0x9000, scoped, tag = 'internal scratch']
  #allocation2 [shape = 'f32[49,128]{1,0:T(8,128)}', space=vmem, size = 0x7000, scoped, tag = 'scratch operand']
  #allocation3 [shape = 'f32[21,128]{1,0:T(8,128)}', space=vmem, size = 0x3000, scoped, tag = 'scratch operand']
  %s0 = inlined_call_operand.vmem [shape: bf16[2,49,576], index: 0, kind: input, shape index: {}]
  %s1 = inlined_call_operand.vmem [shape: bf16[576,128], index: 1, kind: input, shape index: {}]
  %s2 = inlined_call_operand.vmem [shape: f32[1,128], index: 2, kind: input, shape index: {}]
  %s3 = inlined_call_operand.vmem [shape: f32[2,9,128], index: 3, kind: output, shape index: {}]
  %s4 = sld [smem:[#allocation0]]
  $region45: #{cnn_classifier_forward.6} parent=0
    _
  %s6 = ssub.s32 1, %s4
  %s7 = scalar_select 0, %s6, %s4
  loop: start=0, step=1, limit=4
  $region2: #{cnn_classifier_forward.6} parent=0 // loop_pre_header
    _
  $region3: #{cnn_classifier_forward.6} parent=0 // loop_header
    %s9 = sphi 0, %s13
    %p10 = scmp.ge.s32.totalorder %s9, 4
    %s19 = sphi 0, %s21
    %s22 = sphi 0, %s19
    %s23 = sphi 0, %s22
    %s39 = sphi 0, %s23
    %s43 = sphi 0, %s43
    %s45 = sphi 0, %s43
    %s46 = sphi 0, %s45
    %s60 = sphi 0, %s46
    %s64 = sphi 0, %s64
    %s66 = sphi 0, %s64
    %s67 = sphi 0, %s66
    %s81 = sphi 0, %s67
    %s87 = sphi 0, %s89
    %s90 = sphi 0, %s87
    %s91 = sphi 0, %s90
    %s107 = sphi 0, %s91
  $region4: #{cnn_classifier_forward.6} parent=0 // loop_header_branch
    %12 = sbr.rel (%p10) target = $region8
  $region5: #{cnn_classifier_forward.6} parent=0 // loop_body
    %s14 = ssub.s32 %s9, 1
    %s15 = ssub.s32 %s9, 2
    %s16 = sadd.s32 %s9, 1
    %s17 = ssub.s32 %s9, %s16
    %p18 = scmp.eq.s32.totalorder %s17, 0
    %s20 = sadd.s32 %s19, 1
    %s21 = scalar_select %p18, %s19, %s20
    %p24 = pneg %p18
    %p25 = scmp.eq.s32.totalorder %s9, 1
    %p26 = por %p24, %p25
    %p27 = scmp.ne.s32.totalorder %s19, %s22
    %p28 = scmp.eq.s32.totalorder %s9, 0
    %p29 = por %p27, %p28
    %p30 = scmp.ne.s32.totalorder %s19, %s22
    %p31 = scmp.eq.s32.totalorder %s14, 1
    %p32 = por %p30, %p31
    %p33 = scmp.ne.s32.totalorder %s22, %s23
    %p34 = scmp.eq.s32.totalorder %s14, 0
    %p35 = por %p33, %p34
    %p36 = scmp.ne.s32.totalorder %s22, %s23
    %p37 = scmp.eq.s32.totalorder %s15, 1
    %p38 = por %p36, %p37
    %p40 = scmp.ne.s32.totalorder %s23, %s39
    %p41 = scmp.eq.s32.totalorder %s15, 0
    %p42 = por %p40, %p41
    %s44 = sadd.s32 %s43, 1
    %p47 = scmp.eq.s32.totalorder %s9, 1
    %p48 = scmp.ne.s32.totalorder %s43, %s45
    %p49 = scmp.eq.s32.totalorder %s9, 0
    %p50 = por %p48, %p49
    %p51 = scmp.ne.s32.totalorder %s43, %s45
    %p52 = scmp.eq.s32.totalorder %s14, 1
    %p53 = por %p51, %p52
    %p54 = scmp.ne.s32.totalorder %s45, %s46
    %p55 = scmp.eq.s32.totalorder %s14, 0
    %p56 = por %p54, %p55
    %p57 = scmp.ne.s32.totalorder %s45, %s46
    %p58 = scmp.eq.s32.totalorder %s15, 1
    %p59 = por %p57, %p58
    %p61 = scmp.ne.s32.totalorder %s46, %s60
    %p62 = scmp.eq.s32.totalorder %s15, 0
    %p63 = por %p61, %p62
    %s65 = sadd.s32 %s64, 1
    %p68 = scmp.eq.s32.totalorder %s9, 1
    %p69 = scmp.ne.s32.totalorder %s64, %s66
    %p70 = scmp.eq.s32.totalorder %s9, 0
    %p71 = por %p69, %p70
    %p72 = scmp.ne.s32.totalorder %s64, %s66
    %p73 = scmp.eq.s32.totalorder %s14, 1
    %p74 = por %p72, %p73
    %p75 = scmp.ne.s32.totalorder %s66, %s67
    %p76 = scmp.eq.s32.totalorder %s14, 0
    %p77 = por %p75, %p76
    %p78 = scmp.ne.s32.totalorder %s66, %s67
    %p79 = scmp.eq.s32.totalorder %s15, 1
    %p80 = por %p78, %p79
    %p82 = scmp.ne.s32.totalorder %s67, %s81
    %p83 = scmp.eq.s32.totalorder %s15, 0
    %p84 = por %p82, %p83
    %s85 = ssub.s32 %s9, %s16
    %p86 = scmp.eq.s32.totalorder %s85, 0
    %s88 = sadd.s32 %s87, 1
    %s89 = scalar_select %p86, %s87, %s88
    %p92 = pneg %p86
    %p93 = scmp.eq.s32.totalorder %s9, 1
    %p94 = por %p92, %p93
    %p95 = scmp.ne.s32.totalorder %s87, %s90
    %p96 = scmp.eq.s32.totalorder %s9, 0
    %p97 = por %p95, %p96
    %p98 = scmp.ne.s32.totalorder %s87, %s90
    %p99 = scmp.eq.s32.totalorder %s14, 1
    %p100 = por %p98, %p99
    %p101 = scmp.ne.s32.totalorder %s90, %s91
    %p102 = scmp.eq.s32.totalorder %s14, 0
    %p103 = por %p101, %p102
    %p104 = scmp.ne.s32.totalorder %s90, %s91
    %p105 = scmp.eq.s32.totalorder %s15, 1
    %p106 = por %p104, %p105
    %p108 = scmp.ne.s32.totalorder %s91, %s107
    %p109 = scmp.eq.s32.totalorder %s15, 0
    %p110 = por %p108, %p109
    %p111 = scmp.le.s32.totalorder 1, %s9
    %p112 = scmp.lt.s32.totalorder %s9, 3
    %p113 = pnand %p111, %p112
    %p114 = pneg %p113
    // Predicated region
    $region9: #{cnn_classifier_forward.6} parent=5 // pred_check
      _
    $region10: #{cnn_classifier_forward.6} parent=5 // pred_check_branch
      %116 = sbr.rel (%p113) target = $region12
    $region11: #{cnn_classifier_forward.6} parent=5 // pred_region
      %s117 = ssub.s32 %s9, 1
      // Predicated region
      $region13: #{cnn_classifier_forward.6} parent=11 // pred_check
        %p118 = pneg %p56
      $region14: #{cnn_classifier_forward.6} parent=11 // pred_check_branch
        %120 = sbr.rel (%p118) target = $region16
      $region15: #{cnn_classifier_forward.6} parent=11 // pred_region
        _
      $region16: #{cnn_classifier_forward.6} parent=11 // pred_fallthru
        _
      // Predicated region
      $region17: #{cnn_classifier_forward.6} parent=11 // pred_check
        %p121 = pneg %p77
      $region18: #{cnn_classifier_forward.6} parent=11 // pred_check_branch
        %123 = sbr.rel (%p121) target = $region20
      $region19: #{cnn_classifier_forward.6} parent=11 // pred_region
        _
      $region20: #{cnn_classifier_forward.6} parent=11 // pred_fallthru
        _
    $region12: #{cnn_classifier_forward.6} parent=5 // pred_fallthru
      _
    %p124 = scmp.lt.s32.totalorder %s9, 2
    // Predicated region
    $region21: #{cnn_classifier_forward.6} parent=5 // pred_check
      %p125 = pneg %p124
    $region22: #{cnn_classifier_forward.6} parent=5 // pred_check_branch
      %127 = sbr.rel (%p125) target = $region24
    $region23: #{cnn_classifier_forward.6} parent=5 // pred_region
      // Predicated region
      $region25: #{cnn_classifier_forward.6} parent=23 // pred_check
        %p128 = pneg %p29
      $region26: #{cnn_classifier_forward.6} parent=23 // pred_check_branch
        %130 = sbr.rel (%p128) target = $region28
      $region27: #{cnn_classifier_forward.6} parent=23 // pred_region
        %p131 = scmp.lt.s32.totalorder %s9, 1
        %s132 = scalar_select %p131, %s9, 1
        %s133 = smul.addr %s132, 35
        %s134 = smul.addr %s133, 4
        %s135 = scalar_lea.vmem %s0, %s134
      $region28: #{cnn_classifier_forward.6} parent=23 // pred_fallthru
        _
    $region24: #{cnn_classifier_forward.6} parent=5 // pred_fallthru
      _
    %p136 = scmp.le.s32.totalorder 1, %s9
    %p137 = scmp.lt.s32.totalorder %s9, 3
    %p138 = pnand %p136, %p137
    %p139 = pneg %p138
    // Predicated region
    $region29: #{cnn_classifier_forward.6} parent=5 // pred_check
      _
    $region30: #{cnn_classifier_forward.6} parent=5 // pred_check_branch
      %141 = sbr.rel (%p138) target = $region32
    $region31: #{cnn_classifier_forward.6} parent=5 // pred_region
      %s142 = ssub.s32 %s9, 1
      %p143 = scmp.lt.s32.totalorder %s14, 1
      %s144 = scalar_select %p143, %s14, 1
      %s145 = smul.addr %s144, 35
      %s146 = smul.addr %s145, 4
      %s147 = scalar_lea.vmem %s0, %s146
      %p148 = pneg %p35
      %p149 = pneg %p32
      %p150 = pneg %p56
      %p151 = pneg %p53
      %p152 = pneg %p77
      %p153 = pneg %p74
      %p154 = pneg %p103
      %p155 = pneg %p100
      %p156 = scmp.lt.s32.totalorder %s14, 1
      %s157 = scalar_select %p156, %s14, 1
      %s158 = smul.addr %s157, 2
      %s159 = smul.addr %s158, 8
      %s160 = scalar_lea.vmem %s3, %s159
      %p161 = scmp.lt.s32.totalorder %s14, 1
      %s162 = scalar_select %p161, %s14, 1
      %s163 = smul.addr %s162, 35
      %s164 = smul.addr %s163, 4
      %s165 = scalar_lea.vmem %s0, %s164
      %p166 = scmp.lt.s32.totalorder %s14, 1
      %s167 = scalar_select %p166, %s14, 1
      %s168 = smul.addr %s167, 2
      %s169 = smul.addr %s168, 8
      %s170 = scalar_lea.vmem %s3, %s169
      %v172 = vld [vmem:[%s165] sm:$0xff]
      %v173 = vld [vmem:[%s165 + $0x8] sm:$0xff]
      %v174 = vld [vmem:[%s165 + $0x10] sm:$0xf]
      %v175 = vld [vmem:[%s165 + $0x14] sm:$0xff]
      %v176 = vld [vmem:[%s165 + $0x1c] sm:$0xff]
      %v177 = vld [vmem:[%s165 + $0x24] sm:$0xf]
      %v178 = vld [vmem:[%s165 + $0x28] sm:$0xff]
      %v179 = vld [vmem:[%s165 + $0x30] sm:$0xff]
      %v180 = vld [vmem:[%s165 + $0x38] sm:$0xf]
      %v181 = vld [vmem:[%s165 + $0x3c] sm:$0xff]
      %v182 = vld [vmem:[%s165 + $0x44] sm:$0xff]
      %v183 = vld [vmem:[%s165 + $0x4c] sm:$0xf]
      %v184 = vld [vmem:[%s165 + $0x50] sm:$0xff]
      %v185 = vld [vmem:[%s165 + $0x58] sm:$0xff]
      %v186 = vld [vmem:[%s165 + $0x60] sm:$0xf]
      %v187 = vld [vmem:[%s165 + $0x64] sm:$0xff]
      %v188 = vld [vmem:[%s165 + $0x6c] sm:$0xff]
      %v189 = vld [vmem:[%s165 + $0x74] sm:$0xf]
      %v190 = vld [vmem:[%s165 + $0x78] sm:$0x11]
      %v191 = vld [vmem:[%s165 + $0x80] sm:$0x11]
      %v192 = vld [vmem:[%s165 + $0x88] sm:$0x1]
      %v193 = vld [vmem:[%s1] sm:$0xf]
      %v194 = vld [vmem:[%s1 + $0x4] sm:$0xf]
      %v195 = vld [vmem:[%s1 + $0x8] sm:$0xf]
      %v196 = vld [vmem:[%s1 + $0xc] sm:$0xf]
      %v197 = vld [vmem:[%s1 + $0x10] sm:$0xf]
      %v198 = vld [vmem:[%s1 + $0x14] sm:$0xf]
      %v199 = vld [vmem:[%s1 + $0x18] sm:$0xf]
      %v200 = vld [vmem:[%s1 + $0x1c] sm:$0xf]
      %v201 = vld [vmem:[%s1 + $0x20] sm:$0xf]
      %v202 = vld [vmem:[%s1 + $0x24] sm:$0xf]
      %v203 = vld [vmem:[%s1 + $0x28] sm:$0xf]
      %v204 = vld [vmem:[%s1 + $0x2c] sm:$0xf]
      %v205 = vld [vmem:[%s1 + $0x30] sm:$0xf]
      %v206 = vld [vmem:[%s1 + $0x34] sm:$0xf]
      %v207 = vld [vmem:[%s1 + $0x38] sm:$0xf]
      %v208 = vld [vmem:[%s1 + $0x3c] sm:$0xf]
      %v209 = vld [vmem:[%s1 + $0x40] sm:$0xf]
      %v210 = vld [vmem:[%s1 + $0x44] sm:$0xf]
      %v211 = vld [vmem:[%s1 + $0x48] sm:$0xf]
      %v212 = vld [vmem:[%s1 + $0x4c] sm:$0xf]
      %v213 = vld [vmem:[%s1 + $0x50] sm:$0xf]
      %v214 = vld [vmem:[%s1 + $0x54] sm:$0xf]
      %v215 = vld [vmem:[%s1 + $0x58] sm:$0xf]
      %v216 = vld [vmem:[%s1 + $0x5c] sm:$0xf]
      %v217 = vld [vmem:[%s1 + $0x60] sm:$0xf]
      %v218 = vld [vmem:[%s1 + $0x64] sm:$0xf]
      %v219 = vld [vmem:[%s1 + $0x68] sm:$0xf]
      %v220 = vld [vmem:[%s1 + $0x6c] sm:$0xf]
      %v221 = vld [vmem:[%s1 + $0x70] sm:$0xf]
      %v222 = vld [vmem:[%s1 + $0x74] sm:$0xf]
      %v223 = vld [vmem:[%s1 + $0x78] sm:$0xf]
      %v224 = vld [vmem:[%s1 + $0x7c] sm:$0xf]
      %v225 = vld [vmem:[%s1 + $0x80] sm:$0xf]
      %v226 = vld [vmem:[%s1 + $0x84] sm:$0xf]
      %v227 = vld [vmem:[%s1 + $0x88] sm:$0xf]
      %v228 = vld [vmem:[%s1 + $0x8c] sm:$0xf]
      %v229 = vld [vmem:[%s1 + $0x90] sm:$0xf]
      %v230 = vld [vmem:[%s1 + $0x94] sm:$0xf]
      %v231 = vld [vmem:[%s1 + $0x98] sm:$0xf]
      %v232 = vld [vmem:[%s1 + $0x9c] sm:$0xf]
      %v233 = vld [vmem:[%s1 + $0xa0] sm:$0xf]
      %v234 = vld [vmem:[%s1 + $0xa4] sm:$0xf]
      %v235 = vld [vmem:[%s1 + $0xa8] sm:$0xf]
      %v236 = vld [vmem:[%s1 + $0xac] sm:$0xf]
      %v237 = vld [vmem:[%s1 + $0xb0] sm:$0xf]
      %v238 = vld [vmem:[%s1 + $0xb4] sm:$0xf]
      %v239 = vld [vmem:[%s1 + $0xb8] sm:$0xf]
      %v240 = vld [vmem:[%s1 + $0xbc] sm:$0xf]
      %v241 = vld [vmem:[%s1 + $0xc0] sm:$0xf]
      %v242 = vld [vmem:[%s1 + $0xc4] sm:$0xf]
      %v243 = vld [vmem:[%s1 + $0xc8] sm:$0xf]
      %v244 = vld [vmem:[%s1 + $0xcc] sm:$0xf]
      %v245 = vld [vmem:[%s1 + $0xd0] sm:$0xf]
      %v246 = vld [vmem:[%s1 + $0xd4] sm:$0xf]
      %v247 = vld [vmem:[%s1 + $0xd8] sm:$0xf]
      %v248 = vld [vmem:[%s1 + $0xdc] sm:$0xf]
      %v249 = vld [vmem:[%s1 + $0xe0] sm:$0xf]
      %v250 = vld [vmem:[%s1 + $0xe4] sm:$0xf]
      %v251 = vld [vmem:[%s1 + $0xe8] sm:$0xf]
      %v252 = vld [vmem:[%s1 + $0xec] sm:$0xf]
      %v253 = vld [vmem:[%s1 + $0xf0] sm:$0xf]
      %v254 = vld [vmem:[%s1 + $0xf4] sm:$0xf]
      %v255 = vld [vmem:[%s1 + $0xf8] sm:$0xf]
      %v256 = vld [vmem:[%s1 + $0xfc] sm:$0xf]
      %v257 = vld [vmem:[%s1 + $0x100] sm:$0xf]
      %v258 = vld [vmem:[%s1 + $0x104] sm:$0xf]
      %v259 = vld [vmem:[%s1 + $0x108] sm:$0xf]
      %v260 = vld [vmem:[%s1 + $0x10c] sm:$0xf]
      %v261 = vld [vmem:[%s1 + $0x110] sm:$0xf]
      %v262 = vld [vmem:[%s1 + $0x114] sm:$0xf]
      %v263 = vld [vmem:[%s1 + $0x118] sm:$0xf]
      %v264 = vld [vmem:[%s1 + $0x11c] sm:$0xf]
      %v265 = vld [vmem:[%s2] sm:$0x1]
      %v267 = vperm.slane %v265, 0
      %v290 = vunpack.c.l.b16 %v172
      %v291 = vunpack.c.h.b16 %v172
      %v292 = vunpack.c.l.b16 %v173
      %v293 = vunpack.c.h.b16 %v173
      %v294 = vunpack.c.l.b16 %v174
      %v295 = vunpack.c.l.b16 %v175
      %v296 = vunpack.c.h.b16 %v175
      %v297 = vunpack.c.l.b16 %v176
      %v298 = vunpack.c.h.b16 %v176
      %v299 = vunpack.c.l.b16 %v177
      %v300 = vunpack.c.l.b16 %v178
      %v301 = vunpack.c.h.b16 %v178
      %v302 = vunpack.c.l.b16 %v179
      %v303 = vunpack.c.h.b16 %v179
      %v304 = vunpack.c.l.b16 %v180
      %v305 = vunpack.c.l.b16 %v181
      %v306 = vunpack.c.h.b16 %v181
      %v307 = vunpack.c.l.b16 %v182
      %v308 = vunpack.c.h.b16 %v182
      %v309 = vunpack.c.l.b16 %v183
      %v310 = vunpack.c.l.b16 %v184
      %v311 = vunpack.c.h.b16 %v184
      %v312 = vunpack.c.l.b16 %v185
      %v313 = vunpack.c.h.b16 %v185
      %v314 = vunpack.c.l.b16 %v186
      %v315 = vunpack.c.l.b16 %v187
      %v316 = vunpack.c.h.b16 %v187
      %v317 = vunpack.c.l.b16 %v188
      %v318 = vunpack.c.h.b16 %v188
      %v319 = vunpack.c.l.b16 %v189
      %v320 = vunpack.c.l.b16 %v190
      %v321 = vunpack.c.h.b16 %v190
      %v322 = vunpack.c.l.b16 %v191
      %v323 = vunpack.c.h.b16 %v191
      %v324 = vunpack.c.l.b16 %v192
      %v325 = vpack.c.b16 %v295, %v290
      %v326 = vpack.c.b16 %v296, %v291
      %v327 = vpack.c.b16 %v297, %v292
      %v328 = vpack.c.b16 %v298, %v293
      %v329 = vpack.c.b16 %v299, %v294
      %v330 = vpack.c.b16 %v305, %v300
      %v331 = vpack.c.b16 %v306, %v301
      %v332 = vpack.c.b16 %v307, %v302
      %v333 = vpack.c.b16 %v308, %v303
      %v334 = vpack.c.b16 %v309, %v304
      %v335 = vpack.c.b16 %v315, %v310
      %v336 = vpack.c.b16 %v316, %v311
      %v337 = vpack.c.b16 %v317, %v312
      %v338 = vpack.c.b16 %v318, %v313
      %v339 = vpack.c.b16 %v319, %v314
      %v340 = vpack.c.b16 %v320, %v320
      %v341 = vpack.c.b16 %v321, %v321
      %v342 = vpack.c.b16 %v322, %v322
      %v343 = vpack.c.b16 %v323, %v323
      %v344 = vpack.c.b16 %v324, %v324
      %v433 = vunpack.c.l.b16 %v193
      %v434 = vunpack.c.l.b16 %v194
      %v435 = vunpack.c.l.b16 %v195
      %v436 = vunpack.c.l.b16 %v196
      %v437 = vunpack.c.l.b16 %v197
      %v438 = vunpack.c.l.b16 %v198
      %v439 = vunpack.c.l.b16 %v199
      %v440 = vunpack.c.l.b16 %v200
      %v441 = vunpack.c.l.b16 %v201
      %v442 = vunpack.c.l.b16 %v202
      %v443 = vunpack.c.l.b16 %v203
      %v444 = vunpack.c.l.b16 %v204
      %v445 = vunpack.c.l.b16 %v205
      %v446 = vunpack.c.l.b16 %v206
      %v447 = vunpack.c.l.b16 %v207
      %v448 = vunpack.c.l.b16 %v208
      %v449 = vunpack.c.l.b16 %v209
      %v450 = vunpack.c.l.b16 %v210
      %v451 = vunpack.c.l.b16 %v211
      %v452 = vunpack.c.l.b16 %v212
      %v453 = vunpack.c.l.b16 %v213
      %v454 = vunpack.c.l.b16 %v214
      %v455 = vunpack.c.l.b16 %v215
      %v456 = vunpack.c.l.b16 %v216
      %v457 = vunpack.c.l.b16 %v217
      %v458 = vunpack.c.l.b16 %v218
      %v459 = vunpack.c.l.b16 %v219
      %v460 = vunpack.c.l.b16 %v220
      %v461 = vunpack.c.l.b16 %v221
      %v462 = vunpack.c.l.b16 %v222
      %v463 = vunpack.c.l.b16 %v223
      %v464 = vunpack.c.l.b16 %v224
      %v465 = vunpack.c.l.b16 %v225
      %v466 = vunpack.c.l.b16 %v226
      %v467 = vunpack.c.l.b16 %v227
      %v468 = vunpack.c.l.b16 %v228
      %v469 = vunpack.c.l.b16 %v229
      %v470 = vunpack.c.l.b16 %v230
      %v471 = vunpack.c.l.b16 %v231
      %v472 = vunpack.c.l.b16 %v232
      %v473 = vunpack.c.l.b16 %v233
      %v474 = vunpack.c.l.b16 %v234
      %v475 = vunpack.c.l.b16 %v235
      %v476 = vunpack.c.l.b16 %v236
      %v477 = vunpack.c.l.b16 %v237
      %v478 = vunpack.c.l.b16 %v238
      %v479 = vunpack.c.l.b16 %v239
      %v480 = vunpack.c.l.b16 %v240
      %v481 = vunpack.c.l.b16 %v241
      %v482 = vunpack.c.l.b16 %v242
      %v483 = vunpack.c.l.b16 %v243
      %v484 = vunpack.c.l.b16 %v244
      %v485 = vunpack.c.l.b16 %v245
      %v486 = vunpack.c.l.b16 %v246
      %v487 = vunpack.c.l.b16 %v247
      %v488 = vunpack.c.l.b16 %v248
      %v489 = vunpack.c.l.b16 %v249
      %v490 = vunpack.c.l.b16 %v250
      %v491 = vunpack.c.l.b16 %v251
      %v492 = vunpack.c.l.b16 %v252
      %v493 = vunpack.c.l.b16 %v253
      %v494 = vunpack.c.l.b16 %v254
      %v495 = vunpack.c.l.b16 %v255
      %v496 = vunpack.c.l.b16 %v256
      %v497 = vunpack.c.l.b16 %v257
      %v498 = vunpack.c.l.b16 %v258
      %v499 = vunpack.c.l.b16 %v259
      %v500 = vunpack.c.l.b16 %v260
      %v501 = vunpack.c.l.b16 %v261
      %v502 = vunpack.c.l.b16 %v262
      %v503 = vunpack.c.l.b16 %v263
      %v504 = vunpack.c.l.b16 %v264
      %v505 = vpack.c.b16 %v434, %v433
      %v506 = vpack.c.b16 %v436, %v435
      %v507 = vpack.c.b16 %v438, %v437
      %v508 = vpack.c.b16 %v440, %v439
      %v509 = vpack.c.b16 %v442, %v441
      %v510 = vpack.c.b16 %v444, %v443
      %v511 = vpack.c.b16 %v446, %v445
      %v512 = vpack.c.b16 %v448, %v447
      %v513 = vpack.c.b16 %v450, %v449
      %v514 = vpack.c.b16 %v452, %v451
      %v515 = vpack.c.b16 %v454, %v453
      %v516 = vpack.c.b16 %v456, %v455
      %v517 = vpack.c.b16 %v458, %v457
      %v518 = vpack.c.b16 %v460, %v459
      %v519 = vpack.c.b16 %v462, %v461
      %v520 = vpack.c.b16 %v464, %v463
      %v521 = vpack.c.b16 %v466, %v465
      %v522 = vpack.c.b16 %v468, %v467
      %v523 = vpack.c.b16 %v470, %v469
      %v524 = vpack.c.b16 %v472, %v471
      %v525 = vpack.c.b16 %v474, %v473
      %v526 = vpack.c.b16 %v476, %v475
      %v527 = vpack.c.b16 %v478, %v477
      %v528 = vpack.c.b16 %v480, %v479
      %v529 = vpack.c.b16 %v482, %v481
      %v530 = vpack.c.b16 %v484, %v483
      %v531 = vpack.c.b16 %v486, %v485
      %v532 = vpack.c.b16 %v488, %v487
      %v533 = vpack.c.b16 %v490, %v489
      %v534 = vpack.c.b16 %v492, %v491
      %v535 = vpack.c.b16 %v494, %v493
      %v536 = vpack.c.b16 %v496, %v495
      %v537 = vpack.c.b16 %v498, %v497
      %v538 = vpack.c.b16 %v500, %v499
      %v539 = vpack.c.b16 %v502, %v501
      %v540 = vpack.c.b16 %v504, %v503
      %vm577 = vcmask 523264
      %v579 = vsel %vm577, %v329, 0
      %v582 = vsel %vm577, %v334, 0
      %v585 = vsel %vm577, %v339, 0
      %v588 = vsel %vm577, %v344, 0
      %590 = vmatpush.bf16.msra.mxu0 %v512
      %591 = vmatpush.bf16.msra.mxu0 %v511
      %592 = vmatpush.bf16.msra.mxu0 %v510
      %593 = vmatpush.bf16.msra.mxu0 %v509
      %594 = vmatpush.bf16.msra.mxu0 %v508
      %595 = vmatpush.bf16.msra.mxu0 %v507
      %596 = vmatpush.bf16.msra.mxu0 %v506
      %597 = vmatpush.bf16.msra.mxu0 %v505
      %598 = vmatmul.bf16.gmra.mxu0 %v325
      %v599 = vpop.f32.mrf.mxu0
      %v600 = vadd.f32 %v267, %v599
      %v601 = vpop.f32.mrf.mxu0
      %v602 = vadd.f32 %v267, %v601
      %603 = vmatmul.bf16.gmra.mxu0 %v330
      %v604 = vpop.f32.mrf.mxu0
      %v605 = vadd.f32 %v267, %v604
      %v606 = vpop.f32.mrf.mxu0
      %v607 = vadd.f32 %v267, %v606
      %608 = vmatmul.bf16.gmra.mxu0 %v335
      %v609 = vpop.f32.mrf.mxu0
      %v610 = vadd.f32 %v267, %v609
      %v611 = vpop.f32.mrf.mxu0
      %v612 = vadd.f32 %v267, %v611
      %613 = vmatmul.bf16.gmra.mxu0 %v340
      %v614 = vpop.f32.mrf.mxu0
      %v615 = vadd.f32 %v267, %v614
      %v616 = vpop.f32.mrf.mxu0
      %617 = vdwg.mxu0
      %618 = vmatpush.bf16.msra.mxu0 %v520
      %619 = vmatpush.bf16.msra.mxu0 %v519
      %620 = vmatpush.bf16.msra.mxu0 %v518
      %621 = vmatpush.bf16.msra.mxu0 %v517
      %622 = vmatpush.bf16.msra.mxu0 %v516
      %623 = vmatpush.bf16.msra.mxu0 %v515
      %624 = vmatpush.bf16.msra.mxu0 %v514
      %625 = vmatpush.bf16.msra.mxu0 %v513
      %626 = vmatmul.bf16.gmra.mxu0 %v326
      %v627 = vpop.f32.mrf.mxu0
      %v628 = vadd.f32 %v600, %v627
      %v629 = vpop.f32.mrf.mxu0
      %v630 = vadd.f32 %v602, %v629
      %631 = vmatmul.bf16.gmra.mxu0 %v331
      %v632 = vpop.f32.mrf.mxu0
      %v633 = vadd.f32 %v605, %v632
      %v634 = vpop.f32.mrf.mxu0
      %v635 = vadd.f32 %v607, %v634
      %636 = vmatmul.bf16.gmra.mxu0 %v336
      %v637 = vpop.f32.mrf.mxu0
      %v638 = vadd.f32 %v610, %v637
      %v639 = vpop.f32.mrf.mxu0
      %v640 = vadd.f32 %v612, %v639
      %641 = vmatmul.bf16.gmra.mxu0 %v341
      %v642 = vpop.f32.mrf.mxu0
      %v643 = vadd.f32 %v615, %v642
      %v644 = vpop.f32.mrf.mxu0
      %645 = vdwg.mxu0
      %646 = vmatpush.bf16.msra.mxu0 %v528
      %647 = vmatpush.bf16.msra.mxu0 %v527
      %648 = vmatpush.bf16.msra.mxu0 %v526
      %649 = vmatpush.bf16.msra.mxu0 %v525
      %650 = vmatpush.bf16.msra.mxu0 %v524
      %651 = vmatpush.bf16.msra.mxu0 %v523
      %652 = vmatpush.bf16.msra.mxu0 %v522
      %653 = vmatpush.bf16.msra.mxu0 %v521
      %654 = vmatmul.bf16.gmra.mxu0 %v327
      %v655 = vpop.f32.mrf.mxu0
      %v656 = vadd.f32 %v628, %v655
      %v657 = vpop.f32.mrf.mxu0
      %v658 = vadd.f32 %v630, %v657
      %659 = vmatmul.bf16.gmra.mxu0 %v332
      %v660 = vpop.f32.mrf.mxu0
      %v661 = vadd.f32 %v633, %v660
      %v662 = vpop.f32.mrf.mxu0
      %v663 = vadd.f32 %v635, %v662
      %664 = vmatmul.bf16.gmra.mxu0 %v337
      %v665 = vpop.f32.mrf.mxu0
      %v666 = vadd.f32 %v638, %v665
      %v667 = vpop.f32.mrf.mxu0
      %v668 = vadd.f32 %v640, %v667
      %669 = vmatmul.bf16.gmra.mxu0 %v342
      %v670 = vpop.f32.mrf.mxu0
      %v671 = vadd.f32 %v643, %v670
      %v672 = vpop.f32.mrf.mxu0
      %673 = vdwg.mxu0
      %674 = vmatpush.bf16.msra.mxu0 %v536
      %675 = vmatpush.bf16.msra.mxu0 %v535
      %676 = vmatpush.bf16.msra.mxu0 %v534
      %677 = vmatpush.bf16.msra.mxu0 %v533
      %678 = vmatpush.bf16.msra.mxu0 %v532
      %679 = vmatpush.bf16.msra.mxu0 %v531
      %680 = vmatpush.bf16.msra.mxu0 %v530
      %681 = vmatpush.bf16.msra.mxu0 %v529
      %682 = vmatmul.bf16.gmra.mxu0 %v328
      %v683 = vpop.f32.mrf.mxu0
      %v684 = vadd.f32 %v656, %v683
      %v685 = vpop.f32.mrf.mxu0
      %v686 = vadd.f32 %v658, %v685
      %687 = vmatmul.bf16.gmra.mxu0 %v333
      %v688 = vpop.f32.mrf.mxu0
      %v689 = vadd.f32 %v661, %v688
      %v690 = vpop.f32.mrf.mxu0
      %v691 = vadd.f32 %v663, %v690
      %692 = vmatmul.bf16.gmra.mxu0 %v338
      %v693 = vpop.f32.mrf.mxu0
      %v694 = vadd.f32 %v666, %v693
      %v695 = vpop.f32.mrf.mxu0
      %v696 = vadd.f32 %v668, %v695
      %697 = vmatmul.bf16.gmra.mxu0 %v343
      %v698 = vpop.f32.mrf.mxu0
      %v699 = vadd.f32 %v671, %v698
      %v700 = vpop.f32.mrf.mxu0
      %701 = vdwg.mxu0
      %702 = vmatpush.bf16.msra.mxu0 0
      %703 = vmatpush.bf16.msra.mxu0 0
      %704 = vmatpush.bf16.msra.mxu0 0
      %705 = vmatpush.bf16.msra.mxu0 0
      %706 = vmatpush.bf16.msra.mxu0 %v540
      %707 = vmatpush.bf16.msra.mxu0 %v539
      %708 = vmatpush.bf16.msra.mxu0 %v538
      %709 = vmatpush.bf16.msra.mxu0 %v537
      %710 = vmatmul.bf16.gmra.mxu0 %v579
      %v711 = vpop.f32.mrf.mxu0
      %v712 = vadd.f32 %v684, %v711
      %v713 = vpop.f32.mrf.mxu0
      %v714 = vadd.f32 %v686, %v713
      %715 = vmatmul.bf16.gmra.mxu0 %v582
      %v716 = vpop.f32.mrf.mxu0
      %v717 = vadd.f32 %v689, %v716
      %v718 = vpop.f32.mrf.mxu0
      %v719 = vadd.f32 %v691, %v718
      %720 = vmatmul.bf16.gmra.mxu0 %v585
      %v721 = vpop.f32.mrf.mxu0
      %v722 = vadd.f32 %v694, %v721
      %v723 = vpop.f32.mrf.mxu0
      %v724 = vadd.f32 %v696, %v723
      %725 = vmatmul.bf16.gmra.mxu0 %v588
      %v726 = vpop.f32.mrf.mxu0
      %v727 = vadd.f32 %v699, %v726
      %v728 = vpop.f32.mrf.mxu0
      %729 = vdwg.mxu0
      %v730 = vmax.f32 %v712, 0.0
      %v731 = vmax.f32 %v714, 0.0
      %v732 = vmax.f32 %v717, 0.0
      %v733 = vmax.f32 %v719, 0.0
      %v734 = vmax.f32 %v722, 0.0
      %v735 = vmax.f32 %v724, 0.0
      %v736 = vmax.f32 %v727, 0.0
      %737 = vst [vmem:[#allocation2] sm:$0xff] %v730
      %738 = vst [vmem:[#allocation2 + $0x8] sm:$0xff] %v731
      %739 = vst [vmem:[#allocation2 + $0x10] sm:$0xff] %v732
      %740 = vst [vmem:[#allocation2 + $0x18] sm:$0xff] %v733
      %741 = vst [vmem:[#allocation2 + $0x20] sm:$0xff] %v734
      %742 = vst [vmem:[#allocation2 + $0x28] sm:$0xff] %v735
      %743 = vst [vmem:[#allocation2 + $0x30] sm:$0x1] %v736
      %v744 = vld [vmem:[#allocation2] sm:$0x7f]
      %v745 = vld [vmem:[#allocation2 + $0x7] sm:$0x7f]
      %v746 = vmax.f32 %v744, %v745
      %747 = vst [vmem:[#allocation3] sm:$0x7f] %v746
      %v748 = vld [vmem:[#allocation2 + $0xe] sm:$0x7f]
      %v749 = vld [vmem:[#allocation2 + $0x15] sm:$0x7f]
      %v750 = vmax.f32 %v748, %v749
      %751 = vst [vmem:[#allocation3 + $0x7] sm:$0x7f] %v750
      %v752 = vld [vmem:[#allocation2 + $0x1c] sm:$0x7f]
      %v753 = vld [vmem:[#allocation2 + $0x23] sm:$0x7f]
      %v754 = vmax.f32 %v752, %v753
      %755 = vst [vmem:[#allocation3 + $0xe] sm:$0x7f] %v754
      %v756 = vld [vmem:[#allocation3] ss:$2 sm:$0x7]
      %s757 = scalar_lea.vmem [#allocation3], 1
      %v758 = vld [vmem:[%s757] ss:$2 sm:$0x7]
      %v759 = vmax.f32 %v756, %v758
      %s760 = scalar_lea.vmem [#allocation3], 7
      %v761 = vld [vmem:[%s760] ss:$2 sm:$0x7]
      %s762 = scalar_lea.vmem [#allocation3], 8
      %v763 = vld [vmem:[%s762] ss:$2 sm:$0x7]
      %v764 = vmax.f32 %v761, %v763
      %s765 = scalar_lea.vmem [#allocation3], 14
      %v766 = vld [vmem:[%s765] ss:$2 sm:$0x7]
      %s767 = scalar_lea.vmem [#allocation3], 15
      %v768 = vld [vmem:[%s767] ss:$2 sm:$0x7]
      %v769 = vmax.f32 %v766, %v768
      %v771 = vrot.slane %v764, 5
      %v774 = vrot.slane %v769, 2
      %vm776 = vcmask 1042432
      %v777 = vsel %vm776, %v759, %v771
      %vm778 = vcmask 1045504
      %v779 = vsel %vm778, %v777, %v774
      %780 = vst [vmem:[%s170] sm:$0xff] %v779
      %781 = vst [vmem:[%s170 + $0x8] sm:$0x1] %v774
      %p782 = scmp.lt.s32.totalorder %s14, 1
      %s783 = scalar_select %p782, %s14, 1
      %s784 = smul.addr %s783, 2
      %s785 = smul.addr %s784, 8
      %s786 = scalar_lea.vmem %s3, %s785
      // Predicated region
      $region33: #{cnn_classifier_forward.6} parent=31 // pred_check
        %p787 = pneg %p100
      $region34: #{cnn_classifier_forward.6} parent=31 // pred_check_branch
        %789 = sbr.rel (%p787) target = $region36
      $region35: #{cnn_classifier_forward.6} parent=31 // pred_region
        _
      $region36: #{cnn_classifier_forward.6} parent=31 // pred_fallthru
        _
    $region32: #{cnn_classifier_forward.6} parent=5 // pred_fallthru
      _
    %p790 = scmp.le.s32.totalorder 2, %s9
    // Predicated region
    $region37: #{cnn_classifier_forward.6} parent=5 // pred_check
      %p791 = pneg %p790
    $region38: #{cnn_classifier_forward.6} parent=5 // pred_check_branch
      %793 = sbr.rel (%p791) target = $region40
    $region39: #{cnn_classifier_forward.6} parent=5 // pred_region
      %s794 = ssub.s32 %s9, 2
      // Predicated region
      $region41: #{cnn_classifier_forward.6} parent=39 // pred_check
        %p795 = pneg %p106
      $region42: #{cnn_classifier_forward.6} parent=39 // pred_check_branch
        %797 = sbr.rel (%p795) target = $region44
      $region43: #{cnn_classifier_forward.6} parent=39 // pred_region
        %p798 = scmp.lt.s32.totalorder %s15, 1
        %s799 = scalar_select %p798, %s15, 1
        %s800 = smul.addr %s799, 2
        %s801 = smul.addr %s800, 8
        %s802 = scalar_lea.vmem %s3, %s801
      $region44: #{cnn_classifier_forward.6} parent=39 // pred_fallthru
        _
    $region40: #{cnn_classifier_forward.6} parent=5 // pred_fallthru
      _
  $region6: #{cnn_classifier_forward.6} parent=0 // loop_footer
    %s13 = sadd.s32 1, %s9
  $region7: #{cnn_classifier_forward.6} parent=0 // loop_footer_branch
    %8 = sbr.rel target = $region3
  $region8: #{cnn_classifier_forward.6} parent=0 // loop_exit
    _

// kernel: cnn_classifier_forward.7
$region0: #{cnn_classifier_forward.7}
  #allocation0 [shape = 'u32[]', space=smem, size = 0x4, offset = 0x4, fixed_abs, tag = 'smem constant byte address 0x4 - core index']
  #allocation1 [shape = 'u32[72,128]{1,0:T(1,128)}', space=vmem, size = 0x9000, scoped, tag = 'internal scratch']
  #allocation2 [shape = 'f32[9,256]{1,0:T(8,128)}', space=vmem, size = 0x4000, scoped, tag = 'scratch operand']
  %s0 = inlined_call_operand.vmem [shape: bf16[2,9,1152], index: 0, kind: input, shape index: {}]
  %s1 = inlined_call_operand.vmem [shape: bf16[1152,256], index: 1, kind: input, shape index: {}]
  %s2 = inlined_call_operand.vmem [shape: f32[1,256], index: 2, kind: input, shape index: {}]
  %s3 = inlined_call_operand.vmem [shape: bf16[256,10], index: 3, kind: input, shape index: {}]
  %s4 = inlined_call_operand.vmem [shape: f32[1,10], index: 4, kind: input, shape index: {}]
  %s5 = inlined_call_operand.hbm [shape: f32[2,1,10], index: 5, kind: output, shape index: {}]
  %s6 = sld [smem:[#allocation0]]
  $region53: #{cnn_classifier_forward.7} parent=0
    _
  %s8 = ssub.s32 1, %s6
  %s9 = scalar_select 0, %s8, %s6
  $region1: #{cnn_classifier_forward.7} parent=0
    #allocation3 [shape = 'u8[1024]{0}', space=vmem, size = 0x400, scoped, tag = 'output window, operand 0']
    #allocation4 [shape = 's32[2]{0}', space=sflag, size = 0x8, scoped, tag = 'scoped memory for cnn_classifier_forward.7']
    %10 = vsyncpa [#allocation4], 0
    %s11 = scalar_lea.sflag [#allocation4], 1
    %12 = vsyncpa %s11, 0
    loop: start=0, step=1, limit=4
    $region2: #{cnn_classifier_forward.7} parent=1 // loop_pre_header
      _
    $region3: #{cnn_classifier_forward.7} parent=1 // loop_header
      %s14 = sphi 0, %s18
      %p15 = scmp.ge.s32.totalorder %s14, 4
      %s24 = sphi 0, %s26
      %s27 = sphi 0, %s24
      %s28 = sphi 0, %s27
      %s44 = sphi 0, %s28
      %s48 = sphi 0, %s48
      %s50 = sphi 0, %s48
      %s51 = sphi 0, %s50
      %s65 = sphi 0, %s51
      %s69 = sphi 0, %s69
      %s71 = sphi 0, %s69
      %s72 = sphi 0, %s71
      %s86 = sphi 0, %s72
      %s90 = sphi 0, %s90
      %s92 = sphi 0, %s90
      %s93 = sphi 0, %s92
      %s107 = sphi 0, %s93
      %s111 = sphi 0, %s111
      %s113 = sphi 0, %s111
      %s114 = sphi 0, %s113
      %s128 = sphi 0, %s114
      %s134 = sphi 0, %s136
      %s137 = sphi 0, %s134
      %s138 = sphi 0, %s137
      %s154 = sphi 0, %s138
    $region4: #{cnn_classifier_forward.7} parent=1 // loop_header_branch
      %17 = sbr.rel (%p15) target = $region8
    $region5: #{cnn_classifier_forward.7} parent=1 // loop_body
      %s19 = ssub.s32 %s14, 1
      %s20 = ssub.s32 %s14, 2
      %s21 = sadd.s32 %s14, 1
      %s22 = ssub.s32 %s14, %s21
      %p23 = scmp.eq.s32.totalorder %s22, 0
      %s25 = sadd.s32 %s24, 1
      %s26 = scalar_select %p23, %s24, %s25
      %p29 = pneg %p23
      %p30 = scmp.eq.s32.totalorder %s14, 1
      %p31 = por %p29, %p30
      %p32 = scmp.ne.s32.totalorder %s24, %s27
      %p33 = scmp.eq.s32.totalorder %s14, 0
      %p34 = por %p32, %p33
      %p35 = scmp.ne.s32.totalorder %s24, %s27
      %p36 = scmp.eq.s32.totalorder %s19, 1
      %p37 = por %p35, %p36
      %p38 = scmp.ne.s32.totalorder %s27, %s28
      %p39 = scmp.eq.s32.totalorder %s19, 0
      %p40 = por %p38, %p39
      %p41 = scmp.ne.s32.totalorder %s27, %s28
      %p42 = scmp.eq.s32.totalorder %s20, 1
      %p43 = por %p41, %p42
      %p45 = scmp.ne.s32.totalorder %s28, %s44
      %p46 = scmp.eq.s32.totalorder %s20, 0
      %p47 = por %p45, %p46
      %s49 = sadd.s32 %s48, 1
      %p52 = scmp.eq.s32.totalorder %s14, 1
      %p53 = scmp.ne.s32.totalorder %s48, %s50
      %p54 = scmp.eq.s32.totalorder %s14, 0
      %p55 = por %p53, %p54
      %p56 = scmp.ne.s32.totalorder %s48, %s50
      %p57 = scmp.eq.s32.totalorder %s19, 1
      %p58 = por %p56, %p57
      %p59 = scmp.ne.s32.totalorder %s50, %s51
      %p60 = scmp.eq.s32.totalorder %s19, 0
      %p61 = por %p59, %p60
      %p62 = scmp.ne.s32.totalorder %s50, %s51
      %p63 = scmp.eq.s32.totalorder %s20, 1
      %p64 = por %p62, %p63
      %p66 = scmp.ne.s32.totalorder %s51, %s65
      %p67 = scmp.eq.s32.totalorder %s20, 0
      %p68 = por %p66, %p67
      %s70 = sadd.s32 %s69, 1
      %p73 = scmp.eq.s32.totalorder %s14, 1
      %p74 = scmp.ne.s32.totalorder %s69, %s71
      %p75 = scmp.eq.s32.totalorder %s14, 0
      %p76 = por %p74, %p75
      %p77 = scmp.ne.s32.totalorder %s69, %s71
      %p78 = scmp.eq.s32.totalorder %s19, 1
      %p79 = por %p77, %p78
      %p80 = scmp.ne.s32.totalorder %s71, %s72
      %p81 = scmp.eq.s32.totalorder %s19, 0
      %p82 = por %p80, %p81
      %p83 = scmp.ne.s32.totalorder %s71, %s72
      %p84 = scmp.eq.s32.totalorder %s20, 1
      %p85 = por %p83, %p84
      %p87 = scmp.ne.s32.totalorder %s72, %s86
      %p88 = scmp.eq.s32.totalorder %s20, 0
      %p89 = por %p87, %p88
      %s91 = sadd.s32 %s90, 1
      %p94 = scmp.eq.s32.totalorder %s14, 1
      %p95 = scmp.ne.s32.totalorder %s90, %s92
      %p96 = scmp.eq.s32.totalorder %s14, 0
      %p97 = por %p95, %p96
      %p98 = scmp.ne.s32.totalorder %s90, %s92
      %p99 = scmp.eq.s32.totalorder %s19, 1
      %p100 = por %p98, %p99
      %p101 = scmp.ne.s32.totalorder %s92, %s93
      %p102 = scmp.eq.s32.totalorder %s19, 0
      %p103 = por %p101, %p102
      %p104 = scmp.ne.s32.totalorder %s92, %s93
      %p105 = scmp.eq.s32.totalorder %s20, 1
      %p106 = por %p104, %p105
      %p108 = scmp.ne.s32.totalorder %s93, %s107
      %p109 = scmp.eq.s32.totalorder %s20, 0
      %p110 = por %p108, %p109
      %s112 = sadd.s32 %s111, 1
      %p115 = scmp.eq.s32.totalorder %s14, 1
      %p116 = scmp.ne.s32.totalorder %s111, %s113
      %p117 = scmp.eq.s32.totalorder %s14, 0
      %p118 = por %p116, %p117
      %p119 = scmp.ne.s32.totalorder %s111, %s113
      %p120 = scmp.eq.s32.totalorder %s19, 1
      %p121 = por %p119, %p120
      %p122 = scmp.ne.s32.totalorder %s113, %s114
      %p123 = scmp.eq.s32.totalorder %s19, 0
      %p124 = por %p122, %p123
      %p125 = scmp.ne.s32.totalorder %s113, %s114
      %p126 = scmp.eq.s32.totalorder %s20, 1
      %p127 = por %p125, %p126
      %p129 = scmp.ne.s32.totalorder %s114, %s128
      %p130 = scmp.eq.s32.totalorder %s20, 0
      %p131 = por %p129, %p130
      %s132 = ssub.s32 %s14, %s21
      %p133 = scmp.eq.s32.totalorder %s132, 0
      %s135 = sadd.s32 %s134, 1
      %s136 = scalar_select %p133, %s134, %s135
      %p139 = pneg %p133
      %p140 = scmp.eq.s32.totalorder %s14, 1
      %p141 = por %p139, %p140
      %p142 = scmp.ne.s32.totalorder %s134, %s137
      %p143 = scmp.eq.s32.totalorder %s14, 0
      %p144 = por %p142, %p143
      %p145 = scmp.ne.s32.totalorder %s134, %s137
      %p146 = scmp.eq.s32.totalorder %s19, 1
      %p147 = por %p145, %p146
      %p148 = scmp.ne.s32.totalorder %s137, %s138
      %p149 = scmp.eq.s32.totalorder %s19, 0
      %p150 = por %p148, %p149
      %p151 = scmp.ne.s32.totalorder %s137, %s138
      %p152 = scmp.eq.s32.totalorder %s20, 1
      %p153 = por %p151, %p152
      %p155 = scmp.ne.s32.totalorder %s138, %s154
      %p156 = scmp.eq.s32.totalorder %s20, 0
      %p157 = por %p155, %p156
      %p158 = scmp.le.s32.totalorder 1, %s14
      %p159 = scmp.lt.s32.totalorder %s14, 3
      %p160 = pnand %p158, %p159
      %p161 = pneg %p160
      // Predicated region
      $region9: #{cnn_classifier_forward.7} parent=5 // pred_check
        _
      $region10: #{cnn_classifier_forward.7} parent=5 // pred_check_branch
        %163 = sbr.rel (%p160) target = $region12
      $region11: #{cnn_classifier_forward.7} parent=5 // pred_region
        %s164 = ssub.s32 %s14, 1
        // Predicated region
        $region13: #{cnn_classifier_forward.7} parent=11 // pred_check
          %p165 = pneg %p61
        $region14: #{cnn_classifier_forward.7} parent=11 // pred_check_branch
          %167 = sbr.rel (%p165) target = $region16
        $region15: #{cnn_classifier_forward.7} parent=11 // pred_region
          _
        $region16: #{cnn_classifier_forward.7} parent=11 // pred_fallthru
          _
        // Predicated region
        $region17: #{cnn_classifier_forward.7} parent=11 // pred_check
          %p168 = pneg %p82
        $region18: #{cnn_classifier_forward.7} parent=11 // pred_check_branch
          %170 = sbr.rel (%p168) target = $region20
        $region19: #{cnn_classifier_forward.7} parent=11 // pred_region
          _
        $region20: #{cnn_classifier_forward.7} parent=11 // pred_fallthru
          _
        // Predicated region
        $region21: #{cnn_classifier_forward.7} parent=11 // pred_check
          %p171 = pneg %p103
        $region22: #{cnn_classifier_forward.7} parent=11 // pred_check_branch
          %173 = sbr.rel (%p171) target = $region24
        $region23: #{cnn_classifier_forward.7} parent=11 // pred_region
          _
        $region24: #{cnn_classifier_forward.7} parent=11 // pred_fallthru
          _
        // Predicated region
        $region25: #{cnn_classifier_forward.7} parent=11 // pred_check
          %p174 = pneg %p124
        $region26: #{cnn_classifier_forward.7} parent=11 // pred_check_branch
          %176 = sbr.rel (%p174) target = $region28
        $region27: #{cnn_classifier_forward.7} parent=11 // pred_region
          _
        $region28: #{cnn_classifier_forward.7} parent=11 // pred_fallthru
          _
      $region12: #{cnn_classifier_forward.7} parent=5 // pred_fallthru
        _
      %p177 = scmp.lt.s32.totalorder %s14, 2
      // Predicated region
      $region29: #{cnn_classifier_forward.7} parent=5 // pred_check
        %p178 = pneg %p177
      $region30: #{cnn_classifier_forward.7} parent=5 // pred_check_branch
        %180 = sbr.rel (%p178) target = $region32
      $region31: #{cnn_classifier_forward.7} parent=5 // pred_region
        // Predicated region
        $region33: #{cnn_classifier_forward.7} parent=31 // pred_check
          %p181 = pneg %p34
        $region34: #{cnn_classifier_forward.7} parent=31 // pred_check_branch
          %183 = sbr.rel (%p181) target = $region36
        $region35: #{cnn_classifier_forward.7} parent=31 // pred_region
          %p184 = scmp.lt.s32.totalorder %s14, 1
          %s185 = scalar_select %p184, %s14, 1
          %s186 = smul.addr %s185, 18
          %s187 = smul.addr %s186, 4
          %s188 = scalar_lea.vmem %s0, %s187
        $region36: #{cnn_classifier_forward.7} parent=31 // pred_fallthru
          _
      $region32: #{cnn_classifier_forward.7} parent=5 // pred_fallthru
        _
      %p189 = scmp.le.s32.totalorder 1, %s14
      %p190 = scmp.lt.s32.totalorder %s14, 3
      %p191 = pnand %p189, %p190
      %p192 = pneg %p191
      // Predicated region
      $region37: #{cnn_classifier_forward.7} parent=5 // pred_check
        _
      $region38: #{cnn_classifier_forward.7} parent=5 // pred_check_branch
        %194 = sbr.rel (%p191) target = $region40
      $region39: #{cnn_classifier_forward.7} parent=5 // pred_region
        %s195 = ssub.s32 %s14, 1
        %p196 = scmp.lt.s32.totalorder %s19, 1
        %s197 = scalar_select %p196, %s19, 1
        %s198 = smul.addr %s197, 18
        %s199 = smul.addr %s198, 4
        %s200 = scalar_lea.vmem %s0, %s199
        %p201 = pneg %p40
        %p202 = pneg %p37
        %p203 = pneg %p61
        %p204 = pneg %p58
        %p205 = pneg %p82
        %p206 = pneg %p79
        %p207 = pneg %p103
        %p208 = pneg %p100
        %p209 = pneg %p124
        %p210 = pneg %p121
        %p211 = pneg %p150
        %p212 = pneg %p147
        %s213 = sand.u32 %s137, 1
        %s214 = scalar_lea.sflag [#allocation4], %s213
        %s215 = sand.u32 %s137, 1
        %s216 = scalar_lea.vmem [#allocation3], %s215
        %p217 = scmp.lt.s32.totalorder %s19, 1
        %s218 = scalar_select %p217, %s19, 1
        %s219 = smul.addr %s218, 18
        %s220 = smul.addr %s219, 4
        %s221 = scalar_lea.vmem %s0, %s220
        %v222 = vld [vmem:[%s221] sm:$0xff]
        %v223 = vld [vmem:[%s221 + $0x8] sm:$0xff]
        %v224 = vld [vmem:[%s221 + $0x10] sm:$0xff]
        %v225 = vld [vmem:[%s221 + $0x18] sm:$0xff]
        %v226 = vld [vmem:[%s221 + $0x20] sm:$0xf]
        %v227 = vld [vmem:[%s221 + $0x24] sm:$0x11]
        %v228 = vld [vmem:[%s221 + $0x2c] sm:$0x11]
        %v229 = vld [vmem:[%s221 + $0x34] sm:$0x11]
        %v230 = vld [vmem:[%s221 + $0x3c] sm:$0x11]
        %v231 = vld [vmem:[%s221 + $0x44] sm:$0x1]
        %v232 = vld [vmem:[%s1] sm:$0xff]
        %v233 = vld [vmem:[%s1 + $0x8] sm:$0xff]
        %v234 = vld [vmem:[%s1 + $0x10] sm:$0xff]
        %v235 = vld [vmem:[%s1 + $0x18] sm:$0xff]
        %v236 = vld [vmem:[%s1 + $0x20] sm:$0xff]
        %v237 = vld [vmem:[%s1 + $0x28] sm:$0xff]
        %v238 = vld [vmem:[%s1 + $0x30] sm:$0xff]
        %v239 = vld [vmem:[%s1 + $0x38] sm:$0xff]
        %v240 = vld [vmem:[%s1 + $0x40] sm:$0xff]
        %v241 = vld [vmem:[%s1 + $0x48] sm:$0xff]
        %v242 = vld [vmem:[%s1 + $0x50] sm:$0xff]
        %v243 = vld [vmem:[%s1 + $0x58] sm:$0xff]
        %v244 = vld [vmem:[%s1 + $0x60] sm:$0xff]
        %v245 = vld [vmem:[%s1 + $0x68] sm:$0xff]
        %v246 = vld [vmem:[%s1 + $0x70] sm:$0xff]
        %v247 = vld [vmem:[%s1 + $0x78] sm:$0xff]
        %v248 = vld [vmem:[%s1 + $0x80] sm:$0xff]
        %v249 = vld [vmem:[%s1 + $0x88] sm:$0xff]
        %v250 = vld [vmem:[%s1 + $0x90] sm:$0xff]
        %v251 = vld [vmem:[%s1 + $0x98] sm:$0xff]
        %v252 = vld [vmem:[%s1 + $0xa0] sm:$0xff]
        %v253 = vld [vmem:[%s1 + $0xa8] sm:$0xff]
        %v254 = vld [vmem:[%s1 + $0xb0] sm:$0xff]
        %v255 = vld [vmem:[%s1 + $0xb8] sm:$0xff]
        %v256 = vld [vmem:[%s1 + $0xc0] sm:$0xff]
        %v257 = vld [vmem:[%s1 + $0xc8] sm:$0xff]
        %v258 = vld [vmem:[%s1 + $0xd0] sm:$0xff]
        %v259 = vld [vmem:[%s1 + $0xd8] sm:$0xff]
        %v260 = vld [vmem:[%s1 + $0xe0] sm:$0xff]
        %v261 = vld [vmem:[%s1 + $0xe8] sm:$0xff]
        %v262 = vld [vmem:[%s1 + $0xf0] sm:$0xff]
        %v263 = vld [vmem:[%s1 + $0xf8] sm:$0xff]
        %v264 = vld [vmem:[%s1 + $0x100] sm:$0xff]
        %v265 = vld [vmem:[%s1 + $0x108] sm:$0xff]
        %v266 = vld [vmem:[%s1 + $0x110] sm:$0xff]
        %v267 = vld [vmem:[%s1 + $0x118] sm:$0xff]
        %v268 = vld [vmem:[%s1 + $0x120] sm:$0xff]
        %v269 = vld [vmem:[%s1 + $0x128] sm:$0xff]
        %v270 = vld [vmem:[%s1 + $0x130] sm:$0xff]
        %v271 = vld [vmem:[%s1 + $0x138] sm:$0xff]
        %v272 = vld [vmem:[%s1 + $0x140] sm:$0xff]
        %v273 = vld [vmem:[%s1 + $0x148] sm:$0xff]
        %v274 = vld [vmem:[%s1 + $0x150] sm:$0xff]
        %v275 = vld [vmem:[%s1 + $0x158] sm:$0xff]
        %v276 = vld [vmem:[%s1 + $0x160] sm:$0xff]
        %v277 = vld [vmem:[%s1 + $0x168] sm:$0xff]
        %v278 = vld [vmem:[%s1 + $0x170] sm:$0xff]
        %v279 = vld [vmem:[%s1 + $0x178] sm:$0xff]
        %v280 = vld [vmem:[%s1 + $0x180] sm:$0xff]
        %v281 = vld [vmem:[%s1 + $0x188] sm:$0xff]
        %v282 = vld [vmem:[%s1 + $0x190] sm:$0xff]
        %v283 = vld [vmem:[%s1 + $0x198] sm:$0xff]
        %v284 = vld [vmem:[%s1 + $0x1a0] sm:$0xff]
        %v285 = vld [vmem:[%s1 + $0x1a8] sm:$0xff]
        %v286 = vld [vmem:[%s1 + $0x1b0] sm:$0xff]
        %v287 = vld [vmem:[%s1 + $0x1b8] sm:$0xff]
        %v288 = vld [vmem:[%s1 + $0x1c0] sm:$0xff]
        %v289 = vld [vmem:[%s1 + $0x1c8] sm:$0xff]
        %v290 = vld [vmem:[%s1 + $0x1d0] sm:$0xff]
        %v291 = vld [vmem:[%s1 + $0x1d8] sm:$0xff]
        %v292 = vld [vmem:[%s1 + $0x1e0] sm:$0xff]
        %v293 = vld [vmem:[%s1 + $0x1e8] sm:$0xff]
        %v294 = vld [vmem:[%s1 + $0x1f0] sm:$0xff]
        %v295 = vld [vmem:[%s1 + $0x1f8] sm:$0xff]
        %v296 = vld [vmem:[%s1 + $0x200] sm:$0xff]
        %v297 = vld [vmem:[%s1 + $0x208] sm:$0xff]
        %v298 = vld [vmem:[%s1 + $0x210] sm:$0xff]
        %v299 = vld [vmem:[%s1 + $0x218] sm:$0xff]
        %v300 = vld [vmem:[%s1 + $0x220] sm:$0xff]
        %v301 = vld [vmem:[%s1 + $0x228] sm:$0xff]
        %v302 = vld [vmem:[%s1 + $0x230] sm:$0xff]
        %v303 = vld [vmem:[%s1 + $0x238] sm:$0xff]
        %v304 = vld [vmem:[%s1 + $0x240] sm:$0xff]
        %v305 = vld [vmem:[%s1 + $0x248] sm:$0xff]
        %v306 = vld [vmem:[%s1 + $0x250] sm:$0xff]
        %v307 = vld [vmem:[%s1 + $0x258] sm:$0xff]
        %v308 = vld [vmem:[%s1 + $0x260] sm:$0xff]
        %v309 = vld [vmem:[%s1 + $0x268] sm:$0xff]
        %v310 = vld [vmem:[%s1 + $0x270] sm:$0xff]
        %v311 = vld [vmem:[%s1 + $0x278] sm:$0xff]
        %v312 = vld [vmem:[%s1 + $0x280] sm:$0xff]
        %v313 = vld [vmem:[%s1 + $0x288] sm:$0xff]
        %v314 = vld [vmem:[%s1 + $0x290] sm:$0xff]
        %v315 = vld [vmem:[%s1 + $0x298] sm:$0xff]
        %v316 = vld [vmem:[%s1 + $0x2a0] sm:$0xff]
        %v317 = vld [vmem:[%s1 + $0x2a8] sm:$0xff]
        %v318 = vld [vmem:[%s1 + $0x2b0] sm:$0xff]
        %v319 = vld [vmem:[%s1 + $0x2b8] sm:$0xff]
        %v320 = vld [vmem:[%s1 + $0x2c0] sm:$0xff]
        %v321 = vld [vmem:[%s1 + $0x2c8] sm:$0xff]
        %v322 = vld [vmem:[%s1 + $0x2d0] sm:$0xff]
        %v323 = vld [vmem:[%s1 + $0x2d8] sm:$0xff]
        %v324 = vld [vmem:[%s1 + $0x2e0] sm:$0xff]
        %v325 = vld [vmem:[%s1 + $0x2e8] sm:$0xff]
        %v326 = vld [vmem:[%s1 + $0x2f0] sm:$0xff]
        %v327 = vld [vmem:[%s1 + $0x2f8] sm:$0xff]
        %v328 = vld [vmem:[%s1 + $0x300] sm:$0xff]
        %v329 = vld [vmem:[%s1 + $0x308] sm:$0xff]
        %v330 = vld [vmem:[%s1 + $0x310] sm:$0xff]
        %v331 = vld [vmem:[%s1 + $0x318] sm:$0xff]
        %v332 = vld [vmem:[%s1 + $0x320] sm:$0xff]
        %v333 = vld [vmem:[%s1 + $0x328] sm:$0xff]
        %v334 = vld [vmem:[%s1 + $0x330] sm:$0xff]
        %v335 = vld [vmem:[%s1 + $0x338] sm:$0xff]
        %v336 = vld [vmem:[%s1 + $0x340] sm:$0xff]
        %v337 = vld [vmem:[%s1 + $0x348] sm:$0xff]
        %v338 = vld [vmem:[%s1 + $0x350] sm:$0xff]
        %v339 = vld [vmem:[%s1 + $0x358] sm:$0xff]
        %v340 = vld [vmem:[%s1 + $0x360] sm:$0xff]
        %v341 = vld [vmem:[%s1 + $0x368] sm:$0xff]
        %v342 = vld [vmem:[%s1 + $0x370] sm:$0xff]
        %v343 = vld [vmem:[%s1 + $0x378] sm:$0xff]
        %v344 = vld [vmem:[%s1 + $0x380] sm:$0xff]
        %v345 = vld [vmem:[%s1 + $0x388] sm:$0xff]
        %v346 = vld [vmem:[%s1 + $0x390] sm:$0xff]
        %v347 = vld [vmem:[%s1 + $0x398] sm:$0xff]
        %v348 = vld [vmem:[%s1 + $0x3a0] sm:$0xff]
        %v349 = vld [vmem:[%s1 + $0x3a8] sm:$0xff]
        %v350 = vld [vmem:[%s1 + $0x3b0] sm:$0xff]
        %v351 = vld [vmem:[%s1 + $0x3b8] sm:$0xff]
        %v352 = vld [vmem:[%s1 + $0x3c0] sm:$0xff]
        %v353 = vld [vmem:[%s1 + $0x3c8] sm:$0xff]
        %v354 = vld [vmem:[%s1 + $0x3d0] sm:$0xff]
        %v355 = vld [vmem:[%s1 + $0x3d8] sm:$0xff]
        %v356 = vld [vmem:[%s1 + $0x3e0] sm:$0xff]
        %v357 = vld [vmem:[%s1 + $0x3e8] sm:$0xff]
        %v358 = vld [vmem:[%s1 + $0x3f0] sm:$0xff]
        %v359 = vld [vmem:[%s1 + $0x3f8] sm:$0xff]
        %v360 = vld [vmem:[%s1 + $0x400] sm:$0xff]
        %v361 = vld [vmem:[%s1 + $0x408] sm:$0xff]
        %v362 = vld [vmem:[%s1 + $0x410] sm:$0xff]
        %v363 = vld [vmem:[%s1 + $0x418] sm:$0xff]
        %v364 = vld [vmem:[%s1 + $0x420] sm:$0xff]
        %v365 = vld [vmem:[%s1 + $0x428] sm:$0xff]
        %v366 = vld [vmem:[%s1 + $0x430] sm:$0xff]
        %v367 = vld [vmem:[%s1 + $0x438] sm:$0xff]
        %v368 = vld [vmem:[%s1 + $0x440] sm:$0xff]
        %v369 = vld [vmem:[%s1 + $0x448] sm:$0xff]
        %v370 = vld [vmem:[%s1 + $0x450] sm:$0xff]
        %v371 = vld [vmem:[%s1 + $0x458] sm:$0xff]
        %v372 = vld [vmem:[%s1 + $0x460] sm:$0xff]
        %v373 = vld [vmem:[%s1 + $0x468] sm:$0xff]
        %v374 = vld [vmem:[%s1 + $0x470] sm:$0xff]
        %v375 = vld [vmem:[%s1 + $0x478] sm:$0xff]
        %v376 = vld [vmem:[%s2] sm:$0x3]
        %v378 = vperm.slane %v376, 0
        %v379 = vperm.slane %v376, 1
        %v392 = vunpack.c.l.b16 %v222
        %v393 = vunpack.c.h.b16 %v222
        %v394 = vunpack.c.l.b16 %v223
        %v395 = vunpack.c.h.b16 %v223
        %v396 = vunpack.c.l.b16 %v224
        %v397 = vunpack.c.h.b16 %v224
        %v398 = vunpack.c.l.b16 %v225
        %v399 = vunpack.c.h.b16 %v225
        %v400 = vunpack.c.l.b16 %v226
        %v401 = vunpack.c.l.b16 %v227
        %v402 = vunpack.c.h.b16 %v227
        %v403 = vunpack.c.l.b16 %v228
        %v404 = vunpack.c.h.b16 %v228
        %v405 = vunpack.c.l.b16 %v229
        %v406 = vunpack.c.h.b16 %v229
        %v407 = vunpack.c.l.b16 %v230
        %v408 = vunpack.c.h.b16 %v230
        %v409 = vunpack.c.l.b16 %v231
        %v410 = vpack.c.b16 %v401, %v392
        %v411 = vpack.c.b16 %v402, %v393
        %v412 = vpack.c.b16 %v403, %v394
        %v413 = vpack.c.b16 %v404, %v395
        %v414 = vpack.c.b16 %v405, %v396
        %v415 = vpack.c.b16 %v406, %v397
        %v416 = vpack.c.b16 %v407, %v398
        %v417 = vpack.c.b16 %v408, %v399
        %v418 = vpack.c.b16 %v409, %v400
        %v572 = vunpack.c.l.b16 %v232
        %v573 = vunpack.c.h.b16 %v232
        %v574 = vunpack.c.l.b16 %v233
        %v575 = vunpack.c.h.b16 %v233
        %v576 = vunpack.c.l.b16 %v234
        %v577 = vunpack.c.h.b16 %v234
        %v578 = vunpack.c.l.b16 %v235
        %v579 = vunpack.c.h.b16 %v235
        %v580 = vunpack.c.l.b16 %v236
        %v581 = vunpack.c.h.b16 %v236
        %v582 = vunpack.c.l.b16 %v237
        %v583 = vunpack.c.h.b16 %v237
        %v584 = vunpack.c.l.b16 %v238
        %v585 = vunpack.c.h.b16 %v238
        %v586 = vunpack.c.l.b16 %v239
        %v587 = vunpack.c.h.b16 %v239
        %v588 = vunpack.c.l.b16 %v240
        %v589 = vunpack.c.h.b16 %v240
        %v590 = vunpack.c.l.b16 %v241
        %v591 = vunpack.c.h.b16 %v241
        %v592 = vunpack.c.l.b16 %v242
        %v593 = vunpack.c.h.b16 %v242
        %v594 = vunpack.c.l.b16 %v243
        %v595 = vunpack.c.h.b16 %v243
        %v596 = vunpack.c.l.b16 %v244
        %v597 = vunpack.c.h.b16 %v244
        %v598 = vunpack.c.l.b16 %v245
        %v599 = vunpack.c.h.b16 %v245
        %v600 = vunpack.c.l.b16 %v246
        %v601 = vunpack.c.h.b16 %v246
        %v602 = vunpack.c.l.b16 %v247
        %v603 = vunpack.c.h.b16 %v247
        %v604 = vunpack.c.l.b16 %v248
        %v605 = vunpack.c.h.b16 %v248
        %v606 = vunpack.c.l.b16 %v249
        %v607 = vunpack.c.h.b16 %v249
        %v608 = vunpack.c.l.b16 %v250
        %v609 = vunpack.c.h.b16 %v250
        %v610 = vunpack.c.l.b16 %v251
        %v611 = vunpack.c.h.b16 %v251
        %v612 = vunpack.c.l.b16 %v252
        %v613 = vunpack.c.h.b16 %v252
        %v614 = vunpack.c.l.b16 %v253
        %v615 = vunpack.c.h.b16 %v253
        %v616 = vunpack.c.l.b16 %v254
        %v617 = vunpack.c.h.b16 %v254
        %v618 = vunpack.c.l.b16 %v255
        %v619 = vunpack.c.h.b16 %v255
        %v620 = vunpack.c.l.b16 %v256
        %v621 = vunpack.c.h.b16 %v256
        %v622 = vunpack.c.l.b16 %v257
        %v623 = vunpack.c.h.b16 %v257
        %v624 = vunpack.c.l.b16 %v258
        %v625 = vunpack.c.h.b16 %v258
        %v626 = vunpack.c.l.b16 %v259
        %v627 = vunpack.c.h.b16 %v259
        %v628 = vunpack.c.l.b16 %v260
        %v629 = vunpack.c.h.b16 %v260
        %v630 = vunpack.c.l.b16 %v261
        %v631 = vunpack.c.h.b16 %v261
        %v632 = vunpack.c.l.b16 %v262
        %v633 = vunpack.c.h.b16 %v262
        %v634 = vunpack.c.l.b16 %v263
        %v635 = vunpack.c.h.b16 %v263
        %v636 = vunpack.c.l.b16 %v264
        %v637 = vunpack.c.h.b16 %v264
        %v638 = vunpack.c.l.b16 %v265
        %v639 = vunpack.c.h.b16 %v265
        %v640 = vunpack.c.l.b16 %v266
        %v641 = vunpack.c.h.b16 %v266
        %v642 = vunpack.c.l.b16 %v267
        %v643 = vunpack.c.h.b16 %v267
        %v644 = vunpack.c.l.b16 %v268
        %v645 = vunpack.c.h.b16 %v268
        %v646 = vunpack.c.l.b16 %v269
        %v647 = vunpack.c.h.b16 %v269
        %v648 = vunpack.c.l.b16 %v270
        %v649 = vunpack.c.h.b16 %v270
        %v650 = vunpack.c.l.b16 %v271
        %v651 = vunpack.c.h.b16 %v271
        %v652 = vunpack.c.l.b16 %v272
        %v653 = vunpack.c.h.b16 %v272
        %v654 = vunpack.c.l.b16 %v273
        %v655 = vunpack.c.h.b16 %v273
        %v656 = vunpack.c.l.b16 %v274
        %v657 = vunpack.c.h.b16 %v274
        %v658 = vunpack.c.l.b16 %v275
        %v659 = vunpack.c.h.b16 %v275
        %v660 = vunpack.c.l.b16 %v276
        %v661 = vunpack.c.h.b16 %v276
        %v662 = vunpack.c.l.b16 %v277
        %v663 = vunpack.c.h.b16 %v277
        %v664 = vunpack.c.l.b16 %v278
        %v665 = vunpack.c.h.b16 %v278
        %v666 = vunpack.c.l.b16 %v279
        %v667 = vunpack.c.h.b16 %v279
        %v668 = vunpack.c.l.b16 %v280
        %v669 = vunpack.c.h.b16 %v280
        %v670 = vunpack.c.l.b16 %v281
        %v671 = vunpack.c.h.b16 %v281
        %v672 = vunpack.c.l.b16 %v282
        %v673 = vunpack.c.h.b16 %v282
        %v674 = vunpack.c.l.b16 %v283
        %v675 = vunpack.c.h.b16 %v283
        %v676 = vunpack.c.l.b16 %v284
        %v677 = vunpack.c.h.b16 %v284
        %v678 = vunpack.c.l.b16 %v285
        %v679 = vunpack.c.h.b16 %v285
        %v680 = vunpack.c.l.b16 %v286
        %v681 = vunpack.c.h.b16 %v286
        %v682 = vunpack.c.l.b16 %v287
        %v683 = vunpack.c.h.b16 %v287
        %v684 = vunpack.c.l.b16 %v288
        %v685 = vunpack.c.h.b16 %v288
        %v686 = vunpack.c.l.b16 %v289
        %v687 = vunpack.c.h.b16 %v289
        %v688 = vunpack.c.l.b16 %v290
        %v689 = vunpack.c.h.b16 %v290
        %v690 = vunpack.c.l.b16 %v291
        %v691 = vunpack.c.h.b16 %v291
        %v692 = vunpack.c.l.b16 %v292
        %v693 = vunpack.c.h.b16 %v292
        %v694 = vunpack.c.l.b16 %v293
        %v695 = vunpack.c.h.b16 %v293
        %v696 = vunpack.c.l.b16 %v294
        %v697 = vunpack.c.h.b16 %v294
        %v698 = vunpack.c.l.b16 %v295
        %v699 = vunpack.c.h.b16 %v295
        %v700 = vunpack.c.l.b16 %v296
        %v701 = vunpack.c.h.b16 %v296
        %v702 = vunpack.c.l.b16 %v297
        %v703 = vunpack.c.h.b16 %v297
        %v704 = vunpack.c.l.b16 %v298
        %v705 = vunpack.c.h.b16 %v298
        %v706 = vunpack.c.l.b16 %v299
        %v707 = vunpack.c.h.b16 %v299
        %v708 = vunpack.c.l.b16 %v300
        %v709 = vunpack.c.h.b16 %v300
        %v710 = vunpack.c.l.b16 %v301
        %v711 = vunpack.c.h.b16 %v301
        %v712 = vunpack.c.l.b16 %v302
        %v713 = vunpack.c.h.b16 %v302
        %v714 = vunpack.c.l.b16 %v303
        %v715 = vunpack.c.h.b16 %v303
        %v716 = vunpack.c.l.b16 %v304
        %v717 = vunpack.c.h.b16 %v304
        %v718 = vunpack.c.l.b16 %v305
        %v719 = vunpack.c.h.b16 %v305
        %v720 = vunpack.c.l.b16 %v306
        %v721 = vunpack.c.h.b16 %v306
        %v722 = vunpack.c.l.b16 %v307
        %v723 = vunpack.c.h.b16 %v307
        %v724 = vunpack.c.l.b16 %v308
        %v725 = vunpack.c.h.b16 %v308
        %v726 = vunpack.c.l.b16 %v309
        %v727 = vunpack.c.h.b16 %v309
        %v728 = vunpack.c.l.b16 %v310
        %v729 = vunpack.c.h.b16 %v310
        %v730 = vunpack.c.l.b16 %v311
        %v731 = vunpack.c.h.b16 %v311
        %v732 = vunpack.c.l.b16 %v312
        %v733 = vunpack.c.h.b16 %v312
        %v734 = vunpack.c.l.b16 %v313
        %v735 = vunpack.c.h.b16 %v313
        %v736 = vunpack.c.l.b16 %v314
        %v737 = vunpack.c.h.b16 %v314
        %v738 = vunpack.c.l.b16 %v315
        %v739 = vunpack.c.h.b16 %v315
        %v740 = vunpack.c.l.b16 %v316
        %v741 = vunpack.c.h.b16 %v316
        %v742 = vunpack.c.l.b16 %v317
        %v743 = vunpack.c.h.b16 %v317
        %v744 = vunpack.c.l.b16 %v318
        %v745 = vunpack.c.h.b16 %v318
        %v746 = vunpack.c.l.b16 %v319
        %v747 = vunpack.c.h.b16 %v319
        %v748 = vunpack.c.l.b16 %v320
        %v749 = vunpack.c.h.b16 %v320
        %v750 = vunpack.c.l.b16 %v321
        %v751 = vunpack.c.h.b16 %v321
        %v752 = vunpack.c.l.b16 %v322
        %v753 = vunpack.c.h.b16 %v322
        %v754 = vunpack.c.l.b16 %v323
        %v755 = vunpack.c.h.b16 %v323
        %v756 = vunpack.c.l.b16 %v324
        %v757 = vunpack.c.h.b16 %v324
        %v758 = vunpack.c.l.b16 %v325
        %v759 = vunpack.c.h.b16 %v325
        %v760 = vunpack.c.l.b16 %v326
        %v761 = vunpack.c.h.b16 %v326
        %v762 = vunpack.c.l.b16 %v327
        %v763 = vunpack.c.h.b16 %v327
        %v764 = vunpack.c.l.b16 %v328
        %v765 = vunpack.c.h.b16 %v328
        %v766 = vunpack.c.l.b16 %v329
        %v767 = vunpack.c.h.b16 %v329
        %v768 = vunpack.c.l.b16 %v330
        %v769 = vunpack.c.h.b16 %v330
        %v770 = vunpack.c.l.b16 %v331
        %v771 = vunpack.c.h.b16 %v331
        %v772 = vunpack.c.l.b16 %v332
        %v773 = vunpack.c.h.b16 %v332
        %v774 = vunpack.c.l.b16 %v333
        %v775 = vunpack.c.h.b16 %v333
        %v776 = vunpack.c.l.b16 %v334
        %v777 = vunpack.c.h.b16 %v334
        %v778 = vunpack.c.l.b16 %v335
        %v779 = vunpack.c.h.b16 %v335
        %v780 = vunpack.c.l.b16 %v336
        %v781 = vunpack.c.h.b16 %v336
        %v782 = vunpack.c.l.b16 %v337
        %v783 = vunpack.c.h.b16 %v337
        %v784 = vunpack.c.l.b16 %v338
        %v785 = vunpack.c.h.b16 %v338
        %v786 = vunpack.c.l.b16 %v339
        %v787 = vunpack.c.h.b16 %v339
        %v788 = vunpack.c.l.b16 %v340
        %v789 = vunpack.c.h.b16 %v340
        %v790 = vunpack.c.l.b16 %v341
        %v791 = vunpack.c.h.b16 %v341
        %v792 = vunpack.c.l.b16 %v342
        %v793 = vunpack.c.h.b16 %v342
        %v794 = vunpack.c.l.b16 %v343
        %v795 = vunpack.c.h.b16 %v343
        %v796 = vunpack.c.l.b16 %v344
        %v797 = vunpack.c.h.b16 %v344
        %v798 = vunpack.c.l.b16 %v345
        %v799 = vunpack.c.h.b16 %v345
        %v800 = vunpack.c.l.b16 %v346
        %v801 = vunpack.c.h.b16 %v346
        %v802 = vunpack.c.l.b16 %v347
        %v803 = vunpack.c.h.b16 %v347
        %v804 = vunpack.c.l.b16 %v348
        %v805 = vunpack.c.h.b16 %v348
        %v806 = vunpack.c.l.b16 %v349
        %v807 = vunpack.c.h.b16 %v349
        %v808 = vunpack.c.l.b16 %v350
        %v809 = vunpack.c.h.b16 %v350
        %v810 = vunpack.c.l.b16 %v351
        %v811 = vunpack.c.h.b16 %v351
        %v812 = vunpack.c.l.b16 %v352
        %v813 = vunpack.c.h.b16 %v352
        %v814 = vunpack.c.l.b16 %v353
        %v815 = vunpack.c.h.b16 %v353
        %v816 = vunpack.c.l.b16 %v354
        %v817 = vunpack.c.h.b16 %v354
        %v818 = vunpack.c.l.b16 %v355
        %v819 = vunpack.c.h.b16 %v355
        %v820 = vunpack.c.l.b16 %v356
        %v821 = vunpack.c.h.b16 %v356
        %v822 = vunpack.c.l.b16 %v357
        %v823 = vunpack.c.h.b16 %v357
        %v824 = vunpack.c.l.b16 %v358
        %v825 = vunpack.c.h.b16 %v358
        %v826 = vunpack.c.l.b16 %v359
        %v827 = vunpack.c.h.b16 %v359
        %v828 = vunpack.c.l.b16 %v360
        %v829 = vunpack.c.h.b16 %v360
        %v830 = vunpack.c.l.b16 %v361
        %v831 = vunpack.c.h.b16 %v361
        %v832 = vunpack.c.l.b16 %v362
        %v833 = vunpack.c.h.b16 %v362
        %v834 = vunpack.c.l.b16 %v363
        %v835 = vunpack.c.h.b16 %v363
        %v836 = vunpack.c.l.b16 %v364
        %v837 = vunpack.c.h.b16 %v364
        %v838 = vunpack.c.l.b16 %v365
        %v839 = vunpack.c.h.b16 %v365
        %v840 = vunpack.c.l.b16 %v366
        %v841 = vunpack.c.h.b16 %v366
        %v842 = vunpack.c.l.b16 %v367
        %v843 = vunpack.c.h.b16 %v367
        %v844 = vunpack.c.l.b16 %v368
        %v845 = vunpack.c.h.b16 %v368
        %v846 = vunpack.c.l.b16 %v369
        %v847 = vunpack.c.h.b16 %v369
        %v848 = vunpack.c.l.b16 %v370
        %v849 = vunpack.c.h.b16 %v370
        %v850 = vunpack.c.l.b16 %v371
        %v851 = vunpack.c.h.b16 %v371
        %v852 = vunpack.c.l.b16 %v372
        %v853 = vunpack.c.h.b16 %v372
        %v854 = vunpack.c.l.b16 %v373
        %v855 = vunpack.c.h.b16 %v373
        %v856 = vunpack.c.l.b16 %v374
        %v857 = vunpack.c.h.b16 %v374
        %v858 = vunpack.c.l.b16 %v375
        %v859 = vunpack.c.h.b16 %v375
        %v860 = vpack.c.b16 %v574, %v572
        %v861 = vpack.c.b16 %v575, %v573
        %v862 = vpack.c.b16 %v578, %v576
        %v863 = vpack.c.b16 %v579, %v577
        %v864 = vpack.c.b16 %v582, %v580
        %v865 = vpack.c.b16 %v583, %v581
        %v866 = vpack.c.b16 %v586, %v584
        %v867 = vpack.c.b16 %v587, %v585
        %v868 = vpack.c.b16 %v590, %v588
        %v869 = vpack.c.b16 %v591, %v589
        %v870 = vpack.c.b16 %v594, %v592
        %v871 = vpack.c.b16 %v595, %v593
        %v872 = vpack.c.b16 %v598, %v596
        %v873 = vpack.c.b16 %v599, %v597
        %v874 = vpack.c.b16 %v602, %v600
        %v875 = vpack.c.b16 %v603, %v601
        %v876 = vpack.c.b16 %v606, %v604
        %v877 = vpack.c.b16 %v607, %v605
        %v878 = vpack.c.b16 %v610, %v608
        %v879 = vpack.c.b16 %v611, %v609
        %v880 = vpack.c.b16 %v614, %v612
        %v881 = vpack.c.b16 %v615, %v613
        %v882 = vpack.c.b16 %v618, %v616
        %v883 = vpack.c.b16 %v619, %v617
        %v884 = vpack.c.b16 %v622, %v620
        %v885 = vpack.c.b16 %v623, %v621
        %v886 = vpack.c.b16 %v626, %v624
        %v887 = vpack.c.b16 %v627, %v625
        %v888 = vpack.c.b16 %v630, %v628
        %v889 = vpack.c.b16 %v631, %v629
        %v890 = vpack.c.b16 %v634, %v632
        %v891 = vpack.c.b16 %v635, %v633
        %v892 = vpack.c.b16 %v638, %v636
        %v893 = vpack.c.b16 %v639, %v637
        %v894 = vpack.c.b16 %v642, %v640
        %v895 = vpack.c.b16 %v643, %v641
        %v896 = vpack.c.b16 %v646, %v644
        %v897 = vpack.c.b16 %v647, %v645
        %v898 = vpack.c.b16 %v650, %v648
        %v899 = vpack.c.b16 %v651, %v649
        %v900 = vpack.c.b16 %v654, %v652
        %v901 = vpack.c.b16 %v655, %v653
        %v902 = vpack.c.b16 %v658, %v656
        %v903 = vpack.c.b16 %v659, %v657
        %v904 = vpack.c.b16 %v662, %v660
        %v905 = vpack.c.b16 %v663, %v661
        %v906 = vpack.c.b16 %v666, %v664
        %v907 = vpack.c.b16 %v667, %v665
        %v908 = vpack.c.b16 %v670, %v668
        %v909 = vpack.c.b16 %v671, %v669
        %v910 = vpack.c.b16 %v674, %v672
        %v911 = vpack.c.b16 %v675, %v673
        %v912 = vpack.c.b16 %v678, %v676
        %v913 = vpack.c.b16 %v679, %v677
        %v914 = vpack.c.b16 %v682, %v680
        %v915 = vpack.c.b16 %v683, %v681
        %v916 = vpack.c.b16 %v686, %v684
        %v917 = vpack.c.b16 %v687, %v685
        %v918 = vpack.c.b16 %v690, %v688
        %v919 = vpack.c.b16 %v691, %v689
        %v920 = vpack.c.b16 %v694, %v692
        %v921 = vpack.c.b16 %v695, %v693
        %v922 = vpack.c.b16 %v698, %v696
        %v923 = vpack.c.b16 %v699, %v697
        %v924 = vpack.c.b16 %v702, %v700
        %v925 = vpack.c.b16 %v703, %v701
        %v926 = vpack.c.b16 %v706, %v704
        %v927 = vpack.c.b16 %v707, %v705
        %v928 = vpack.c.b16 %v710, %v708
        %v929 = vpack.c.b16 %v711, %v709
        %v930 = vpack.c.b16 %v714, %v712
        %v931 = vpack.c.b16 %v715, %v713
        %v932 = vpack.c.b16 %v718, %v716
        %v933 = vpack.c.b16 %v719, %v717
        %v934 = vpack.c.b16 %v722, %v720
        %v935 = vpack.c.b16 %v723, %v721
        %v936 = vpack.c.b16 %v726, %v724
        %v937 = vpack.c.b16 %v727, %v725
        %v938 = vpack.c.b16 %v730, %v728
        %v939 = vpack.c.b16 %v731, %v729
        %v940 = vpack.c.b16 %v734, %v732
        %v941 = vpack.c.b16 %v735, %v733
        %v942 = vpack.c.b16 %v738, %v736
        %v943 = vpack.c.b16 %v739, %v737
        %v944 = vpack.c.b16 %v742, %v740
        %v945 = vpack.c.b16 %v743, %v741
        %v946 = vpack.c.b16 %v746, %v744
        %v947 = vpack.c.b16 %v747, %v745
        %v948 = vpack.c.b16 %v750, %v748
        %v949 = vpack.c.b16 %v751, %v749
        %v950 = vpack.c.b16 %v754, %v752
        %v951 = vpack.c.b16 %v755, %v753
        %v952 = vpack.c.b16 %v758, %v756
        %v953 = vpack.c.b16 %v759, %v757
        %v954 = vpack.c.b16 %v762, %v760
        %v955 = vpack.c.b16 %v763, %v761
        %v956 = vpack.c.b16 %v766, %v764
        %v957 = vpack.c.b16 %v767, %v765
        %v958 = vpack.c.b16 %v770, %v768
        %v959 = vpack.c.b16 %v771, %v769
        %v960 = vpack.c.b16 %v774, %v772
        %v961 = vpack.c.b16 %v775, %v773
        %v962 = vpack.c.b16 %v778, %v776
        %v963 = vpack.c.b16 %v779, %v777
        %v964 = vpack.c.b16 %v782, %v780
        %v965 = vpack.c.b16 %v783, %v781
        %v966 = vpack.c.b16 %v786, %v784
        %v967 = vpack.c.b16 %v787, %v785
        %v968 = vpack.c.b16 %v790, %v788
        %v969 = vpack.c.b16 %v791, %v789
        %v970 = vpack.c.b16 %v794, %v792
        %v971 = vpack.c.b16 %v795, %v793
        %v972 = vpack.c.b16 %v798, %v796
        %v973 = vpack.c.b16 %v799, %v797
        %v974 = vpack.c.b16 %v802, %v800
        %v975 = vpack.c.b16 %v803, %v801
        %v976 = vpack.c.b16 %v806, %v804
        %v977 = vpack.c.b16 %v807, %v805
        %v978 = vpack.c.b16 %v810, %v808
        %v979 = vpack.c.b16 %v811, %v809
        %v980 = vpack.c.b16 %v814, %v812
        %v981 = vpack.c.b16 %v815, %v813
        %v982 = vpack.c.b16 %v818, %v816
        %v983 = vpack.c.b16 %v819, %v817
        %v984 = vpack.c.b16 %v822, %v820
        %v985 = vpack.c.b16 %v823, %v821
        %v986 = vpack.c.b16 %v826, %v824
        %v987 = vpack.c.b16 %v827, %v825
        %v988 = vpack.c.b16 %v830, %v828
        %v989 = vpack.c.b16 %v831, %v829
        %v990 = vpack.c.b16 %v834, %v832
        %v991 = vpack.c.b16 %v835, %v833
        %v992 = vpack.c.b16 %v838, %v836
        %v993 = vpack.c.b16 %v839, %v837
        %v994 = vpack.c.b16 %v842, %v840
        %v995 = vpack.c.b16 %v843, %v841
        %v996 = vpack.c.b16 %v846, %v844
        %v997 = vpack.c.b16 %v847, %v845
        %v998 = vpack.c.b16 %v850, %v848
        %v999 = vpack.c.b16 %v851, %v849
        %v1000 = vpack.c.b16 %v854, %v852
        %v1001 = vpack.c.b16 %v855, %v853
        %v1002 = vpack.c.b16 %v858, %v856
        %v1003 = vpack.c.b16 %v859, %v857
        %1148 = vmatpush.bf16.msra.mxu0 %v874
        %1149 = vmatpush.bf16.msra.mxu0 %v872
        %1150 = vmatpush.bf16.msra.mxu0 %v870
        %1151 = vmatpush.bf16.msra.mxu0 %v868
        %1152 = vmatpush.bf16.msra.mxu0 %v866
        %1153 = vmatpush.bf16.msra.mxu0 %v864
        %1154 = vmatpush.bf16.msra.mxu0 %v862
        %1155 = vmatpush.bf16.msra.mxu0 %v860
        %1156 = vmatmul.bf16.gmra.mxu0 %v410
        %v1157 = vpop.f32.mrf.mxu0
        %v1158 = vadd.f32 %v378, %v1157
        %v1159 = vpop.f32.mrf.mxu0
        %v1160 = vadd.f32 %v378, %v1159
        %1161 = vdwg.mxu0
        %1162 = vmatpush.bf16.msra.mxu0 %v890
        %1163 = vmatpush.bf16.msra.mxu0 %v888
        %1164 = vmatpush.bf16.msra.mxu0 %v886
        %1165 = vmatpush.bf16.msra.mxu0 %v884
        %1166 = vmatpush.bf16.msra.mxu0 %v882
        %1167 = vmatpush.bf16.msra.mxu0 %v880
        %1168 = vmatpush.bf16.msra.mxu0 %v878
        %1169 = vmatpush.bf16.msra.mxu0 %v876
        %1170 = vmatmul.bf16.gmra.mxu0 %v411
        %v1171 = vpop.f32.mrf.mxu0
        %v1172 = vadd.f32 %v1158, %v1171
        %v1173 = vpop.f32.mrf.mxu0
        %v1174 = vadd.f32 %v1160, %v1173
        %1175 = vdwg.mxu0
        %1176 = vmatpush.bf16.msra.mxu0 %v906
        %1177 = vmatpush.bf16.msra.mxu0 %v904
        %1178 = vmatpush.bf16.msra.mxu0 %v902
        %1179 = vmatpush.bf16.msra.mxu0 %v900
        %1180 = vmatpush.bf16.msra.mxu0 %v898
        %1181 = vmatpush.bf16.msra.mxu0 %v896
        %1182 = vmatpush.bf16.msra.mxu0 %v894
        %1183 = vmatpush.bf16.msra.mxu0 %v892
        %1184 = vmatmul.bf16.gmra.mxu0 %v412
        %v1185 = vpop.f32.mrf.mxu0
        %v1186 = vadd.f32 %v1172, %v1185
        %v1187 = vpop.f32.mrf.mxu0
        %v1188 = vadd.f32 %v1174, %v1187
        %1189 = vdwg.mxu0
        %1190 = vmatpush.bf16.msra.mxu0 %v922
        %1191 = vmatpush.bf16.msra.mxu0 %v920
        %1192 = vmatpush.bf16.msra.mxu0 %v918
        %1193 = vmatpush.bf16.msra.mxu0 %v916
        %1194 = vmatpush.bf16.msra.mxu0 %v914
        %1195 = vmatpush.bf16.msra.mxu0 %v912
        %1196 = vmatpush.bf16.msra.mxu0 %v910
        %1197 = vmatpush.bf16.msra.mxu0 %v908
        %1198 = vmatmul.bf16.gmra.mxu0 %v413
        %v1199 = vpop.f32.mrf.mxu0
        %v1200 = vadd.f32 %v1186, %v1199
        %v1201 = vpop.f32.mrf.mxu0
        %v1202 = vadd.f32 %v1188, %v1201
        %1203 = vdwg.mxu0
        %1204 = vmatpush.bf16.msra.mxu0 %v938
        %1205 = vmatpush.bf16.msra.mxu0 %v936
        %1206 = vmatpush.bf16.msra.mxu0 %v934
        %1207 = vmatpush.bf16.msra.mxu0 %v932
        %1208 = vmatpush.bf16.msra.mxu0 %v930
        %1209 = vmatpush.bf16.msra.mxu0 %v928
        %1210 = vmatpush.bf16.msra.mxu0 %v926
        %1211 = vmatpush.bf16.msra.mxu0 %v924
        %1212 = vmatmul.bf16.gmra.mxu0 %v414
        %v1213 = vpop.f32.mrf.mxu0
        %v1214 = vadd.f32 %v1200, %v1213
        %v1215 = vpop.f32.mrf.mxu0
        %v1216 = vadd.f32 %v1202, %v1215
        %1217 = vdwg.mxu0
        %1218 = vmatpush.bf16.msra.mxu0 %v954
        %1219 = vmatpush.bf16.msra.mxu0 %v952
        %1220 = vmatpush.bf16.msra.mxu0 %v950
        %1221 = vmatpush.bf16.msra.mxu0 %v948
        %1222 = vmatpush.bf16.msra.mxu0 %v946
        %1223 = vmatpush.bf16.msra.mxu0 %v944
        %1224 = vmatpush.bf16.msra.mxu0 %v942
        %1225 = vmatpush.bf16.msra.mxu0 %v940
        %1226 = vmatmul.bf16.gmra.mxu0 %v415
        %v1227 = vpop.f32.mrf.mxu0
        %v1228 = vadd.f32 %v1214, %v1227
        %v1229 = vpop.f32.mrf.mxu0
        %v1230 = vadd.f32 %v1216, %v1229
        %1231 = vdwg.mxu0
        %1232 = vmatpush.bf16.msra.mxu0 %v970
        %1233 = vmatpush.bf16.msra.mxu0 %v968
        %1234 = vmatpush.bf16.msra.mxu0 %v966
        %1235 = vmatpush.bf16.msra.mxu0 %v964
        %1236 = vmatpush.bf16.msra.mxu0 %v962
        %1237 = vmatpush.bf16.msra.mxu0 %v960
        %1238 = vmatpush.bf16.msra.mxu0 %v958
        %1239 = vmatpush.bf16.msra.mxu0 %v956
        %1240 = vmatmul.bf16.gmra.mxu0 %v416
        %v1241 = vpop.f32.mrf.mxu0
        %v1242 = vadd.f32 %v1228, %v1241
        %v1243 = vpop.f32.mrf.mxu0
        %v1244 = vadd.f32 %v1230, %v1243
        %1245 = vdwg.mxu0
        %1246 = vmatpush.bf16.msra.mxu0 %v986
        %1247 = vmatpush.bf16.msra.mxu0 %v984
        %1248 = vmatpush.bf16.msra.mxu0 %v982
        %1249 = vmatpush.bf16.msra.mxu0 %v980
        %1250 = vmatpush.bf16.msra.mxu0 %v978
        %1251 = vmatpush.bf16.msra.mxu0 %v976
        %1252 = vmatpush.bf16.msra.mxu0 %v974
        %1253 = vmatpush.bf16.msra.mxu0 %v972
        %1254 = vmatmul.bf16.gmra.mxu0 %v417
        %v1255 = vpop.f32.mrf.mxu0
        %v1256 = vadd.f32 %v1242, %v1255
        %v1257 = vpop.f32.mrf.mxu0
        %v1258 = vadd.f32 %v1244, %v1257
        %1259 = vdwg.mxu0
        %1260 = vmatpush.bf16.msra.mxu0 %v1002
        %1261 = vmatpush.bf16.msra.mxu0 %v1000
        %1262 = vmatpush.bf16.msra.mxu0 %v998
        %1263 = vmatpush.bf16.msra.mxu0 %v996
        %1264 = vmatpush.bf16.msra.mxu0 %v994
        %1265 = vmatpush.bf16.msra.mxu0 %v992
        %1266 = vmatpush.bf16.msra.mxu0 %v990
        %1267 = vmatpush.bf16.msra.mxu0 %v988
        %1268 = vmatmul.bf16.gmra.mxu0 %v418
        %v1269 = vpop.f32.mrf.mxu0
        %v1270 = vadd.f32 %v1256, %v1269
        %v1271 = vpop.f32.mrf.mxu0
        %v1272 = vadd.f32 %v1258, %v1271
        %1273 = vdwg.mxu0
        %1274 = vmatpush.bf16.msra.mxu0 %v875
        %1275 = vmatpush.bf16.msra.mxu0 %v873
        %1276 = vmatpush.bf16.msra.mxu0 %v871
        %1277 = vmatpush.bf16.msra.mxu0 %v869
        %1278 = vmatpush.bf16.msra.mxu0 %v867
        %1279 = vmatpush.bf16.msra.mxu0 %v865
        %1280 = vmatpush.bf16.msra.mxu0 %v863
        %1281 = vmatpush.bf16.msra.mxu0 %v861
        %1282 = vmatmul.bf16.gmra.mxu0 %v410
        %v1283 = vpop.f32.mrf.mxu0
        %v1284 = vadd.f32 %v379, %v1283
        %v1285 = vpop.f32.mrf.mxu0
        %v1286 = vadd.f32 %v379, %v1285
        %1287 = vdwg.mxu0
        %1288 = vmatpush.bf16.msra.mxu0 %v891
        %1289 = vmatpush.bf16.msra.mxu0 %v889
        %1290 = vmatpush.bf16.msra.mxu0 %v887
        %1291 = vmatpush.bf16.msra.mxu0 %v885
        %1292 = vmatpush.bf16.msra.mxu0 %v883
        %1293 = vmatpush.bf16.msra.mxu0 %v881
        %1294 = vmatpush.bf16.msra.mxu0 %v879
        %1295 = vmatpush.bf16.msra.mxu0 %v877
        %1296 = vmatmul.bf16.gmra.mxu0 %v411
        %v1297 = vpop.f32.mrf.mxu0
        %v1298 = vadd.f32 %v1284, %v1297
        %v1299 = vpop.f32.mrf.mxu0
        %v1300 = vadd.f32 %v1286, %v1299
        %1301 = vdwg.mxu0
        %1302 = vmatpush.bf16.msra.mxu0 %v907
        %1303 = vmatpush.bf16.msra.mxu0 %v905
        %1304 = vmatpush.bf16.msra.mxu0 %v903
        %1305 = vmatpush.bf16.msra.mxu0 %v901
        %1306 = vmatpush.bf16.msra.mxu0 %v899
        %1307 = vmatpush.bf16.msra.mxu0 %v897
        %1308 = vmatpush.bf16.msra.mxu0 %v895
        %1309 = vmatpush.bf16.msra.mxu0 %v893
        %1310 = vmatmul.bf16.gmra.mxu0 %v412
        %v1311 = vpop.f32.mrf.mxu0
        %v1312 = vadd.f32 %v1298, %v1311
        %v1313 = vpop.f32.mrf.mxu0
        %v1314 = vadd.f32 %v1300, %v1313
        %1315 = vdwg.mxu0
        %1316 = vmatpush.bf16.msra.mxu0 %v923
        %1317 = vmatpush.bf16.msra.mxu0 %v921
        %1318 = vmatpush.bf16.msra.mxu0 %v919
        %1319 = vmatpush.bf16.msra.mxu0 %v917
        %1320 = vmatpush.bf16.msra.mxu0 %v915
        %1321 = vmatpush.bf16.msra.mxu0 %v913
        %1322 = vmatpush.bf16.msra.mxu0 %v911
        %1323 = vmatpush.bf16.msra.mxu0 %v909
        %1324 = vmatmul.bf16.gmra.mxu0 %v413
        %v1325 = vpop.f32.mrf.mxu0
        %v1326 = vadd.f32 %v1312, %v1325
        %v1327 = vpop.f32.mrf.mxu0
        %v1328 = vadd.f32 %v1314, %v1327
        %1329 = vdwg.mxu0
        %1330 = vmatpush.bf16.msra.mxu0 %v939
        %1331 = vmatpush.bf16.msra.mxu0 %v937
        %1332 = vmatpush.bf16.msra.mxu0 %v935
        %1333 = vmatpush.bf16.msra.mxu0 %v933
        %1334 = vmatpush.bf16.msra.mxu0 %v931
        %1335 = vmatpush.bf16.msra.mxu0 %v929
        %1336 = vmatpush.bf16.msra.mxu0 %v927
        %1337 = vmatpush.bf16.msra.mxu0 %v925
        %1338 = vmatmul.bf16.gmra.mxu0 %v414
        %v1339 = vpop.f32.mrf.mxu0
        %v1340 = vadd.f32 %v1326, %v1339
        %v1341 = vpop.f32.mrf.mxu0
        %v1342 = vadd.f32 %v1328, %v1341
        %1343 = vdwg.mxu0
        %1344 = vmatpush.bf16.msra.mxu0 %v955
        %1345 = vmatpush.bf16.msra.mxu0 %v953
        %1346 = vmatpush.bf16.msra.mxu0 %v951
        %1347 = vmatpush.bf16.msra.mxu0 %v949
        %1348 = vmatpush.bf16.msra.mxu0 %v947
        %1349 = vmatpush.bf16.msra.mxu0 %v945
        %1350 = vmatpush.bf16.msra.mxu0 %v943
        %1351 = vmatpush.bf16.msra.mxu0 %v941
        %1352 = vmatmul.bf16.gmra.mxu0 %v415
        %v1353 = vpop.f32.mrf.mxu0
        %v1354 = vadd.f32 %v1340, %v1353
        %v1355 = vpop.f32.mrf.mxu0
        %v1356 = vadd.f32 %v1342, %v1355
        %1357 = vdwg.mxu0
        %1358 = vmatpush.bf16.msra.mxu0 %v971
        %1359 = vmatpush.bf16.msra.mxu0 %v969
        %1360 = vmatpush.bf16.msra.mxu0 %v967
        %1361 = vmatpush.bf16.msra.mxu0 %v965
        %1362 = vmatpush.bf16.msra.mxu0 %v963
        %1363 = vmatpush.bf16.msra.mxu0 %v961
        %1364 = vmatpush.bf16.msra.mxu0 %v959
        %1365 = vmatpush.bf16.msra.mxu0 %v957
        %1366 = vmatmul.bf16.gmra.mxu0 %v416
        %v1367 = vpop.f32.mrf.mxu0
        %v1368 = vadd.f32 %v1354, %v1367
        %v1369 = vpop.f32.mrf.mxu0
        %v1370 = vadd.f32 %v1356, %v1369
        %1371 = vdwg.mxu0
        %1372 = vmatpush.bf16.msra.mxu0 %v987
        %1373 = vmatpush.bf16.msra.mxu0 %v985
        %1374 = vmatpush.bf16.msra.mxu0 %v983
        %1375 = vmatpush.bf16.msra.mxu0 %v981
        %1376 = vmatpush.bf16.msra.mxu0 %v979
        %1377 = vmatpush.bf16.msra.mxu0 %v977
        %1378 = vmatpush.bf16.msra.mxu0 %v975
        %1379 = vmatpush.bf16.msra.mxu0 %v973
        %1380 = vmatmul.bf16.gmra.mxu0 %v417
        %v1381 = vpop.f32.mrf.mxu0
        %v1382 = vadd.f32 %v1368, %v1381
        %v1383 = vpop.f32.mrf.mxu0
        %v1384 = vadd.f32 %v1370, %v1383
        %1385 = vdwg.mxu0
        %1386 = vmatpush.bf16.msra.mxu0 %v1003
        %1387 = vmatpush.bf16.msra.mxu0 %v1001
        %1388 = vmatpush.bf16.msra.mxu0 %v999
        %1389 = vmatpush.bf16.msra.mxu0 %v997
        %1390 = vmatpush.bf16.msra.mxu0 %v995
        %1391 = vmatpush.bf16.msra.mxu0 %v993
        %1392 = vmatpush.bf16.msra.mxu0 %v991
        %1393 = vmatpush.bf16.msra.mxu0 %v989
        %1394 = vmatmul.bf16.gmra.mxu0 %v418
        %v1395 = vpop.f32.mrf.mxu0
        %v1396 = vadd.f32 %v1382, %v1395
        %v1397 = vpop.f32.mrf.mxu0
        %v1398 = vadd.f32 %v1384, %v1397
        %1399 = vdwg.mxu0
        %v1400 = vmax.f32 %v1270, 0.0
        %v1401 = vmax.f32 %v1396, 0.0
        %v1402 = vmax.f32 %v1272, 0.0
        %v1403 = vmax.f32 %v1398, 0.0
        %1404 = vst [vmem:[#allocation2] sm:$0xff] %v1400
        %1405 = vst [vmem:[#allocation2 + $0x8] sm:$0xff] %v1401
        %1406 = vst [vmem:[#allocation2 + $0x10] sm:$0x1] %v1402
        %1407 = vst [vmem:[#allocation2 + $0x18] sm:$0x1] %v1403
        %v1408 = vld [vmem:[#allocation2] ss:$8 sm:$0x3]
        %s1409 = scalar_lea.vmem [#allocation2], 1
        %v1410 = vld [vmem:[%s1409] ss:$8 sm:$0x3]
        %s1411 = scalar_lea.vmem [#allocation2], 3
        %v1412 = vld [vmem:[%s1411] ss:$8 sm:$0x3]
        %s1413 = scalar_lea.vmem [#allocation2], 4
        %v1414 = vld [vmem:[%s1413] ss:$8 sm:$0x3]
        %v1415 = vmax.f32 %v1408, %v1410
        %v1416 = vmax.f32 %v1412, %v1414
        %v1417 = vmax.f32 %v1415, %v1416
        %v1419 = vperm.slane %v1417, 0
        %v1420 = vperm.slane %v1417, 1
        %v1423 = vpack.c.bf16 %v1419, %v1419
        %v1424 = vpack.c.bf16 %v1420, %v1420
        %v1425 = vld [vmem:[%s3] sm:$0xf]
        %v1426 = vld [vmem:[%s3 + $0x4] sm:$0xf]
        %v1427 = vld [vmem:[%s3 + $0x8] sm:$0xf]
        %v1428 = vld [vmem:[%s3 + $0xc] sm:$0xf]
        %v1429 = vld [vmem:[%s3 + $0x10] sm:$0xf]
        %v1430 = vld [vmem:[%s3 + $0x14] sm:$0xf]
        %v1431 = vld [vmem:[%s3 + $0x18] sm:$0xf]
        %v1432 = vld [vmem:[%s3 + $0x1c] sm:$0xf]
        %v1433 = vld [vmem:[%s3 + $0x20] sm:$0xf]
        %v1434 = vld [vmem:[%s3 + $0x24] sm:$0xf]
        %v1435 = vld [vmem:[%s3 + $0x28] sm:$0xf]
        %v1436 = vld [vmem:[%s3 + $0x2c] sm:$0xf]
        %v1437 = vld [vmem:[%s3 + $0x30] sm:$0xf]
        %v1438 = vld [vmem:[%s3 + $0x34] sm:$0xf]
        %v1439 = vld [vmem:[%s3 + $0x38] sm:$0xf]
        %v1440 = vld [vmem:[%s3 + $0x3c] sm:$0xf]
        %v1441 = vld [vmem:[%s3 + $0x40] sm:$0xf]
        %v1442 = vld [vmem:[%s3 + $0x44] sm:$0xf]
        %v1443 = vld [vmem:[%s3 + $0x48] sm:$0xf]
        %v1444 = vld [vmem:[%s3 + $0x4c] sm:$0xf]
        %v1445 = vld [vmem:[%s3 + $0x50] sm:$0xf]
        %v1446 = vld [vmem:[%s3 + $0x54] sm:$0xf]
        %v1447 = vld [vmem:[%s3 + $0x58] sm:$0xf]
        %v1448 = vld [vmem:[%s3 + $0x5c] sm:$0xf]
        %v1449 = vld [vmem:[%s3 + $0x60] sm:$0xf]
        %v1450 = vld [vmem:[%s3 + $0x64] sm:$0xf]
        %v1451 = vld [vmem:[%s3 + $0x68] sm:$0xf]
        %v1452 = vld [vmem:[%s3 + $0x6c] sm:$0xf]
        %v1453 = vld [vmem:[%s3 + $0x70] sm:$0xf]
        %v1454 = vld [vmem:[%s3 + $0x74] sm:$0xf]
        %v1455 = vld [vmem:[%s3 + $0x78] sm:$0xf]
        %v1456 = vld [vmem:[%s3 + $0x7c] sm:$0xf]
        %v1457 = vld [vmem:[%s4] sm:$0x1]
        %v1490 = vunpack.c.l.b16 %v1425
        %v1491 = vunpack.c.l.b16 %v1426
        %v1492 = vunpack.c.l.b16 %v1427
        %v1493 = vunpack.c.l.b16 %v1428
        %v1494 = vunpack.c.l.b16 %v1429
        %v1495 = vunpack.c.l.b16 %v1430
        %v1496 = vunpack.c.l.b16 %v1431
        %v1497 = vunpack.c.l.b16 %v1432
        %v1498 = vunpack.c.l.b16 %v1433
        %v1499 = vunpack.c.l.b16 %v1434
        %v1500 = vunpack.c.l.b16 %v1435
        %v1501 = vunpack.c.l.b16 %v1436
        %v1502 = vunpack.c.l.b16 %v1437
        %v1503 = vunpack.c.l.b16 %v1438
        %v1504 = vunpack.c.l.b16 %v1439
        %v1505 = vunpack.c.l.b16 %v1440
        %v1506 = vunpack.c.l.b16 %v1441
        %v1507 = vunpack.c.l.b16 %v1442
        %v1508 = vunpack.c.l.b16 %v1443
        %v1509 = vunpack.c.l.b16 %v1444
        %v1510 = vunpack.c.l.b16 %v1445
        %v1511 = vunpack.c.l.b16 %v1446
        %v1512 = vunpack.c.l.b16 %v1447
        %v1513 = vunpack.c.l.b16 %v1448
        %v1514 = vunpack.c.l.b16 %v1449
        %v1515 = vunpack.c.l.b16 %v1450
        %v1516 = vunpack.c.l.b16 %v1451
        %v1517 = vunpack.c.l.b16 %v1452
        %v1518 = vunpack.c.l.b16 %v1453
        %v1519 = vunpack.c.l.b16 %v1454
        %v1520 = vunpack.c.l.b16 %v1455
        %v1521 = vunpack.c.l.b16 %v1456
        %v1522 = vpack.c.b16 %v1491, %v1490
        %v1523 = vpack.c.b16 %v1493, %v1492
        %v1524 = vpack.c.b16 %v1495, %v1494
        %v1525 = vpack.c.b16 %v1497, %v1496
        %v1526 = vpack.c.b16 %v1499, %v1498
        %v1527 = vpack.c.b16 %v1501, %v1500
        %v1528 = vpack.c.b16 %v1503, %v1502
        %v1529 = vpack.c.b16 %v1505, %v1504
        %v1530 = vpack.c.b16 %v1507, %v1506
        %v1531 = vpack.c.b16 %v1509, %v1508
        %v1532 = vpack.c.b16 %v1511, %v1510
        %v1533 = vpack.c.b16 %v1513, %v1512
        %v1534 = vpack.c.b16 %v1515, %v1514
        %v1535 = vpack.c.b16 %v1517, %v1516
        %v1536 = vpack.c.b16 %v1519, %v1518
        %v1537 = vpack.c.b16 %v1521, %v1520
        %1554 = vmatpush.bf16.msra.mxu0 %v1529
        %1555 = vmatpush.bf16.msra.mxu0 %v1528
        %1556 = vmatpush.bf16.msra.mxu0 %v1527
        %1557 = vmatpush.bf16.msra.mxu0 %v1526
        %1558 = vmatpush.bf16.msra.mxu0 %v1525
        %1559 = vmatpush.bf16.msra.mxu0 %v1524
        %1560 = vmatpush.bf16.msra.mxu0 %v1523
        %1561 = vmatpush.bf16.msra.mxu0 %v1522
        %1562 = vmatmul.bf16.gmra.mxu0 %v1423
        %v1563 = vpop.f32.mrf.mxu0
        %v1564 = vadd.f32 %v1457, %v1563
        %v1565 = vpop.f32.mrf.mxu0
        %1566 = vdwg.mxu0
        %1567 = vmatpush.bf16.msra.mxu0 %v1537
        %1568 = vmatpush.bf16.msra.mxu0 %v1536
        %1569 = vmatpush.bf16.msra.mxu0 %v1535
        %1570 = vmatpush.bf16.msra.mxu0 %v1534
        %1571 = vmatpush.bf16.msra.mxu0 %v1533
        %1572 = vmatpush.bf16.msra.mxu0 %v1532
        %1573 = vmatpush.bf16.msra.mxu0 %v1531
        %1574 = vmatpush.bf16.msra.mxu0 %v1530
        %1575 = vmatmul.bf16.gmra.mxu0 %v1424
        %v1576 = vpop.f32.mrf.mxu0
        %v1577 = vadd.f32 %v1564, %v1576
        %v1578 = vpop.f32.mrf.mxu0
        %1579 = vdwg.mxu0
        %vm1580 = vcmask 73728
        %v1581 = vsel %vm1580, %v1577, -inf
        %1582 = vmax.xlane.f32.xlu0 %v1581
        %v1583 = vpop.xlane.xlu0 %1582
        %v1584 = vsub.f32 %v1577, %v1583
        %v1585 = vmul.f32 %v1584, 1.442695
        %v1586 = vpow.pop %v1585
        %v1587 = vsel %vm1580, %v1586, 0.0
        %1588 = vadd.xlane.f32.xlu0 %v1587
        %v1589 = vpop.xlane.xlu0 %1588
        %v1590 = vlog2.pop %v1589
        %v1591 = vmul.f32 %v1590, 0.6931472
        %v1592 = vsub.f32 %v1584, %v1591
        %1593 = vst.msk [vmem:[%s216] sm:$0x1] %vm1580, %v1592
        %s1594 = sand.u32 %s137, 1
        %s1595 = scalar_lea.sflag [#allocation4], %s1594
        %s1596 = sand.u32 %s137, 1
        %s1597 = scalar_lea.vmem [#allocation3], %s1596
        // Predicated region
        $region41: #{cnn_classifier_forward.7} parent=39 // pred_check
          %p1598 = pneg %p147
        $region42: #{cnn_classifier_forward.7} parent=39 // pred_check_branch
          %1600 = sbr.rel (%p1598) target = $region44
        $region43: #{cnn_classifier_forward.7} parent=39 // pred_region
          %1602 = vsyncadd %s1595, 0
          %s1603 = scalar_lea.hbm %s5, %s19
          %s1605 = sshll.u32 %s1597, 4
          %s1606 = int_to_ptr.vmem [resolvable:$true] %s1605
          %s1607 = sshll.u32 %s1603, 4
          %s1608 = int_to_ptr.hbm [resolvable:$true] %s1607
          %1610 = dma.vmem_to_hbm [thread:$0]  %s1606, 16, %s1608, %s1595
        $region44: #{cnn_classifier_forward.7} parent=39 // pred_fallthru
          _
      $region40: #{cnn_classifier_forward.7} parent=5 // pred_fallthru
        _
      %p1611 = scmp.le.s32.totalorder 2, %s14
      // Predicated region
      $region45: #{cnn_classifier_forward.7} parent=5 // pred_check
        %p1612 = pneg %p1611
      $region46: #{cnn_classifier_forward.7} parent=5 // pred_check_branch
        %1614 = sbr.rel (%p1612) target = $region48
      $region47: #{cnn_classifier_forward.7} parent=5 // pred_region
        %s1615 = ssub.s32 %s14, 2
        // Predicated region
        $region49: #{cnn_classifier_forward.7} parent=47 // pred_check
          %p1616 = pneg %p153
        $region50: #{cnn_classifier_forward.7} parent=47 // pred_check_branch
          %1618 = sbr.rel (%p1616) target = $region52
        $region51: #{cnn_classifier_forward.7} parent=47 // pred_region
          %s1619 = sand.u32 %s138, 1
          %s1620 = scalar_lea.sflag [#allocation4], %s1619
          %s1621 = sand.u32 %s138, 1
          %s1622 = scalar_lea.vmem [#allocation3], %s1621
          %1624 = dma.done %s1620, 16
        $region52: #{cnn_classifier_forward.7} parent=47 // pred_fallthru
          _
      $region48: #{cnn_classifier_forward.7} parent=5 // pred_fallthru
        _
    $region6: #{cnn_classifier_forward.7} parent=1 // loop_footer
      %s18 = sadd.s32 1, %s14
    $region7: #{cnn_classifier_forward.7} parent=1 // loop_footer_branch
      %13 = sbr.rel target = $region3
    $region8: #{cnn_classifier_forward.7} parent=1 // loop_exit
      _
    %1625 = vsyncpa [#allocation4], 1
    %s1626 = scalar_lea.sflag [#allocation4], 1
    %1627 = vsyncpa %s1626, 1

</llo_original>
